<compile_context>
chip_gen: v6e
topology: v6e:2x2x1
jax: 0.10.0
libtpu: 0.0.40
codegen_flags: <defaults>
</compile_context>

<pallas_src>
import jax
import jax.numpy as jnp
from jax import lax
from jax.experimental import pallas as pl
from jax.experimental.pallas import tpu as pltpu

LRELU_SLOPE = 0.2
BN_EPS = 1e-5
_TM = 256                          # target row tile (multiple of 16)
_VMEM_LIMIT = 32 * 1024 * 1024     # safe scoped-VMEM limit on v5e/v6e/v7x


def _round_up(x, m):
    return (x + m - 1) // m * m


def _row_tiling(M):
    """Row tile (multiple of 16) that minimizes padding, plus the ragged grid size."""
    nt = pl.cdiv(M, _TM)
    tm = _round_up(pl.cdiv(M, nt), 16)
    return tm, pl.cdiv(M, tm)


# ------------------------------ Pallas kernels ------------------------------

def _conv_bias_lrelu_kernel(x_ref, w_ref, b_ref, o_ref):
    # conv-as-matmul (bf16 in, f32 acc) + bias + LeakyReLU(0.2)
    y = jnp.dot(x_ref[...], w_ref[...], preferred_element_type=jnp.float32)
    y = y + b_ref[...]
    o_ref[...] = jnp.where(y > 0, y, LRELU_SLOPE * y).astype(o_ref.dtype)


def _conv_bias_sigmoid_kernel(x_ref, w_ref, b_ref, o_ref):
    # conv-as-matmul + bias + Sigmoid (f32 activation math, bf16 store)
    y = jnp.dot(x_ref[...], w_ref[...], preferred_element_type=jnp.float32)
    y = y + b_ref[...]
    o_ref[...] = jax.nn.sigmoid(y).astype(o_ref.dtype)


def _make_conv_bn_lrelu_kernel(m_valid, tm):
    """Fused conv + BatchNorm(batch stats) + LeakyReLU over a (2, nt) grid.

    phase 0: matmul each row tile, keep the f32 result resident in VMEM
             scratch, accumulate per-channel sum / sum-of-squares (ragged tail
             rows masked so they contribute nothing).
    phase 1: fold (mean, var, gamma, beta) into scale/shift once, then apply
             scale/shift + LeakyReLU per tile and do the single bf16 store.
    The conv bias is dropped by construction (cancels under mean subtraction).
    """
    inv_m = 1.0 / float(m_valid)

    def kernel(cols_ref, w_ref, gamma_ref, beta_ref, o_ref,
               y_scr, sum_scr, ssq_scr, scale_scr, shift_scr):
        p = pl.program_id(0)
        m = pl.program_id(1)
        row0 = pl.multiple_of(m * tm, 16)

        @pl.when((p == 0) & (m == 0))
        def _():
            sum_scr[...] = jnp.zeros_like(sum_scr)
            ssq_scr[...] = jnp.zeros_like(ssq_scr)

        @pl.when(p == 0)
        def _():
            y = jnp.dot(cols_ref[...], w_ref[...],
                        preferred_element_type=jnp.float32)
            rows = row0 + lax.broadcasted_iota(jnp.int32, y.shape, 0)
            y = jnp.where(rows < m_valid, y, 0.0)          # mask ragged tail
            y_scr[pl.ds(row0, tm), :] = y
            sum_scr[...] += jnp.sum(y, axis=0, keepdims=True)
            ssq_scr[...] += jnp.sum(y * y, axis=0, keepdims=True)

        @pl.when((p == 1) & (m == 0))
        def _():
            mean = sum_scr[...] * inv_m
            var = jnp.maximum(ssq_scr[...] * inv_m - mean * mean, 0.0)
            scale = gamma_ref[...] * lax.rsqrt(var + BN_EPS)
            scale_scr[...] = scale
            shift_scr[...] = beta_ref[...] - mean * scale

        @pl.when(p == 1)
        def _():
            y = y_scr[pl.ds(row0, tm), :] * scale_scr[...] + shift_scr[...]
            o_ref[...] = jnp.where(y > 0, y, LRELU_SLOPE * y).astype(o_ref.dtype)

    return kernel


# ------------------------------ call wrappers --------------------------------

def _conv_act(kernel, cols, w, b, out_dtype, *, transcendental=False):
    """Row-tiled (M,K) x (K,C) conv-as-matmul + bias + activation (ragged grid)."""
    M, K = cols.shape
    C = w.shape[1]
    tm, nt = _row_tiling(M)
    cost = pl.CostEstimate(
        flops=2 * M * K * C + 2 * M * C,
        transcendentals=M * C if transcendental else 0,
        bytes_accessed=(cols.size * cols.dtype.itemsize
                        + w.size * w.dtype.itemsize + b.size * 4
                        + M * C * jnp.dtype(out_dtype).itemsize),
    )
    return pl.pallas_call(
        kernel,
        grid=(nt,),
        in_specs=[
            pl.BlockSpec((tm, K), lambda m: (m, 0)),
            pl.BlockSpec((K, C), lambda m: (0, 0)),
            pl.BlockSpec((1, C), lambda m: (0, 0)),
        ],
        out_specs=pl.BlockSpec((tm, C), lambda m: (m, 0)),
        out_shape=jax.ShapeDtypeStruct((M, C), out_dtype),
        compiler_params=pltpu.CompilerParams(
            dimension_semantics=("parallel",),
            vmem_limit_bytes=_VMEM_LIMIT,
        ),
        cost_estimate=cost,
    )(cols, w, b)


def _conv_bn_lrelu(cols, w, gamma, beta, out_dtype):
    """Fused conv + BatchNorm(batch stats) + LeakyReLU as a single pallas_call."""
    M, K = cols.shape
    C = w.shape[1]
    tm, nt = _row_tiling(M)
    kernel = _make_conv_bn_lrelu_kernel(M, tm)
    cost = pl.CostEstimate(
        flops=2 * M * K * C + 8 * M * C,
        transcendentals=C,
        bytes_accessed=(cols.size * cols.dtype.itemsize
                        + w.size * w.dtype.itemsize + 2 * C * 4
                        + M * C * jnp.dtype(out_dtype).itemsize),
    )
    return pl.pallas_call(
        kernel,
        grid=(2, nt),
        in_specs=[
            # phase 0 streams the row tiles; phase 1 pins block 0 (no re-fetch).
            pl.BlockSpec((tm, K), lambda p, m: ((1 - p) * m, 0)),
            pl.BlockSpec((K, C), lambda p, m: (0, 0)),
            pl.BlockSpec((1, C), lambda p, m: (0, 0)),
            pl.BlockSpec((1, C), lambda p, m: (0, 0)),
        ],
        # output blocks are only written (and hence only flushed) in phase 1.
        out_specs=pl.BlockSpec((tm, C), lambda p, m: (p * m, 0)),
        out_shape=jax.ShapeDtypeStruct((M, C), out_dtype),
        scratch_shapes=[
            pltpu.VMEM((nt * tm, C), jnp.float32),   # resident f32 conv output
            pltpu.VMEM((1, C), jnp.float32),         # per-channel sum
            pltpu.VMEM((1, C), jnp.float32),         # per-channel sum of squares
            pltpu.VMEM((1, C), jnp.float32),         # BN scale
            pltpu.VMEM((1, C), jnp.float32),         # BN shift
        ],
        compiler_params=pltpu.CompilerParams(
            dimension_semantics=("arbitrary", "arbitrary"),
            vmem_limit_bytes=_VMEM_LIMIT,
        ),
        cost_estimate=cost,
    )(cols, w, gamma, beta)


# --------------------------------- JAX glue ----------------------------------

def _im2col_ndhwc(x, kh, kw, stride, pad, c_pad=0):
    """x: (N,D,H,W,C) -> (N*D*Ho*Wo, kh*kw*(C+c_pad)), tap-major / channel-minor."""
    N, D, H, W, C = x.shape
    xp = jnp.pad(x, ((0, 0), (0, 0), (pad, pad), (pad, pad), (0, c_pad)))
    Ho = (H + 2 * pad - kh) // stride + 1
    Wo = (W + 2 * pad - kw) // stride + 1
    taps = []
    for i in range(kh):
        for j in range(kw):
            taps.append(xp[:, :, i: i + stride * (Ho - 1) + 1: stride,
                              j: j + stride * (Wo - 1) + 1: stride, :])
    cols = jnp.concatenate(taps, axis=-1)            # (N, D, Ho, Wo, kh*kw*Cp)
    return cols.reshape(N * D * Ho * Wo, kh * kw * (C + c_pad)), (N, D, Ho, Wo)


def prepare_params(params):
    """One-time weight packing: (Cout,Cin,kh,kw) -> (kh*kw*Cin_pad, Cout) bf16."""
    def pack(w, cin_pad=None):
        co, ci, kh, kw = w.shape
        w = jnp.transpose(w, (2, 3, 1, 0))           # (kh, kw, Cin, Cout)
        if cin_pad is not None and cin_pad > ci:
            w = jnp.pad(w, ((0, 0), (0, 0), (0, cin_pad - ci), (0, 0)))
            ci = cin_pad
        return w.reshape(kh * kw * ci, co).astype(jnp.bfloat16)

    w3 = pack(params["w3"])                          # (2048, 1)
    # pad layer-3 Cout to 128 lanes: lane-dense unmasked MXU tile / store,
    # identical MXU cost; the valid column is sliced afterwards.
    w3p = jnp.zeros((w3.shape[0], 128), jnp.bfloat16).at[:, :1].set(w3)
    b3p = jnp.zeros((1, 128), jnp.float32).at[0, 0].set(params["b3"][0])
    return {
        "w1": pack(params["w1"], cin_pad=8),         # K = 16*8 = 128 (lane dense)
        "b1": params["b1"][None, :].astype(jnp.float32),
        "w2": pack(params["w2"]),                    # b2 dropped: cancels in BN
        "gamma": params["gamma"][None, :].astype(jnp.float32),
        "beta": params["beta"][None, :].astype(jnp.float32),
        "w3": w3p,
        "b3": b3p,
    }


@jax.jit
def discriminator2d_forward(x, p):
    # NCDHW -> channels-last (N, D, H, W, C), bf16 activations between layers.
    xc = jnp.transpose(x, (0, 2, 3, 4, 1)).astype(jnp.bfloat16)

    # layer 1: Conv3d(6, 64, (1,4,4), stride (1,2,2), pad (0,2,2)) + LeakyReLU
    # (input channels padded 6 -> 8 inside the im2col pad so K is lane dense)
    cols1, (N, D, H1, W1) = _im2col_ndhwc(xc, 4, 4, stride=2, pad=2, c_pad=2)
    y1 = _conv_act(_conv_bias_lrelu_kernel, cols1, p["w1"], p["b1"], jnp.bfloat16)
    x1 = y1.reshape(N, D, H1, W1, 64)

    # layer 2: Conv3d(64, 128) + BatchNorm3d(128, batch stats) + LeakyReLU — fused
    cols2, (_, _, H2, W2) = _im2col_ndhwc(x1, 4, 4, stride=2, pad=2)
    y2 = _conv_bn_lrelu(cols2, p["w2"], p["gamma"], p["beta"], jnp.bfloat16)
    x2 = y2.reshape(N, D, H2, W2, 128)

    # layer 3: Conv3d(128, 1, (1,4,4), stride 1, pad (0,2,2)) + Sigmoid
    cols3, (_, _, H3, W3) = _im2col_ndhwc(x2, 4, 4, stride=1, pad=2)
    y3 = _conv_act(_conv_bias_sigmoid_kernel, cols3, p["w3"], p["b3"],
                   jnp.bfloat16, transcendental=True)
    out = y3[:, :1].astype(jnp.float32).reshape(N, D, H3, W3)
    return out[:, None]                              # (N, 1, D, H3, W3)


# ------------------------- pure-JAX reference (check) ------------------------

def reference_forward(x, params):
    def conv3d(x, w, b, stride):
        y = lax.conv_general_dilated(
            x, w, window_strides=(1,) + stride,
            padding=[(0, 0), (2, 2), (2, 2)],
            dimension_numbers=("NCDHW", "OIDHW", "NCDHW"),
            precision=lax.Precision.HIGHEST)
        return y + b[None, :, None, None, None]

    def lrelu(y):
        return jnp.where(y > 0, y, LRELU_SLOPE * y)

    y = lrelu(conv3d(x, params["w1"][:, :, None, :, :], params["b1"], (2, 2)))
    y = conv3d(y, params["w2"][:, :, None, :, :], params["b2"], (2, 2))
    mean = jnp.mean(y, axis=(0, 2, 3, 4), keepdims=True)
    var = jnp.mean((y - mean) ** 2, axis=(0, 2, 3, 4), keepdims=True)
    y = (y - mean) / jnp.sqrt(var + BN_EPS)
    y = y * params["gamma"][None, :, None, None, None] + params["beta"][None, :, None, None, None]
    y = lrelu(y)
    y = conv3d(y, params["w3"][:, :, None, :, :], params["b3"], (1, 1))
    return jax.nn.sigmoid(y)


# ----------------------------------- main ------------------------------------

def _init_params(key):
    ks = jax.random.split(key, 6)

    def uinit(k, shape, fan_in):
        bound = 1.0 / jnp.sqrt(float(fan_in))
        return jax.random.uniform(k, shape, jnp.float32, -bound, bound)

    return {
        "w1": uinit(ks[0], (64, 6, 4, 4), 6 * 16),
        "b1": uinit(ks[1], (64,), 6 * 16),
        "w2": uinit(ks[2], (128, 64, 4, 4), 64 * 16),
        "b2": uinit(ks[3], (128,), 64 * 16),
        "gamma": jnp.ones((128,), jnp.float32),   # BatchNorm3d affine weight
        "beta": jnp.zeros((128,), jnp.float32),   # BatchNorm3d affine bias
        "w3": uinit(ks[4], (1, 128, 4, 4), 128 * 16),
        "b3": uinit(ks[5], (1,), 128 * 16),
    }


if __name__ == "__main__":
    key = jax.random.PRNGKey(0)
    kx, kp = jax.random.split(key)
    params = _init_params(kp)
    prepped = prepare_params(params)          # one-time bf16 weight packing

    # small input consistent with the module: N=2, C=6, D=2, H=W=16 (NCDHW)
    x = jax.random.normal(kx, (2, 6, 2, 16, 16), dtype=jnp.float32)

    out = discriminator2d_forward(x, prepped)
    out = jax.block_until_ready(out)
    assert out.shape == (2, 1, 2, 6, 6), out.shape

    ref = reference_forward(x, params)
    max_err = float(jnp.max(jnp.abs(out - ref)))
    # bf16 matmul inputs / activations (incl. the final bf16 sigmoid store)
    # with f32 accumulation vs the f32 reference
    assert max_err < 2e-2, f"max abs error vs f32 reference: {max_err}"

    print("KERNEL_OK")
</pallas_src>

<mosaic_0001>
module attributes {stable_mosaic.version = 11 : i64} {
  func.func @_conv_bias_lrelu_kernel(%arg0: i32, %arg1: memref<176x128xbf16, #tpu.memory_space<vmem>>, %arg2: memref<128x64xbf16, #tpu.memory_space<vmem>>, %arg3: memref<1x64xf32, #tpu.memory_space<vmem>>, %arg4: memref<176x64xbf16, #tpu.memory_space<vmem>>) attributes {dimension_semantics = [#tpu.dimension_semantics<parallel>], iteration_bounds = array<i64: 2>, scalar_prefetch = 0 : i64, scratch_operands = 0 : i64, tpu.core_type = #tpu.core_type<tc>, window_params = [{transform_indices = @transform_0, window_bounds = array<i64: 176, 128>}, {pipeline_mode = #tpu.pipeline_mode<synchronous>, transform_indices = @transform_1, window_bounds = array<i64: 128, 64>}, {pipeline_mode = #tpu.pipeline_mode<synchronous>, transform_indices = @transform_2, window_bounds = array<i64: 1, 64>}, {transform_indices = @transform_3, window_bounds = array<i64: 176, 64>}]} {
    %c0 = arith.constant 0 : index
    %c0_0 = arith.constant 0 : index
    %0 = vector.load %arg1[%c0, %c0_0] : memref<176x128xbf16, #tpu.memory_space<vmem>>, vector<176x128xbf16>
    %c0_1 = arith.constant 0 : index
    %c0_2 = arith.constant 0 : index
    %1 = vector.load %arg2[%c0_1, %c0_2] : memref<128x64xbf16, #tpu.memory_space<vmem>>, vector<128x64xbf16>
    %cst = arith.constant dense<0.000000e+00> : vector<176x64xf32>
    %2 = tpu.matmul %0, %1, %cst {dimension_numbers = #tpu.dot_dimension_numbers<[1], [0], [0], [1], [0, 0, 1, 1], [], []>} : vector<176x128xbf16>, vector<128x64xbf16>, vector<176x64xf32> -> vector<176x64xf32>
    %c0_3 = arith.constant 0 : index
    %c0_4 = arith.constant 0 : index
    %3 = vector.load %arg3[%c0_3, %c0_4] : memref<1x64xf32, #tpu.memory_space<vmem>>, vector<1x64xf32>
    %4 = vector.broadcast %3 : vector<1x64xf32> to vector<176x64xf32>
    %5 = arith.addf %2, %4 : vector<176x64xf32>
    %cst_5 = arith.constant 0.000000e+00 : f32
    %6 = vector.broadcast %cst_5 : f32 to vector<176x64xf32>
    %7 = arith.cmpf ogt, %5, %6 : vector<176x64xf32>
    %cst_6 = arith.constant 2.000000e-01 : f32
    %8 = vector.broadcast %cst_6 : f32 to vector<176x64xf32>
    %9 = arith.mulf %8, %5 : vector<176x64xf32>
    %10 = arith.select %7, %5, %9 : vector<176x64xi1>, vector<176x64xf32>
    %11 = arith.truncf %10 : vector<176x64xf32> to vector<176x64xbf16>
    %c0_7 = arith.constant 0 : index
    %c0_8 = arith.constant 0 : index
    %12 = vector.load %arg4[%c0_7, %c0_8] : memref<176x64xbf16, #tpu.memory_space<vmem>>, vector<176x64xbf16>
    tpu.vector_store %arg4[%c0_7, %c0_8], %11 {strides = array<i32>} : memref<176x64xbf16, #tpu.memory_space<vmem>>, vector<176x64xbf16>,
    return
  }
  func.func @transform_0(%arg0: i32) -> (i32, i32) {
    %c0_i32 = arith.constant 0 : i32
    %c0_i32_0 = arith.constant 0 : i32
    return %arg0, %c0_i32 : i32, i32
  }
  func.func @transform_1(%arg0: i32) -> (i32, i32) {
    %c0_i32 = arith.constant 0 : i32
    %c0_i32_0 = arith.constant 0 : i32
    %c0_i32_1 = arith.constant 0 : i32
    return %c0_i32, %c0_i32_0 : i32, i32
  }
  func.func @transform_2(%arg0: i32) -> (i32, i32) {
    %c0_i32 = arith.constant 0 : i32
    %c0_i32_0 = arith.constant 0 : i32
    %c0_i32_1 = arith.constant 0 : i32
    return %c0_i32, %c0_i32_0 : i32, i32
  }
  func.func @transform_3(%arg0: i32) -> (i32, i32) {
    %c0_i32 = arith.constant 0 : i32
    %c0_i32_0 = arith.constant 0 : i32
    return %arg0, %c0_i32 : i32, i32
  }
}

module attributes {stable_mosaic.version = 11 : i64} {
  func.func @kernel(%arg0: i32, %arg1: i32, %arg2: memref<112x1024xbf16, #tpu.memory_space<vmem>>, %arg3: memref<1024x128xbf16, #tpu.memory_space<vmem>>, %arg4: memref<1x128xf32, #tpu.memory_space<vmem>>, %arg5: memref<1x128xf32, #tpu.memory_space<vmem>>, %arg6: memref<112x128xbf16, #tpu.memory_space<vmem>>, %arg7: memref<112x128xf32, #tpu.memory_space<vmem>>, %arg8: memref<1x128xf32, #tpu.memory_space<vmem>>, %arg9: memref<1x128xf32, #tpu.memory_space<vmem>>, %arg10: memref<1x128xf32, #tpu.memory_space<vmem>>, %arg11: memref<1x128xf32, #tpu.memory_space<vmem>>) attributes {dimension_semantics = [#tpu.dimension_semantics<arbitrary>, #tpu.dimension_semantics<arbitrary>], iteration_bounds = array<i64: 2, 1>, scalar_prefetch = 0 : i64, scratch_operands = 5 : i64, tpu.core_type = #tpu.core_type<tc>, window_params = [{transform_indices = @transform_0, window_bounds = array<i64: 112, 1024>}, {pipeline_mode = #tpu.pipeline_mode<synchronous>, transform_indices = @transform_1, window_bounds = array<i64: 1024, 128>}, {pipeline_mode = #tpu.pipeline_mode<synchronous>, transform_indices = @transform_2, window_bounds = array<i64: 1, 128>}, {pipeline_mode = #tpu.pipeline_mode<synchronous>, transform_indices = @transform_3, window_bounds = array<i64: 1, 128>}, {transform_indices = @transform_4, window_bounds = array<i64: 112, 128>}]} {
    %c112_i32 = arith.constant 112 : i32
    %0 = arith.muli %arg1, %c112_i32 : i32
    %1 = tpu.assume_multiple %0, 16 : i32
    %c0_i32 = arith.constant 0 : i32
    %2 = arith.cmpi eq, %arg0, %c0_i32 : i32
    %c0_i32_0 = arith.constant 0 : i32
    %3 = arith.cmpi eq, %arg1, %c0_i32_0 : i32
    %4 = arith.andi %2, %3 : i1
    %5 = arith.extui %4 : i1 to i32
    %c0_i32_1 = arith.constant 0 : i32
    %6 = arith.cmpi ne, %5, %c0_i32_1 : i32
    scf.if %6 {
      %cst = arith.constant 0.000000e+00 : f32
      %18 = vector.broadcast %cst : f32 to vector<1x128xf32>
      %c0 = arith.constant 0 : index
      %c0_8 = arith.constant 0 : index
      %19 = vector.load %arg8[%c0, %c0_8] : memref<1x128xf32, #tpu.memory_space<vmem>>, vector<1x128xf32>
      tpu.vector_store %arg8[%c0, %c0_8], %18 {strides = array<i32>} : memref<1x128xf32, #tpu.memory_space<vmem>>, vector<1x128xf32>,
      %cst_9 = arith.constant 0.000000e+00 : f32
      %20 = vector.broadcast %cst_9 : f32 to vector<1x128xf32>
      %c0_10 = arith.constant 0 : index
      %c0_11 = arith.constant 0 : index
      %21 = vector.load %arg9[%c0_10, %c0_11] : memref<1x128xf32, #tpu.memory_space<vmem>>, vector<1x128xf32>
      tpu.vector_store %arg9[%c0_10, %c0_11], %20 {strides = array<i32>} : memref<1x128xf32, #tpu.memory_space<vmem>>, vector<1x128xf32>,
    } else {
    }
    %c0_i32_2 = arith.constant 0 : i32
    %7 = arith.cmpi eq, %arg0, %c0_i32_2 : i32
    %8 = arith.extui %7 : i1 to i32
    %c0_i32_3 = arith.constant 0 : i32
    %9 = arith.cmpi ne, %8, %c0_i32_3 : i32
    scf.if %9 {
      %c0 = arith.constant 0 : index
      %c0_8 = arith.constant 0 : index
      %18 = vector.load %arg2[%c0, %c0_8] : memref<112x1024xbf16, #tpu.memory_space<vmem>>, vector<112x1024xbf16>
      %c0_9 = arith.constant 0 : index
      %c0_10 = arith.constant 0 : index
      %19 = vector.load %arg3[%c0_9, %c0_10] : memref<1024x128xbf16, #tpu.memory_space<vmem>>, vector<1024x128xbf16>
      %cst = arith.constant dense<0.000000e+00> : vector<112x128xf32>
      %20 = tpu.matmul %18, %19, %cst {dimension_numbers = #tpu.dot_dimension_numbers<[1], [0], [0], [1], [0, 0, 1, 1], [], []>} : vector<112x1024xbf16>, vector<1024x128xbf16>, vector<112x128xf32> -> vector<112x128xf32>
      %21 = tpu.iota {dimensions = array<i32: 0>} : vector<112x128xi32>
      %22 = vector.broadcast %1 : i32 to vector<112x128xi32>
      %23 = arith.addi %22, %21 : vector<112x128xi32>
      %c100_i32 = arith.constant 100 : i32
      %24 = vector.broadcast %c100_i32 : i32 to vector<112x128xi32>
      %25 = arith.cmpi slt, %23, %24 : vector<112x128xi32>
      %cst_11 = arith.constant 0.000000e+00 : f32
      %26 = vector.broadcast %cst_11 : f32 to vector<112x128xf32>
      %27 = arith.select %25, %20, %26 : vector<112x128xi1>, vector<112x128xf32>
      %28 = arith.index_cast %1 : i32 to index
      %c0_12 = arith.constant 0 : index
      %29 = vector.load %arg7[%28, %c0_12] : memref<112x128xf32, #tpu.memory_space<vmem>>, vector<112x128xf32>
      tpu.vector_store %arg7[%28, %c0_12], %27 {strides = array<i32>} : memref<112x128xf32, #tpu.memory_space<vmem>>, vector<112x128xf32>,
      %c0_13 = arith.constant 0 : index
      %c0_14 = arith.constant 0 : index
      %30 = vector.load %arg8[%c0_13, %c0_14] : memref<1x128xf32, #tpu.memory_space<vmem>>, vector<1x128xf32>
      %cst_15 = arith.constant dense<0.000000e+00> : vector<128xf32>
      %31 = vector.multi_reduction <add>, %27, %cst_15 [0] : vector<112x128xf32> to vector<128xf32>
      %32 = vector.shape_cast %31 : vector<128xf32> to vector<1x128xf32>
      %33 = arith.addf %30, %32 : vector<1x128xf32>
      %c0_16 = arith.constant 0 : index
      %c0_17 = arith.constant 0 : index
      %34 = vector.load %arg8[%c0_16, %c0_17] : memref<1x128xf32, #tpu.memory_space<vmem>>, vector<1x128xf32>
      tpu.vector_store %arg8[%c0_16, %c0_17], %33 {strides = array<i32>} : memref<1x128xf32, #tpu.memory_space<vmem>>, vector<1x128xf32>,
      %c0_18 = arith.constant 0 : index
      %c0_19 = arith.constant 0 : index
      %35 = vector.load %arg9[%c0_18, %c0_19] : memref<1x128xf32, #tpu.memory_space<vmem>>, vector<1x128xf32>
      %36 = arith.mulf %27, %27 : vector<112x128xf32>
      %cst_20 = arith.constant dense<0.000000e+00> : vector<128xf32>
      %37 = vector.multi_reduction <add>, %36, %cst_20 [0] : vector<112x128xf32> to vector<128xf32>
      %38 = vector.shape_cast %37 : vector<128xf32> to vector<1x128xf32>
      %39 = arith.addf %35, %38 : vector<1x128xf32>
      %c0_21 = arith.constant 0 : index
      %c0_22 = arith.constant 0 : index
      %40 = vector.load %arg9[%c0_21, %c0_22] : memref<1x128xf32, #tpu.memory_space<vmem>>, vector<1x128xf32>
      tpu.vector_store %arg9[%c0_21, %c0_22], %39 {strides = array<i32>} : memref<1x128xf32, #tpu.memory_space<vmem>>, vector<1x128xf32>,
    } else {
    }
    %c1_i32 = arith.constant 1 : i32
    %10 = arith.cmpi eq, %arg0, %c1_i32 : i32
    %c0_i32_4 = arith.constant 0 : i32
    %11 = arith.cmpi eq, %arg1, %c0_i32_4 : i32
    %12 = arith.andi %10, %11 : i1
    %13 = arith.extui %12 : i1 to i32
    %c0_i32_5 = arith.constant 0 : i32
    %14 = arith.cmpi ne, %13, %c0_i32_5 : i32
    scf.if %14 {
      %c0 = arith.constant 0 : index
      %c0_8 = arith.constant 0 : index
      %18 = vector.load %arg8[%c0, %c0_8] : memref<1x128xf32, #tpu.memory_space<vmem>>, vector<1x128xf32>
      %cst = arith.constant 0.00999999977 : f32
      %19 = vector.broadcast %cst : f32 to vector<1x128xf32>
      %20 = arith.mulf %18, %19 : vector<1x128xf32>
      %c0_9 = arith.constant 0 : index
      %c0_10 = arith.constant 0 : index
      %21 = vector.load %arg9[%c0_9, %c0_10] : memref<1x128xf32, #tpu.memory_space<vmem>>, vector<1x128xf32>
      %cst_11 = arith.constant 0.00999999977 : f32
      %22 = vector.broadcast %cst_11 : f32 to vector<1x128xf32>
      %23 = arith.mulf %21, %22 : vector<1x128xf32>
      %24 = arith.mulf %20, %20 : vector<1x128xf32>
      %25 = arith.subf %23, %24 : vector<1x128xf32>
      %cst_12 = arith.constant 0.000000e+00 : f32
      %26 = vector.broadcast %cst_12 : f32 to vector<1x128xf32>
      %27 = arith.maximumf %25, %26 : vector<1x128xf32>
      %c0_13 = arith.constant 0 : index
      %c0_14 = arith.constant 0 : index
      %28 = vector.load %arg4[%c0_13, %c0_14] : memref<1x128xf32, #tpu.memory_space<vmem>>, vector<1x128xf32>
      %cst_15 = arith.constant 9.99999974E-6 : f32
      %29 = vector.broadcast %cst_15 : f32 to vector<1x128xf32>
      %30 = arith.addf %27, %29 : vector<1x128xf32>
      %31 = math.rsqrt %30 : vector<1x128xf32>
      %32 = arith.mulf %28, %31 : vector<1x128xf32>
      %c0_16 = arith.constant 0 : index
      %c0_17 = arith.constant 0 : index
      %33 = vector.load %arg10[%c0_16, %c0_17] : memref<1x128xf32, #tpu.memory_space<vmem>>, vector<1x128xf32>
      tpu.vector_store %arg10[%c0_16, %c0_17], %32 {strides = array<i32>} : memref<1x128xf32, #tpu.memory_space<vmem>>, vector<1x128xf32>,
      %c0_18 = arith.constant 0 : index
      %c0_19 = arith.constant 0 : index
      %34 = vector.load %arg5[%c0_18, %c0_19] : memref<1x128xf32, #tpu.memory_space<vmem>>, vector<1x128xf32>
      %35 = arith.mulf %20, %32 : vector<1x128xf32>
      %36 = arith.subf %34, %35 : vector<1x128xf32>
      %c0_20 = arith.constant 0 : index
      %c0_21 = arith.constant 0 : index
      %37 = vector.load %arg11[%c0_20, %c0_21] : memref<1x128xf32, #tpu.memory_space<vmem>>, vector<1x128xf32>
      tpu.vector_store %arg11[%c0_20, %c0_21], %36 {strides = array<i32>} : memref<1x128xf32, #tpu.memory_space<vmem>>, vector<1x128xf32>,
    } else {
    }
    %c1_i32_6 = arith.constant 1 : i32
    %15 = arith.cmpi eq, %arg0, %c1_i32_6 : i32
    %16 = arith.extui %15 : i1 to i32
    %c0_i32_7 = arith.constant 0 : i32
    %17 = arith.cmpi ne, %16, %c0_i32_7 : i32
    scf.if %17 {
      %18 = arith.index_cast %1 : i32 to index
      %c0 = arith.constant 0 : index
      %19 = vector.load %arg7[%18, %c0] : memref<112x128xf32, #tpu.memory_space<vmem>>, vector<112x128xf32>
      %c0_8 = arith.constant 0 : index
      %c0_9 = arith.constant 0 : index
      %20 = vector.load %arg10[%c0_8, %c0_9] : memref<1x128xf32, #tpu.memory_space<vmem>>, vector<1x128xf32>
      %21 = vector.broadcast %20 : vector<1x128xf32> to vector<112x128xf32>
      %22 = arith.mulf %19, %21 : vector<112x128xf32>
      %c0_10 = arith.constant 0 : index
      %c0_11 = arith.constant 0 : index
      %23 = vector.load %arg11[%c0_10, %c0_11] : memref<1x128xf32, #tpu.memory_space<vmem>>, vector<1x128xf32>
      %24 = vector.broadcast %23 : vector<1x128xf32> to vector<112x128xf32>
      %25 = arith.addf %22, %24 : vector<112x128xf32>
      %cst = arith.constant 0.000000e+00 : f32
      %26 = vector.broadcast %cst : f32 to vector<112x128xf32>
      %27 = arith.cmpf ogt, %25, %26 : vector<112x128xf32>
      %cst_12 = arith.constant 2.000000e-01 : f32
      %28 = vector.broadcast %cst_12 : f32 to vector<112x128xf32>
      %29 = arith.mulf %28, %25 : vector<112x128xf32>
      %30 = arith.select %27, %25, %29 : vector<112x128xi1>, vector<112x128xf32>
      %31 = arith.truncf %30 : vector<112x128xf32> to vector<112x128xbf16>
      %c0_13 = arith.constant 0 : index
      %c0_14 = arith.constant 0 : index
      %32 = vector.load %arg6[%c0_13, %c0_14] : memref<112x128xbf16, #tpu.memory_space<vmem>>, vector<112x128xbf16>
      tpu.vector_store %arg6[%c0_13, %c0_14], %31 {strides = array<i32>} : memref<112x128xbf16, #tpu.memory_space<vmem>>, vector<112x128xbf16>,
    } else {
    }
    return
  }
  func.func @transform_0(%arg0: i32, %arg1: i32) -> (i32, i32) {
    %c1_i32 = arith.constant 1 : i32
    %0 = arith.subi %c1_i32, %arg0 : i32
    %1 = arith.muli %0, %arg1 : i32
    %c0_i32 = arith.constant 0 : i32
    %c0_i32_0 = arith.constant 0 : i32
    return %1, %c0_i32 : i32, i32
  }
  func.func @transform_1(%arg0: i32, %arg1: i32) -> (i32, i32) {
    %c0_i32 = arith.constant 0 : i32
    %c0_i32_0 = arith.constant 0 : i32
    %c0_i32_1 = arith.constant 0 : i32
    return %c0_i32, %c0_i32_0 : i32, i32
  }
  func.func @transform_2(%arg0: i32, %arg1: i32) -> (i32, i32) {
    %c0_i32 = arith.constant 0 : i32
    %c0_i32_0 = arith.constant 0 : i32
    %c0_i32_1 = arith.constant 0 : i32
    return %c0_i32, %c0_i32_0 : i32, i32
  }
  func.func @transform_3(%arg0: i32, %arg1: i32) -> (i32, i32) {
    %c0_i32 = arith.constant 0 : i32
    %c0_i32_0 = arith.constant 0 : i32
    %c0_i32_1 = arith.constant 0 : i32
    return %c0_i32, %c0_i32_0 : i32, i32
  }
  func.func @transform_4(%arg0: i32, %arg1: i32) -> (i32, i32) {
    %0 = arith.muli %arg0, %arg1 : i32
    %c0_i32 = arith.constant 0 : i32
    %c0_i32_0 = arith.constant 0 : i32
    return %0, %c0_i32 : i32, i32
  }
}

module attributes {stable_mosaic.version = 11 : i64} {
  func.func @_conv_bias_sigmoid_kernel(%arg0: i32, %arg1: memref<144x2048xbf16, #tpu.memory_space<vmem>>, %arg2: memref<2048x128xbf16, #tpu.memory_space<vmem>>, %arg3: memref<1x128xf32, #tpu.memory_space<vmem>>, %arg4: memref<144x128xbf16, #tpu.memory_space<vmem>>) attributes {dimension_semantics = [#tpu.dimension_semantics<parallel>], iteration_bounds = array<i64: 1>, scalar_prefetch = 0 : i64, scratch_operands = 0 : i64, tpu.core_type = #tpu.core_type<tc>, window_params = [{transform_indices = @transform_0, window_bounds = array<i64: 144, 2048>}, {pipeline_mode = #tpu.pipeline_mode<synchronous>, transform_indices = @transform_1, window_bounds = array<i64: 2048, 128>}, {pipeline_mode = #tpu.pipeline_mode<synchronous>, transform_indices = @transform_2, window_bounds = array<i64: 1, 128>}, {transform_indices = @transform_3, window_bounds = array<i64: 144, 128>}]} {
    %c0 = arith.constant 0 : index
    %c0_0 = arith.constant 0 : index
    %0 = vector.load %arg1[%c0, %c0_0] : memref<144x2048xbf16, #tpu.memory_space<vmem>>, vector<144x2048xbf16>
    %c0_1 = arith.constant 0 : index
    %c0_2 = arith.constant 0 : index
    %1 = vector.load %arg2[%c0_1, %c0_2] : memref<2048x128xbf16, #tpu.memory_space<vmem>>, vector<2048x128xbf16>
    %cst = arith.constant dense<0.000000e+00> : vector<144x128xf32>
    %2 = tpu.matmul %0, %1, %cst {dimension_numbers = #tpu.dot_dimension_numbers<[1], [0], [0], [1], [0, 0, 1, 1], [], []>} : vector<144x2048xbf16>, vector<2048x128xbf16>, vector<144x128xf32> -> vector<144x128xf32>
    %c0_3 = arith.constant 0 : index
    %c0_4 = arith.constant 0 : index
    %3 = vector.load %arg3[%c0_3, %c0_4] : memref<1x128xf32, #tpu.memory_space<vmem>>, vector<1x128xf32>
    %4 = vector.broadcast %3 : vector<1x128xf32> to vector<144x128xf32>
    %5 = arith.addf %2, %4 : vector<144x128xf32>
    %6 = arith.negf %5 : vector<144x128xf32>
    %7 = math.exp %6 : vector<144x128xf32>
    %cst_5 = arith.constant 1.000000e+00 : f32
    %8 = vector.broadcast %cst_5 : f32 to vector<144x128xf32>
    %9 = arith.addf %8, %7 : vector<144x128xf32>
    %10 = arith.divf %8, %9 : vector<144x128xf32>
    %11 = arith.truncf %10 : vector<144x128xf32> to vector<144x128xbf16>
    %c0_6 = arith.constant 0 : index
    %c0_7 = arith.constant 0 : index
    %12 = vector.load %arg4[%c0_6, %c0_7] : memref<144x128xbf16, #tpu.memory_space<vmem>>, vector<144x128xbf16>
    tpu.vector_store %arg4[%c0_6, %c0_7], %11 {strides = array<i32>} : memref<144x128xbf16, #tpu.memory_space<vmem>>, vector<144x128xbf16>,
    return
  }
  func.func @transform_0(%arg0: i32) -> (i32, i32) {
    %c0_i32 = arith.constant 0 : i32
    %c0_i32_0 = arith.constant 0 : i32
    return %arg0, %c0_i32 : i32, i32
  }
  func.func @transform_1(%arg0: i32) -> (i32, i32) {
    %c0_i32 = arith.constant 0 : i32
    %c0_i32_0 = arith.constant 0 : i32
    %c0_i32_1 = arith.constant 0 : i32
    return %c0_i32, %c0_i32_0 : i32, i32
  }
  func.func @transform_2(%arg0: i32) -> (i32, i32) {
    %c0_i32 = arith.constant 0 : i32
    %c0_i32_0 = arith.constant 0 : i32
    %c0_i32_1 = arith.constant 0 : i32
    return %c0_i32, %c0_i32_0 : i32, i32
  }
  func.func @transform_3(%arg0: i32) -> (i32, i32) {
    %c0_i32 = arith.constant 0 : i32
    %c0_i32_0 = arith.constant 0 : i32
    return %arg0, %c0_i32 : i32, i32
  }
}

</mosaic_0001>

<llo_original>
// kernel: discriminator2d_forward.3
$region0: #{discriminator2d_forward.3}
  #allocation0 [shape = 'u32[]', space=smem, size = 0x4, offset = 0x4, fixed_abs, tag = 'smem constant byte address 0x4 - core index']
  #allocation1 [shape = 'u32[144,128]{1,0:T(1,128)}', space=vmem, size = 0x12000, scoped, tag = 'internal scratch']
  %s0 = inlined_call_operand.vmem [shape: bf16[324,128], index: 0, kind: input, shape index: {}]
  %s1 = inlined_call_operand.vmem [shape: bf16[128,64], index: 1, kind: input, shape index: {}]
  %s2 = inlined_call_operand.vmem [shape: f32[1,64], index: 2, kind: input, shape index: {}]
  %s3 = inlined_call_operand.vmem [shape: bf16[324,64], index: 3, kind: output, shape index: {}]
  %s4 = sld [smem:[#allocation0]]
  $region89: #{discriminator2d_forward.3} parent=0
    _
  %s6 = ssub.s32 1, %s4
  %s7 = scalar_select 0, %s6, %s4
  $region1: #{discriminator2d_forward.3} parent=0
    #allocation2 [shape = 'u8[90112]{0}', space=vmem, size = 0x16000, scoped, tag = 'output window, operand 0']
    loop: start=0, step=1, limit=4
    $region2: #{discriminator2d_forward.3} parent=1 // loop_pre_header
      _
    $region3: #{discriminator2d_forward.3} parent=1 // loop_header
      %s9 = sphi 0, %s13
      %p10 = scmp.ge.s32.totalorder %s9, 4
      %s19 = sphi 0, %s21
      %s22 = sphi 0, %s19
      %s23 = sphi 0, %s22
      %s39 = sphi 0, %s23
      %s43 = sphi 0, %s43
      %s45 = sphi 0, %s43
      %s46 = sphi 0, %s45
      %s60 = sphi 0, %s46
      %s64 = sphi 0, %s64
      %s66 = sphi 0, %s64
      %s67 = sphi 0, %s66
      %s81 = sphi 0, %s67
      %s87 = sphi 0, %s89
      %s90 = sphi 0, %s87
      %s91 = sphi 0, %s90
      %s107 = sphi 0, %s91
    $region4: #{discriminator2d_forward.3} parent=1 // loop_header_branch
      %12 = sbr.rel (%p10) target = $region8
    $region5: #{discriminator2d_forward.3} parent=1 // loop_body
      %s14 = ssub.s32 %s9, 1
      %s15 = ssub.s32 %s9, 2
      %s16 = sadd.s32 %s9, 1
      %s17 = ssub.s32 %s9, %s16
      %p18 = scmp.eq.s32.totalorder %s17, 0
      %s20 = sadd.s32 %s19, 1
      %s21 = scalar_select %p18, %s19, %s20
      %p24 = pneg %p18
      %p25 = scmp.eq.s32.totalorder %s9, 1
      %p26 = por %p24, %p25
      %p27 = scmp.ne.s32.totalorder %s19, %s22
      %p28 = scmp.eq.s32.totalorder %s9, 0
      %p29 = por %p27, %p28
      %p30 = scmp.ne.s32.totalorder %s19, %s22
      %p31 = scmp.eq.s32.totalorder %s14, 1
      %p32 = por %p30, %p31
      %p33 = scmp.ne.s32.totalorder %s22, %s23
      %p34 = scmp.eq.s32.totalorder %s14, 0
      %p35 = por %p33, %p34
      %p36 = scmp.ne.s32.totalorder %s22, %s23
      %p37 = scmp.eq.s32.totalorder %s15, 1
      %p38 = por %p36, %p37
      %p40 = scmp.ne.s32.totalorder %s23, %s39
      %p41 = scmp.eq.s32.totalorder %s15, 0
      %p42 = por %p40, %p41
      %s44 = sadd.s32 %s43, 1
      %p47 = scmp.eq.s32.totalorder %s9, 1
      %p48 = scmp.ne.s32.totalorder %s43, %s45
      %p49 = scmp.eq.s32.totalorder %s9, 0
      %p50 = por %p48, %p49
      %p51 = scmp.ne.s32.totalorder %s43, %s45
      %p52 = scmp.eq.s32.totalorder %s14, 1
      %p53 = por %p51, %p52
      %p54 = scmp.ne.s32.totalorder %s45, %s46
      %p55 = scmp.eq.s32.totalorder %s14, 0
      %p56 = por %p54, %p55
      %p57 = scmp.ne.s32.totalorder %s45, %s46
      %p58 = scmp.eq.s32.totalorder %s15, 1
      %p59 = por %p57, %p58
      %p61 = scmp.ne.s32.totalorder %s46, %s60
      %p62 = scmp.eq.s32.totalorder %s15, 0
      %p63 = por %p61, %p62
      %s65 = sadd.s32 %s64, 1
      %p68 = scmp.eq.s32.totalorder %s9, 1
      %p69 = scmp.ne.s32.totalorder %s64, %s66
      %p70 = scmp.eq.s32.totalorder %s9, 0
      %p71 = por %p69, %p70
      %p72 = scmp.ne.s32.totalorder %s64, %s66
      %p73 = scmp.eq.s32.totalorder %s14, 1
      %p74 = por %p72, %p73
      %p75 = scmp.ne.s32.totalorder %s66, %s67
      %p76 = scmp.eq.s32.totalorder %s14, 0
      %p77 = por %p75, %p76
      %p78 = scmp.ne.s32.totalorder %s66, %s67
      %p79 = scmp.eq.s32.totalorder %s15, 1
      %p80 = por %p78, %p79
      %p82 = scmp.ne.s32.totalorder %s67, %s81
      %p83 = scmp.eq.s32.totalorder %s15, 0
      %p84 = por %p82, %p83
      %s85 = ssub.s32 %s9, %s16
      %p86 = scmp.eq.s32.totalorder %s85, 0
      %s88 = sadd.s32 %s87, 1
      %s89 = scalar_select %p86, %s87, %s88
      %p92 = pneg %p86
      %p93 = scmp.eq.s32.totalorder %s9, 1
      %p94 = por %p92, %p93
      %p95 = scmp.ne.s32.totalorder %s87, %s90
      %p96 = scmp.eq.s32.totalorder %s9, 0
      %p97 = por %p95, %p96
      %p98 = scmp.ne.s32.totalorder %s87, %s90
      %p99 = scmp.eq.s32.totalorder %s14, 1
      %p100 = por %p98, %p99
      %p101 = scmp.ne.s32.totalorder %s90, %s91
      %p102 = scmp.eq.s32.totalorder %s14, 0
      %p103 = por %p101, %p102
      %p104 = scmp.ne.s32.totalorder %s90, %s91
      %p105 = scmp.eq.s32.totalorder %s15, 1
      %p106 = por %p104, %p105
      %p108 = scmp.ne.s32.totalorder %s91, %s107
      %p109 = scmp.eq.s32.totalorder %s15, 0
      %p110 = por %p108, %p109
      %p111 = scmp.le.s32.totalorder 1, %s9
      %p112 = scmp.lt.s32.totalorder %s9, 3
      %p113 = pnand %p111, %p112
      %p114 = pneg %p113
      // Predicated region
      $region9: #{discriminator2d_forward.3} parent=5 // pred_check
        _
      $region10: #{discriminator2d_forward.3} parent=5 // pred_check_branch
        %116 = sbr.rel (%p113) target = $region12
      $region11: #{discriminator2d_forward.3} parent=5 // pred_region
        %s117 = ssub.s32 %s9, 1
        // Predicated region
        $region13: #{discriminator2d_forward.3} parent=11 // pred_check
          %p118 = pneg %p56
        $region14: #{discriminator2d_forward.3} parent=11 // pred_check_branch
          %120 = sbr.rel (%p118) target = $region16
        $region15: #{discriminator2d_forward.3} parent=11 // pred_region
          _
        $region16: #{discriminator2d_forward.3} parent=11 // pred_fallthru
          _
        // Predicated region
        $region17: #{discriminator2d_forward.3} parent=11 // pred_check
          %p121 = pneg %p77
        $region18: #{discriminator2d_forward.3} parent=11 // pred_check_branch
          %123 = sbr.rel (%p121) target = $region20
        $region19: #{discriminator2d_forward.3} parent=11 // pred_region
          _
        $region20: #{discriminator2d_forward.3} parent=11 // pred_fallthru
          _
      $region12: #{discriminator2d_forward.3} parent=5 // pred_fallthru
        _
      %p124 = scmp.lt.s32.totalorder %s9, 2
      // Predicated region
      $region21: #{discriminator2d_forward.3} parent=5 // pred_check
        %p125 = pneg %p124
      $region22: #{discriminator2d_forward.3} parent=5 // pred_check_branch
        %127 = sbr.rel (%p125) target = $region24
      $region23: #{discriminator2d_forward.3} parent=5 // pred_region
        // Predicated region
        $region25: #{discriminator2d_forward.3} parent=23 // pred_check
          %p128 = pneg %p29
        $region26: #{discriminator2d_forward.3} parent=23 // pred_check_branch
          %130 = sbr.rel (%p128) target = $region28
        $region27: #{discriminator2d_forward.3} parent=23 // pred_region
          %s131 = smul.u32 22, %s9
          %s132 = ssub.s32 41, %s131
          %p133 = scmp.lt.s32.totalorder %s132, 22
          %s134 = scalar_select %p133, %s132, 22
          %s135 = smul.u32 64, %s134
          %p136 = scmp.lt.s32.totalorder %s131, 40
          %s137 = scalar_select %p136, %s131, 40
          %s138 = smul.addr %s137, 4
          %s139 = scalar_lea.vmem %s0, %s138
          %s140 = smul.u32 22, %s9
          %s141 = ssub.s32 41, %s140
          %p142 = scmp.lt.s32.totalorder %s141, 22
          %s143 = scalar_select %p142, %s141, 22
          %s144 = smul.u32 64, %s143
        $region28: #{discriminator2d_forward.3} parent=23 // pred_fallthru
          _
      $region24: #{discriminator2d_forward.3} parent=5 // pred_fallthru
        _
      %p145 = scmp.le.s32.totalorder 1, %s9
      %p146 = scmp.lt.s32.totalorder %s9, 3
      %p147 = pnand %p145, %p146
      %p148 = pneg %p147
      // Predicated region
      $region29: #{discriminator2d_forward.3} parent=5 // pred_check
        _
      $region30: #{discriminator2d_forward.3} parent=5 // pred_check_branch
        %150 = sbr.rel (%p147) target = $region32
      $region31: #{discriminator2d_forward.3} parent=5 // pred_region
        %s151 = ssub.s32 %s9, 1
        %s152 = smul.u32 22, %s14
        %s153 = ssub.s32 41, %s152
        %p154 = scmp.lt.s32.totalorder %s153, 22
        %s155 = scalar_select %p154, %s153, 22
        %s156 = smul.u32 64, %s155
        %p157 = scmp.lt.s32.totalorder %s152, 40
        %s158 = scalar_select %p157, %s152, 40
        %s159 = smul.addr %s158, 4
        %s160 = scalar_lea.vmem %s0, %s159
        %p161 = pneg %p35
        %p162 = pneg %p32
        %p163 = pneg %p56
        %p164 = pneg %p53
        %p165 = pneg %p77
        %p166 = pneg %p74
        %p167 = pneg %p103
        %p168 = pneg %p100
        %s169 = sand.u32 %s90, 1
        %s170 = sand.u32 %s90, 1
        %s171 = smul.addr %s170, 88
        %s172 = scalar_lea.vmem [#allocation2], %s171
        %s173 = smul.u32 22, %s14
        %s174 = ssub.s32 41, %s173
        %p175 = scmp.lt.s32.totalorder %s174, 22
        %s176 = scalar_select %p175, %s174, 22
        %s177 = smul.u32 64, %s176
        %p178 = scmp.lt.s32.totalorder %s173, 40
        %s179 = scalar_select %p178, %s173, 40
        %s180 = smul.addr %s179, 4
        %s181 = scalar_lea.vmem %s0, %s180
        %s182 = smul.u32 22, %s14
        %s183 = ssub.s32 41, %s182
        %p184 = scmp.lt.s32.totalorder %s183, 22
        %s185 = scalar_select %p184, %s183, 22
        %s186 = smul.u32 64, %s185
        %s187 = smul.u32 22, %s14
        %s188 = ssub.s32 41, %s187
        %p189 = scmp.lt.s32.totalorder %s188, 22
        %s190 = scalar_select %p189, %s188, 22
        %s191 = smul.u32 64, %s190
        %v193 = vld [vmem:[%s181] sm:$0xf]
        %v194 = vld [vmem:[%s181 + $0x4] sm:$0xf]
        %v195 = vld [vmem:[%s181 + $0x8] sm:$0xf]
        %v196 = vld [vmem:[%s181 + $0xc] sm:$0xf]
        %v197 = vld [vmem:[%s181 + $0x10] sm:$0xf]
        %v198 = vld [vmem:[%s181 + $0x14] sm:$0xf]
        %v199 = vld [vmem:[%s181 + $0x18] sm:$0xf]
        %v200 = vld [vmem:[%s181 + $0x1c] sm:$0xf]
        %v201 = vld [vmem:[%s181 + $0x20] sm:$0xf]
        %v202 = vld [vmem:[%s181 + $0x24] sm:$0xf]
        %v203 = vld [vmem:[%s181 + $0x28] sm:$0xf]
        %v204 = vld [vmem:[%s181 + $0x2c] sm:$0xf]
        %v205 = vld [vmem:[%s181 + $0x30] sm:$0xf]
        %v206 = vld [vmem:[%s181 + $0x34] sm:$0xf]
        %v207 = vld [vmem:[%s181 + $0x38] sm:$0xf]
        %v208 = vld [vmem:[%s181 + $0x3c] sm:$0xf]
        %v209 = vld [vmem:[%s181 + $0x40] sm:$0xf]
        %v210 = vld [vmem:[%s181 + $0x44] sm:$0xf]
        %v211 = vld [vmem:[%s181 + $0x48] sm:$0xf]
        %v212 = vld [vmem:[%s181 + $0x4c] sm:$0xf]
        %v213 = vld [vmem:[%s181 + $0x50] sm:$0xf]
        %v214 = vld [vmem:[%s181 + $0x54] sm:$0xf]
        %v215 = vld [vmem:[%s1] sm:$0xf]
        %v216 = vld [vmem:[%s1 + $0x4] sm:$0xf]
        %v217 = vld [vmem:[%s1 + $0x8] sm:$0xf]
        %v218 = vld [vmem:[%s1 + $0xc] sm:$0xf]
        %v219 = vld [vmem:[%s1 + $0x10] sm:$0xf]
        %v220 = vld [vmem:[%s1 + $0x14] sm:$0xf]
        %v221 = vld [vmem:[%s1 + $0x18] sm:$0xf]
        %v222 = vld [vmem:[%s1 + $0x1c] sm:$0xf]
        %v223 = vld [vmem:[%s1 + $0x20] sm:$0xf]
        %v224 = vld [vmem:[%s1 + $0x24] sm:$0xf]
        %v225 = vld [vmem:[%s1 + $0x28] sm:$0xf]
        %v226 = vld [vmem:[%s1 + $0x2c] sm:$0xf]
        %v227 = vld [vmem:[%s1 + $0x30] sm:$0xf]
        %v228 = vld [vmem:[%s1 + $0x34] sm:$0xf]
        %v229 = vld [vmem:[%s1 + $0x38] sm:$0xf]
        %v230 = vld [vmem:[%s1 + $0x3c] sm:$0xf]
        %v231 = vld [vmem:[%s2] sm:$0x1]
        %v233 = vlaneseq
        %v234 = vshrl.u32 %v233, 7
        %v235 = vsub.s32 0, %v234
        %v236 = vrot.slane %v231, %v235
        %v260 = vunpack.c.l.b16 %v193
        %v261 = vunpack.c.l.b16 %v194
        %v262 = vunpack.c.l.b16 %v195
        %v263 = vunpack.c.l.b16 %v196
        %v264 = vunpack.c.l.b16 %v197
        %v265 = vunpack.c.l.b16 %v198
        %v266 = vunpack.c.l.b16 %v199
        %v267 = vunpack.c.l.b16 %v200
        %v268 = vunpack.c.l.b16 %v201
        %v269 = vunpack.c.l.b16 %v202
        %v270 = vunpack.c.l.b16 %v203
        %v271 = vunpack.c.l.b16 %v204
        %v272 = vunpack.c.l.b16 %v205
        %v273 = vunpack.c.l.b16 %v206
        %v274 = vunpack.c.l.b16 %v207
        %v275 = vunpack.c.l.b16 %v208
        %v276 = vunpack.c.l.b16 %v209
        %v277 = vunpack.c.l.b16 %v210
        %v278 = vunpack.c.l.b16 %v211
        %v279 = vunpack.c.l.b16 %v212
        %v280 = vunpack.c.l.b16 %v213
        %v281 = vunpack.c.l.b16 %v214
        %v282 = vpack.c.b16 %v261, %v260
        %v283 = vpack.c.b16 %v263, %v262
        %v284 = vpack.c.b16 %v265, %v264
        %v285 = vpack.c.b16 %v267, %v266
        %v286 = vpack.c.b16 %v269, %v268
        %v287 = vpack.c.b16 %v271, %v270
        %v288 = vpack.c.b16 %v273, %v272
        %v289 = vpack.c.b16 %v275, %v274
        %v290 = vpack.c.b16 %v277, %v276
        %v291 = vpack.c.b16 %v279, %v278
        %v292 = vpack.c.b16 %v281, %v280
        %v320 = vunpack.c.l.b16 %v215
        %v321 = vunpack.c.l.b16 %v216
        %v322 = vunpack.c.l.b16 %v217
        %v323 = vunpack.c.l.b16 %v218
        %v324 = vunpack.c.l.b16 %v219
        %v325 = vunpack.c.l.b16 %v220
        %v326 = vunpack.c.l.b16 %v221
        %v327 = vunpack.c.l.b16 %v222
        %v328 = vunpack.c.l.b16 %v223
        %v329 = vunpack.c.l.b16 %v224
        %v330 = vunpack.c.l.b16 %v225
        %v331 = vunpack.c.l.b16 %v226
        %v332 = vunpack.c.l.b16 %v227
        %v333 = vunpack.c.l.b16 %v228
        %v334 = vunpack.c.l.b16 %v229
        %v335 = vunpack.c.l.b16 %v230
        %v336 = vpack.c.b16 %v321, %v320
        %v337 = vpack.c.b16 %v323, %v322
        %v338 = vpack.c.b16 %v325, %v324
        %v339 = vpack.c.b16 %v327, %v326
        %v340 = vpack.c.b16 %v329, %v328
        %v341 = vpack.c.b16 %v331, %v330
        %v342 = vpack.c.b16 %v333, %v332
        %v343 = vpack.c.b16 %v335, %v334
        %352 = vmatprep.subr.bf16.mxu0 0
        %353 = vmatpush1.bf16.msra.mxu0 %v343
        %354 = vmatprep.subr.bf16.mxu0 0
        %355 = vmatpush1.bf16.msra.mxu0 %v342
        %356 = vmatprep.subr.bf16.mxu0 0
        %357 = vmatpush1.bf16.msra.mxu0 %v341
        %358 = vmatprep.subr.bf16.mxu0 0
        %359 = vmatpush1.bf16.msra.mxu0 %v340
        %360 = vmatprep.subr.bf16.mxu0 0
        %361 = vmatpush1.bf16.msra.mxu0 %v339
        %362 = vmatprep.subr.bf16.mxu0 0
        %363 = vmatpush1.bf16.msra.mxu0 %v338
        %364 = vmatprep.subr.bf16.mxu0 0
        %365 = vmatpush1.bf16.msra.mxu0 %v337
        %366 = vmatprep.subr.bf16.mxu0 0
        %367 = vmatpush1.bf16.msra.mxu0 %v336
        %368 = vmatprep.subr.bf16.mxu0 0
        %369 = vmatpush2.bf16.msra.mxu0 0
        %370 = vmatprep.subr.bf16.mxu0 0
        %371 = vmatpush2.bf16.msra.mxu0 0
        %372 = vmatprep.subr.bf16.mxu0 0
        %373 = vmatpush2.bf16.msra.mxu0 0
        %374 = vmatprep.subr.bf16.mxu0 0
        %375 = vmatpush2.bf16.msra.mxu0 0
        %376 = vmatprep.subr.bf16.mxu0 0
        %377 = vmatpush2.bf16.msra.mxu0 0
        %378 = vmatprep.subr.bf16.mxu0 0
        %379 = vmatpush2.bf16.msra.mxu0 0
        %380 = vmatprep.subr.bf16.mxu0 0
        %381 = vmatpush2.bf16.msra.mxu0 0
        %382 = vmatprep.subr.bf16.mxu0 0
        %383 = vmatpush2.bf16.msra.mxu0 0
        %384 = vmatprep.mubr.bf16.mxu0 0
        %385 = vmatmul.mubr.bf16.gmra.mxu0 %v282
        %v386 = vpop.f32.mrf.mxu0
        %v387 = vadd.f32 %v236, %v386
        %v388 = vpop.f32.mrf.mxu0
        %v389 = vpop.f32.mrf.mxu0
        %v390 = vadd.f32 %v236, %v389
        %v391 = vpop.f32.mrf.mxu0
        %392 = vmatprep.mubr.bf16.mxu0 0
        %393 = vmatmul.mubr.bf16.gmra.mxu0 %v283
        %v394 = vpop.f32.mrf.mxu0
        %v395 = vadd.f32 %v236, %v394
        %v396 = vpop.f32.mrf.mxu0
        %v397 = vpop.f32.mrf.mxu0
        %v398 = vadd.f32 %v236, %v397
        %v399 = vpop.f32.mrf.mxu0
        %400 = vmatprep.mubr.bf16.mxu0 0
        %401 = vmatmul.mubr.bf16.gmra.mxu0 %v284
        %v402 = vpop.f32.mrf.mxu0
        %v403 = vadd.f32 %v236, %v402
        %v404 = vpop.f32.mrf.mxu0
        %v405 = vpop.f32.mrf.mxu0
        %v406 = vadd.f32 %v236, %v405
        %v407 = vpop.f32.mrf.mxu0
        %408 = vmatprep.mubr.bf16.mxu0 0
        %409 = vmatmul.mubr.bf16.gmra.mxu0 %v285
        %v410 = vpop.f32.mrf.mxu0
        %v411 = vadd.f32 %v236, %v410
        %v412 = vpop.f32.mrf.mxu0
        %v413 = vpop.f32.mrf.mxu0
        %v414 = vadd.f32 %v236, %v413
        %v415 = vpop.f32.mrf.mxu0
        %416 = vmatprep.mubr.bf16.mxu0 0
        %417 = vmatmul.mubr.bf16.gmra.mxu0 %v286
        %v418 = vpop.f32.mrf.mxu0
        %v419 = vadd.f32 %v236, %v418
        %v420 = vpop.f32.mrf.mxu0
        %v421 = vpop.f32.mrf.mxu0
        %v422 = vadd.f32 %v236, %v421
        %v423 = vpop.f32.mrf.mxu0
        %424 = vmatprep.mubr.bf16.mxu0 0
        %425 = vmatmul.mubr.bf16.gmra.mxu0 %v287
        %v426 = vpop.f32.mrf.mxu0
        %v427 = vadd.f32 %v236, %v426
        %v428 = vpop.f32.mrf.mxu0
        %v429 = vpop.f32.mrf.mxu0
        %v430 = vadd.f32 %v236, %v429
        %v431 = vpop.f32.mrf.mxu0
        %432 = vmatprep.mubr.bf16.mxu0 0
        %433 = vmatmul.mubr.bf16.gmra.mxu0 %v288
        %v434 = vpop.f32.mrf.mxu0
        %v435 = vadd.f32 %v236, %v434
        %v436 = vpop.f32.mrf.mxu0
        %v437 = vpop.f32.mrf.mxu0
        %v438 = vadd.f32 %v236, %v437
        %v439 = vpop.f32.mrf.mxu0
        %440 = vmatprep.mubr.bf16.mxu0 0
        %441 = vmatmul.mubr.bf16.gmra.mxu0 %v289
        %v442 = vpop.f32.mrf.mxu0
        %v443 = vadd.f32 %v236, %v442
        %v444 = vpop.f32.mrf.mxu0
        %v445 = vpop.f32.mrf.mxu0
        %v446 = vadd.f32 %v236, %v445
        %v447 = vpop.f32.mrf.mxu0
        %448 = vmatprep.mubr.bf16.mxu0 0
        %449 = vmatmul.mubr.bf16.gmra.mxu0 %v290
        %v450 = vpop.f32.mrf.mxu0
        %v451 = vadd.f32 %v236, %v450
        %v452 = vpop.f32.mrf.mxu0
        %v453 = vpop.f32.mrf.mxu0
        %v454 = vadd.f32 %v236, %v453
        %v455 = vpop.f32.mrf.mxu0
        %456 = vmatprep.mubr.bf16.mxu0 0
        %457 = vmatmul.mubr.bf16.gmra.mxu0 %v291
        %v458 = vpop.f32.mrf.mxu0
        %v459 = vadd.f32 %v236, %v458
        %v460 = vpop.f32.mrf.mxu0
        %v461 = vpop.f32.mrf.mxu0
        %v462 = vadd.f32 %v236, %v461
        %v463 = vpop.f32.mrf.mxu0
        %464 = vmatprep.mubr.bf16.mxu0 0
        %465 = vmatmul.mubr.bf16.gmra.mxu0 %v292
        %v466 = vpop.f32.mrf.mxu0
        %v467 = vadd.f32 %v236, %v466
        %v468 = vpop.f32.mrf.mxu0
        %v469 = vpop.f32.mrf.mxu0
        %v470 = vadd.f32 %v236, %v469
        %v471 = vpop.f32.mrf.mxu0
        %472 = vdwg.mxu0
        %vm473 = vcmp.gt.f32.partialorder %v387, 0.0
        %vm474 = vcmp.gt.f32.partialorder %v390, 0.0
        %vm475 = vcmp.gt.f32.partialorder %v395, 0.0
        %vm476 = vcmp.gt.f32.partialorder %v398, 0.0
        %vm477 = vcmp.gt.f32.partialorder %v403, 0.0
        %vm478 = vcmp.gt.f32.partialorder %v406, 0.0
        %vm479 = vcmp.gt.f32.partialorder %v411, 0.0
        %vm480 = vcmp.gt.f32.partialorder %v414, 0.0
        %vm481 = vcmp.gt.f32.partialorder %v419, 0.0
        %vm482 = vcmp.gt.f32.partialorder %v422, 0.0
        %vm483 = vcmp.gt.f32.partialorder %v427, 0.0
        %vm484 = vcmp.gt.f32.partialorder %v430, 0.0
        %vm485 = vcmp.gt.f32.partialorder %v435, 0.0
        %vm486 = vcmp.gt.f32.partialorder %v438, 0.0
        %vm487 = vcmp.gt.f32.partialorder %v443, 0.0
        %vm488 = vcmp.gt.f32.partialorder %v446, 0.0
        %vm489 = vcmp.gt.f32.partialorder %v451, 0.0
        %vm490 = vcmp.gt.f32.partialorder %v454, 0.0
        %vm491 = vcmp.gt.f32.partialorder %v459, 0.0
        %vm492 = vcmp.gt.f32.partialorder %v462, 0.0
        %vm493 = vcmp.gt.f32.partialorder %v467, 0.0
        %vm494 = vcmp.gt.f32.partialorder %v470, 0.0
        %v495 = vmul.f32 %v387, 0.2
        %v496 = vmul.f32 %v390, 0.2
        %v497 = vmul.f32 %v395, 0.2
        %v498 = vmul.f32 %v398, 0.2
        %v499 = vmul.f32 %v403, 0.2
        %v500 = vmul.f32 %v406, 0.2
        %v501 = vmul.f32 %v411, 0.2
        %v502 = vmul.f32 %v414, 0.2
        %v503 = vmul.f32 %v419, 0.2
        %v504 = vmul.f32 %v422, 0.2
        %v505 = vmul.f32 %v427, 0.2
        %v506 = vmul.f32 %v430, 0.2
        %v507 = vmul.f32 %v435, 0.2
        %v508 = vmul.f32 %v438, 0.2
        %v509 = vmul.f32 %v443, 0.2
        %v510 = vmul.f32 %v446, 0.2
        %v511 = vmul.f32 %v451, 0.2
        %v512 = vmul.f32 %v454, 0.2
        %v513 = vmul.f32 %v459, 0.2
        %v514 = vmul.f32 %v462, 0.2
        %v515 = vmul.f32 %v467, 0.2
        %v516 = vmul.f32 %v470, 0.2
        %v517 = vsel %vm473, %v387, %v495
        %v518 = vsel %vm474, %v390, %v496
        %v519 = vsel %vm475, %v395, %v497
        %v520 = vsel %vm476, %v398, %v498
        %v521 = vsel %vm477, %v403, %v499
        %v522 = vsel %vm478, %v406, %v500
        %v523 = vsel %vm479, %v411, %v501
        %v524 = vsel %vm480, %v414, %v502
        %v525 = vsel %vm481, %v419, %v503
        %v526 = vsel %vm482, %v422, %v504
        %v527 = vsel %vm483, %v427, %v505
        %v528 = vsel %vm484, %v430, %v506
        %v529 = vsel %vm485, %v435, %v507
        %v530 = vsel %vm486, %v438, %v508
        %v531 = vsel %vm487, %v443, %v509
        %v532 = vsel %vm488, %v446, %v510
        %v533 = vsel %vm489, %v451, %v511
        %v534 = vsel %vm490, %v454, %v512
        %v535 = vsel %vm491, %v459, %v513
        %v536 = vsel %vm492, %v462, %v514
        %v537 = vsel %vm493, %v467, %v515
        %v538 = vsel %vm494, %v470, %v516
        %v539 = vpack.c.bf16 %v518, %v517
        %v540 = vpack.c.bf16 %v520, %v519
        %v541 = vpack.c.bf16 %v522, %v521
        %v542 = vpack.c.bf16 %v524, %v523
        %v543 = vpack.c.bf16 %v526, %v525
        %v544 = vpack.c.bf16 %v528, %v527
        %v545 = vpack.c.bf16 %v530, %v529
        %v546 = vpack.c.bf16 %v532, %v531
        %v547 = vpack.c.bf16 %v534, %v533
        %v548 = vpack.c.bf16 %v536, %v535
        %v549 = vpack.c.bf16 %v538, %v537
        %v561 = vunpack.c.l.b16 %v539
        %v562 = vunpack.c.h.b16 %v539
        %v563 = vunpack.c.l.b16 %v540
        %v564 = vunpack.c.h.b16 %v540
        %v565 = vunpack.c.l.b16 %v541
        %v566 = vunpack.c.h.b16 %v541
        %v567 = vunpack.c.l.b16 %v542
        %v568 = vunpack.c.h.b16 %v542
        %v569 = vunpack.c.l.b16 %v543
        %v570 = vunpack.c.h.b16 %v543
        %v571 = vunpack.c.l.b16 %v544
        %v572 = vunpack.c.h.b16 %v544
        %v573 = vunpack.c.l.b16 %v545
        %v574 = vunpack.c.h.b16 %v545
        %v575 = vunpack.c.l.b16 %v546
        %v576 = vunpack.c.h.b16 %v546
        %v577 = vunpack.c.l.b16 %v547
        %v578 = vunpack.c.h.b16 %v547
        %v579 = vunpack.c.l.b16 %v548
        %v580 = vunpack.c.h.b16 %v548
        %v581 = vunpack.c.l.b16 %v549
        %v582 = vunpack.c.h.b16 %v549
        %v583 = vpack.c.b16 %v561, %v561
        %v584 = vpack.c.b16 %v562, %v562
        %v585 = vpack.c.b16 %v563, %v563
        %v586 = vpack.c.b16 %v564, %v564
        %v587 = vpack.c.b16 %v565, %v565
        %v588 = vpack.c.b16 %v566, %v566
        %v589 = vpack.c.b16 %v567, %v567
        %v590 = vpack.c.b16 %v568, %v568
        %v591 = vpack.c.b16 %v569, %v569
        %v592 = vpack.c.b16 %v570, %v570
        %v593 = vpack.c.b16 %v571, %v571
        %v594 = vpack.c.b16 %v572, %v572
        %v595 = vpack.c.b16 %v573, %v573
        %v596 = vpack.c.b16 %v574, %v574
        %v597 = vpack.c.b16 %v575, %v575
        %v598 = vpack.c.b16 %v576, %v576
        %v599 = vpack.c.b16 %v577, %v577
        %v600 = vpack.c.b16 %v578, %v578
        %v601 = vpack.c.b16 %v579, %v579
        %v602 = vpack.c.b16 %v580, %v580
        %v603 = vpack.c.b16 %v581, %v581
        %v604 = vpack.c.b16 %v582, %v582
        %vm627 = vcmask 519168
        %628 = vst.msk [vmem:[%s172] sm:$0xf] %vm627, %v583
        %629 = vst.msk [vmem:[%s172 + $0x4] sm:$0xf] %vm627, %v584
        %630 = vst.msk [vmem:[%s172 + $0x8] sm:$0xf] %vm627, %v585
        %631 = vst.msk [vmem:[%s172 + $0xc] sm:$0xf] %vm627, %v586
        %632 = vst.msk [vmem:[%s172 + $0x10] sm:$0xf] %vm627, %v587
        %633 = vst.msk [vmem:[%s172 + $0x14] sm:$0xf] %vm627, %v588
        %634 = vst.msk [vmem:[%s172 + $0x18] sm:$0xf] %vm627, %v589
        %635 = vst.msk [vmem:[%s172 + $0x1c] sm:$0xf] %vm627, %v590
        %636 = vst.msk [vmem:[%s172 + $0x20] sm:$0xf] %vm627, %v591
        %637 = vst.msk [vmem:[%s172 + $0x24] sm:$0xf] %vm627, %v592
        %638 = vst.msk [vmem:[%s172 + $0x28] sm:$0xf] %vm627, %v593
        %639 = vst.msk [vmem:[%s172 + $0x2c] sm:$0xf] %vm627, %v594
        %640 = vst.msk [vmem:[%s172 + $0x30] sm:$0xf] %vm627, %v595
        %641 = vst.msk [vmem:[%s172 + $0x34] sm:$0xf] %vm627, %v596
        %642 = vst.msk [vmem:[%s172 + $0x38] sm:$0xf] %vm627, %v597
        %643 = vst.msk [vmem:[%s172 + $0x3c] sm:$0xf] %vm627, %v598
        %644 = vst.msk [vmem:[%s172 + $0x40] sm:$0xf] %vm627, %v599
        %645 = vst.msk [vmem:[%s172 + $0x44] sm:$0xf] %vm627, %v600
        %646 = vst.msk [vmem:[%s172 + $0x48] sm:$0xf] %vm627, %v601
        %647 = vst.msk [vmem:[%s172 + $0x4c] sm:$0xf] %vm627, %v602
        %648 = vst.msk [vmem:[%s172 + $0x50] sm:$0xf] %vm627, %v603
        %649 = vst.msk [vmem:[%s172 + $0x54] sm:$0xf] %vm627, %v604
        %s650 = sand.u32 %s90, 1
        %s651 = sand.u32 %s90, 1
        %s652 = smul.addr %s651, 88
        %s653 = scalar_lea.vmem [#allocation2], %s652
        // Predicated region
        $region33: #{discriminator2d_forward.3} parent=31 // pred_check
          %p654 = pneg %p100
        $region34: #{discriminator2d_forward.3} parent=31 // pred_check_branch
          %656 = sbr.rel (%p654) target = $region36
        $region35: #{discriminator2d_forward.3} parent=31 // pred_region
          %s657 = smul.u32 22, %s14
          %s658 = ssub.s32 41, %s657
          %p659 = scmp.lt.s32.totalorder %s658, 22
          %s660 = scalar_select %p659, %s658, 22
          %s661 = smul.u32 64, %s660
          %p662 = scmp.ne.s32.totalorder 0, %s661
          %s663 = smul.addr %s657, 4
          %s664 = scalar_lea.vmem %s3, %s663
          // Predicated region
          $region37: #{discriminator2d_forward.3} parent=35 // pred_check
            %p665 = pneg %p662
          $region38: #{discriminator2d_forward.3} parent=35 // pred_check_branch
            %667 = sbr.rel (%p665) target = $region40
          $region39: #{discriminator2d_forward.3} parent=35 // pred_region
            // Predicated region
            $region41: #{discriminator2d_forward.3} parent=39 // pred_check
              _
            $region42: #{discriminator2d_forward.3} parent=39 // pred_check_branch
              %669 = sbr.rel target = $region44
            $region43: #{discriminator2d_forward.3} parent=39 // pred_region
              // Predicated region
              $region63: #{discriminator2d_forward.3} parent=43 // pred_check
                _
              $region64: #{discriminator2d_forward.3} parent=43 // pred_check_branch
                %762 = sbr.rel (0) target = $region66
              $region65: #{discriminator2d_forward.3} parent=43 // pred_region
                %s764 = ssub.s32 16, 1
                %s765 = sdiv.u32.pop %s660, 22
                %s766 = srem.u32.pop %s660, 22
                // While loop
                $region67: #{discriminator2d_forward.3} parent=65 // loop_pre_header
                  _
                $region68: #{discriminator2d_forward.3} parent=65 // loop_header
                  %s768 = sphi 0, %s770
                  %p769 = scmp.ge.s32.totalorder %s768, %s765
                  %s773 = sphi 0, %s822
                  %s774 = sphi %s653, %s825
                  %s775 = sphi %s664, %s826
                $region69: #{discriminator2d_forward.3} parent=65 // loop_header_branch
                  %772 = sbr.rel (%p769) target = $region73
                $region70: #{discriminator2d_forward.3} parent=65 // loop_body
                  %v776 = vld [vmem:[%s774] sm:%s764]
                  %777 = vst [vmem:[%s775] sm:%s764] %v776
                  %v778 = vld [vmem:[%s774 + $0x4] sm:%s764]
                  %779 = vst [vmem:[%s775 + $0x4] sm:%s764] %v778
                  %v780 = vld [vmem:[%s774 + $0x8] sm:%s764]
                  %781 = vst [vmem:[%s775 + $0x8] sm:%s764] %v780
                  %v782 = vld [vmem:[%s774 + $0xc] sm:%s764]
                  %783 = vst [vmem:[%s775 + $0xc] sm:%s764] %v782
                  %v784 = vld [vmem:[%s774 + $0x10] sm:%s764]
                  %785 = vst [vmem:[%s775 + $0x10] sm:%s764] %v784
                  %v786 = vld [vmem:[%s774 + $0x14] sm:%s764]
                  %787 = vst [vmem:[%s775 + $0x14] sm:%s764] %v786
                  %v788 = vld [vmem:[%s774 + $0x18] sm:%s764]
                  %789 = vst [vmem:[%s775 + $0x18] sm:%s764] %v788
                  %v790 = vld [vmem:[%s774 + $0x1c] sm:%s764]
                  %791 = vst [vmem:[%s775 + $0x1c] sm:%s764] %v790
                  %v792 = vld [vmem:[%s774 + $0x20] sm:%s764]
                  %793 = vst [vmem:[%s775 + $0x20] sm:%s764] %v792
                  %v794 = vld [vmem:[%s774 + $0x24] sm:%s764]
                  %795 = vst [vmem:[%s775 + $0x24] sm:%s764] %v794
                  %v796 = vld [vmem:[%s774 + $0x28] sm:%s764]
                  %797 = vst [vmem:[%s775 + $0x28] sm:%s764] %v796
                  %v798 = vld [vmem:[%s774 + $0x2c] sm:%s764]
                  %799 = vst [vmem:[%s775 + $0x2c] sm:%s764] %v798
                  %v800 = vld [vmem:[%s774 + $0x30] sm:%s764]
                  %801 = vst [vmem:[%s775 + $0x30] sm:%s764] %v800
                  %v802 = vld [vmem:[%s774 + $0x34] sm:%s764]
                  %803 = vst [vmem:[%s775 + $0x34] sm:%s764] %v802
                  %v804 = vld [vmem:[%s774 + $0x38] sm:%s764]
                  %805 = vst [vmem:[%s775 + $0x38] sm:%s764] %v804
                  %v806 = vld [vmem:[%s774 + $0x3c] sm:%s764]
                  %807 = vst [vmem:[%s775 + $0x3c] sm:%s764] %v806
                  %v808 = vld [vmem:[%s774 + $0x40] sm:%s764]
                  %809 = vst [vmem:[%s775 + $0x40] sm:%s764] %v808
                  %v810 = vld [vmem:[%s774 + $0x44] sm:%s764]
                  %811 = vst [vmem:[%s775 + $0x44] sm:%s764] %v810
                  %v812 = vld [vmem:[%s774 + $0x48] sm:%s764]
                  %813 = vst [vmem:[%s775 + $0x48] sm:%s764] %v812
                  %v814 = vld [vmem:[%s774 + $0x4c] sm:%s764]
                  %815 = vst [vmem:[%s775 + $0x4c] sm:%s764] %v814
                  %v816 = vld [vmem:[%s774 + $0x50] sm:%s764]
                  %817 = vst [vmem:[%s775 + $0x50] sm:%s764] %v816
                  %v818 = vld [vmem:[%s774 + $0x54] sm:%s764]
                  %819 = vst [vmem:[%s775 + $0x54] sm:%s764] %v818
                  %s820 = sadd.s32 1, %s773
                  %p821 = scmp.ge.s32.totalorder %s820, %s765
                  %s822 = scalar_select %p821, 0, %s820
                  %s823 = smul.u32 %s822, 88
                  %s824 = smul.u32 %s822, 88
                  %s825 = scalar_lea.vmem %s653, %s823 [#allocation2]
                  %s826 = scalar_lea.vmem %s664, %s824
                $region71: #{discriminator2d_forward.3} parent=65 // loop_footer
                  %s770 = sadd.s32 %s768, 1
                $region72: #{discriminator2d_forward.3} parent=65 // loop_footer_branch
                  %767 = sbr.rel target = $region68
                $region73: #{discriminator2d_forward.3} parent=65 // loop_exit
                  _
                %s827 = sdiv.u32.pop %s660, 22
                %s828 = srem.u32.pop %s660, 22
                %s829 = smul.u32 %s827, 22
                %s830 = smul.u32 4, %s829
                %s831 = scalar_lea.vmem %s653, %s830 [#allocation2]
                %s832 = smul.u32 4, %s829
                %s833 = scalar_lea.vmem %s664, %s832
                // While loop
                $region74: #{discriminator2d_forward.3} parent=65 // loop_pre_header
                  _
                $region75: #{discriminator2d_forward.3} parent=65 // loop_header
                  %s835 = sphi 0, %s837
                  %p836 = scmp.ge.s32.totalorder %s835, %s828
                  %s840 = sphi 0, %s847
                  %s841 = sphi %s831, %s850
                  %s842 = sphi %s833, %s851
                $region76: #{discriminator2d_forward.3} parent=65 // loop_header_branch
                  %839 = sbr.rel (%p836) target = $region80
                $region77: #{discriminator2d_forward.3} parent=65 // loop_body
                  %v843 = vld [vmem:[%s841] sm:%s764]
                  %844 = vst [vmem:[%s842] sm:%s764] %v843
                  %s845 = sadd.s32 1, %s840
                  %p846 = scmp.ge.s32.totalorder %s845, %s828
                  %s847 = scalar_select %p846, 0, %s845
                  %s848 = smul.u32 %s847, 4
                  %s849 = smul.u32 %s847, 4
                  %s850 = scalar_lea.vmem %s831, %s848 [#allocation2]
                  %s851 = scalar_lea.vmem %s833, %s849
                $region78: #{discriminator2d_forward.3} parent=65 // loop_footer
                  %s837 = sadd.s32 %s835, 1
                $region79: #{discriminator2d_forward.3} parent=65 // loop_footer_branch
                  %834 = sbr.rel target = $region75
                $region80: #{discriminator2d_forward.3} parent=65 // loop_exit
                  _
              $region66: #{discriminator2d_forward.3} parent=43 // pred_fallthru
                _
            $region44: #{discriminator2d_forward.3} parent=39 // pred_fallthru
              _
            // Predicated region
            $region45: #{discriminator2d_forward.3} parent=39 // pred_check
              _
            $region46: #{discriminator2d_forward.3} parent=39 // pred_check_branch
              %671 = sbr.rel (0) target = $region48
            $region47: #{discriminator2d_forward.3} parent=39 // pred_region
              %s673 = ssub.s32 16, 1
              %s674 = sdiv.u32.pop %s660, 22
              %s675 = srem.u32.pop %s660, 22
              // While loop
              $region49: #{discriminator2d_forward.3} parent=47 // loop_pre_header
                _
              $region50: #{discriminator2d_forward.3} parent=47 // loop_header
                %s677 = sphi 0, %s679
                %p678 = scmp.ge.s32.totalorder %s677, %s674
                %s682 = sphi 0, %s731
                %s683 = sphi %s653, %s734
                %s684 = sphi %s664, %s735
              $region51: #{discriminator2d_forward.3} parent=47 // loop_header_branch
                %681 = sbr.rel (%p678) target = $region55
              $region52: #{discriminator2d_forward.3} parent=47 // loop_body
                %v685 = vld [vmem:[%s683] sm:%s673]
                %686 = vst [vmem:[%s684] sm:%s673] %v685
                %v687 = vld [vmem:[%s683 + $0x4] sm:%s673]
                %688 = vst [vmem:[%s684 + $0x4] sm:%s673] %v687
                %v689 = vld [vmem:[%s683 + $0x8] sm:%s673]
                %690 = vst [vmem:[%s684 + $0x8] sm:%s673] %v689
                %v691 = vld [vmem:[%s683 + $0xc] sm:%s673]
                %692 = vst [vmem:[%s684 + $0xc] sm:%s673] %v691
                %v693 = vld [vmem:[%s683 + $0x10] sm:%s673]
                %694 = vst [vmem:[%s684 + $0x10] sm:%s673] %v693
                %v695 = vld [vmem:[%s683 + $0x14] sm:%s673]
                %696 = vst [vmem:[%s684 + $0x14] sm:%s673] %v695
                %v697 = vld [vmem:[%s683 + $0x18] sm:%s673]
                %698 = vst [vmem:[%s684 + $0x18] sm:%s673] %v697
                %v699 = vld [vmem:[%s683 + $0x1c] sm:%s673]
                %700 = vst [vmem:[%s684 + $0x1c] sm:%s673] %v699
                %v701 = vld [vmem:[%s683 + $0x20] sm:%s673]
                %702 = vst [vmem:[%s684 + $0x20] sm:%s673] %v701
                %v703 = vld [vmem:[%s683 + $0x24] sm:%s673]
                %704 = vst [vmem:[%s684 + $0x24] sm:%s673] %v703
                %v705 = vld [vmem:[%s683 + $0x28] sm:%s673]
                %706 = vst [vmem:[%s684 + $0x28] sm:%s673] %v705
                %v707 = vld [vmem:[%s683 + $0x2c] sm:%s673]
                %708 = vst [vmem:[%s684 + $0x2c] sm:%s673] %v707
                %v709 = vld [vmem:[%s683 + $0x30] sm:%s673]
                %710 = vst [vmem:[%s684 + $0x30] sm:%s673] %v709
                %v711 = vld [vmem:[%s683 + $0x34] sm:%s673]
                %712 = vst [vmem:[%s684 + $0x34] sm:%s673] %v711
                %v713 = vld [vmem:[%s683 + $0x38] sm:%s673]
                %714 = vst [vmem:[%s684 + $0x38] sm:%s673] %v713
                %v715 = vld [vmem:[%s683 + $0x3c] sm:%s673]
                %716 = vst [vmem:[%s684 + $0x3c] sm:%s673] %v715
                %v717 = vld [vmem:[%s683 + $0x40] sm:%s673]
                %718 = vst [vmem:[%s684 + $0x40] sm:%s673] %v717
                %v719 = vld [vmem:[%s683 + $0x44] sm:%s673]
                %720 = vst [vmem:[%s684 + $0x44] sm:%s673] %v719
                %v721 = vld [vmem:[%s683 + $0x48] sm:%s673]
                %722 = vst [vmem:[%s684 + $0x48] sm:%s673] %v721
                %v723 = vld [vmem:[%s683 + $0x4c] sm:%s673]
                %724 = vst [vmem:[%s684 + $0x4c] sm:%s673] %v723
                %v725 = vld [vmem:[%s683 + $0x50] sm:%s673]
                %726 = vst [vmem:[%s684 + $0x50] sm:%s673] %v725
                %v727 = vld [vmem:[%s683 + $0x54] sm:%s673]
                %728 = vst [vmem:[%s684 + $0x54] sm:%s673] %v727
                %s729 = sadd.s32 1, %s682
                %p730 = scmp.ge.s32.totalorder %s729, %s674
                %s731 = scalar_select %p730, 0, %s729
                %s732 = smul.u32 %s731, 88
                %s733 = smul.u32 %s731, 88
                %s734 = scalar_lea.vmem %s653, %s732 [#allocation2]
                %s735 = scalar_lea.vmem %s664, %s733
              $region53: #{discriminator2d_forward.3} parent=47 // loop_footer
                %s679 = sadd.s32 %s677, 1
              $region54: #{discriminator2d_forward.3} parent=47 // loop_footer_branch
                %676 = sbr.rel target = $region50
              $region55: #{discriminator2d_forward.3} parent=47 // loop_exit
                _
              %s736 = sdiv.u32.pop %s660, 22
              %s737 = srem.u32.pop %s660, 22
              %s738 = smul.u32 %s736, 22
              %s739 = smul.u32 4, %s738
              %s740 = scalar_lea.vmem %s653, %s739 [#allocation2]
              %s741 = smul.u32 4, %s738
              %s742 = scalar_lea.vmem %s664, %s741
              // While loop
              $region56: #{discriminator2d_forward.3} parent=47 // loop_pre_header
                _
              $region57: #{discriminator2d_forward.3} parent=47 // loop_header
                %s744 = sphi 0, %s746
                %p745 = scmp.ge.s32.totalorder %s744, %s737
                %s749 = sphi 0, %s756
                %s750 = sphi %s740, %s759
                %s751 = sphi %s742, %s760
              $region58: #{discriminator2d_forward.3} parent=47 // loop_header_branch
                %748 = sbr.rel (%p745) target = $region62
              $region59: #{discriminator2d_forward.3} parent=47 // loop_body
                %v752 = vld [vmem:[%s750] sm:%s673]
                %753 = vst [vmem:[%s751] sm:%s673] %v752
                %s754 = sadd.s32 1, %s749
                %p755 = scmp.ge.s32.totalorder %s754, %s737
                %s756 = scalar_select %p755, 0, %s754
                %s757 = smul.u32 %s756, 4
                %s758 = smul.u32 %s756, 4
                %s759 = scalar_lea.vmem %s740, %s757 [#allocation2]
                %s760 = scalar_lea.vmem %s742, %s758
              $region60: #{discriminator2d_forward.3} parent=47 // loop_footer
                %s746 = sadd.s32 %s744, 1
              $region61: #{discriminator2d_forward.3} parent=47 // loop_footer_branch
                %743 = sbr.rel target = $region57
              $region62: #{discriminator2d_forward.3} parent=47 // loop_exit
                _
            $region48: #{discriminator2d_forward.3} parent=39 // pred_fallthru
              _
          $region40: #{discriminator2d_forward.3} parent=35 // pred_fallthru
            _
          %852 = vnop
        $region36: #{discriminator2d_forward.3} parent=31 // pred_fallthru
          _
      $region32: #{discriminator2d_forward.3} parent=5 // pred_fallthru
        _
      %p853 = scmp.le.s32.totalorder 2, %s9
      // Predicated region
      $region81: #{discriminator2d_forward.3} parent=5 // pred_check
        %p854 = pneg %p853
      $region82: #{discriminator2d_forward.3} parent=5 // pred_check_branch
        %856 = sbr.rel (%p854) target = $region84
      $region83: #{discriminator2d_forward.3} parent=5 // pred_region
        %s857 = ssub.s32 %s9, 2
        // Predicated region
        $region85: #{discriminator2d_forward.3} parent=83 // pred_check
          %p858 = pneg %p106
        $region86: #{discriminator2d_forward.3} parent=83 // pred_check_branch
          %860 = sbr.rel (%p858) target = $region88
        $region87: #{discriminator2d_forward.3} parent=83 // pred_region
          %s861 = sand.u32 %s91, 1
          %s862 = sand.u32 %s91, 1
          %s863 = smul.addr %s862, 88
          %s864 = scalar_lea.vmem [#allocation2], %s863
        $region88: #{discriminator2d_forward.3} parent=83 // pred_fallthru
          _
      $region84: #{discriminator2d_forward.3} parent=5 // pred_fallthru
        _
    $region6: #{discriminator2d_forward.3} parent=1 // loop_footer
      %s13 = sadd.s32 1, %s9
    $region7: #{discriminator2d_forward.3} parent=1 // loop_footer_branch
      %8 = sbr.rel target = $region3
    $region8: #{discriminator2d_forward.3} parent=1 // loop_exit
      _

// kernel: discriminator2d_forward.4
$region0: #{discriminator2d_forward.4}
  #allocation0 [shape = 'u32[]', space=smem, size = 0x4, offset = 0x4, fixed_abs, tag = 'smem constant byte address 0x4 - core index']
  #allocation1 [shape = 'u32[144,128]{1,0:T(1,128)}', space=vmem, size = 0x12000, scoped, tag = 'internal scratch']
  #allocation2 [shape = 'f32[112,128]{1,0:T(8,128)}', space=vmem, size = 0xe000, scoped, tag = 'scratch operand']
  #allocation3 [shape = 'f32[1,128]{1,0:T(1,128)}', space=vmem, size = 0x200, scoped, tag = 'scratch operand']
  #allocation4 [shape = 'f32[1,128]{1,0:T(1,128)}', space=vmem, size = 0x200, scoped, tag = 'scratch operand']
  #allocation5 [shape = 'f32[1,128]{1,0:T(1,128)}', space=vmem, size = 0x200, scoped, tag = 'scratch operand']
  #allocation6 [shape = 'f32[1,128]{1,0:T(1,128)}', space=vmem, size = 0x200, scoped, tag = 'scratch operand']
  %s0 = inlined_call_operand.vmem [shape: bf16[100,1024], index: 0, kind: input, shape index: {}]
  %s1 = inlined_call_operand.vmem [shape: bf16[1024,128], index: 1, kind: input, shape index: {}]
  %s2 = inlined_call_operand.vmem [shape: f32[1,128], index: 2, kind: input, shape index: {}]
  %s3 = inlined_call_operand.vmem [shape: f32[1,128], index: 3, kind: input, shape index: {}]
  %s4 = inlined_call_operand.vmem [shape: bf16[100,128], index: 4, kind: output, shape index: {}]
  %s5 = sld [smem:[#allocation0]]
  $region109: #{discriminator2d_forward.4} parent=0
    _
  %s7 = ssub.s32 1, %s5
  %s8 = scalar_select 0, %s7, %s5
  $region1: #{discriminator2d_forward.4} parent=0
    #allocation7 [shape = 'u8[57344]{0}', space=vmem, size = 0xe000, scoped, tag = 'output window, operand 0']
    loop: start=0, step=1, limit=4
    $region2: #{discriminator2d_forward.4} parent=1 // loop_pre_header
      _
    $region3: #{discriminator2d_forward.4} parent=1 // loop_header
      %s10 = sphi 0, %s14
      %p11 = scmp.ge.s32.totalorder %s10, 4
      %s17 = sphi 0, %s29
      %s18 = sphi 0, %s25
      %s19 = sphi 0, %s17
      %s20 = sphi 0, %s18
      %s21 = sphi 0, %s19
      %s22 = sphi 0, %s20
      %s36 = sphi 0, %s38
      %s39 = sphi 0, %s36
      %s40 = sphi 0, %s39
      %s56 = sphi 0, %s40
      %s60 = sphi 0, %s60
      %s62 = sphi 0, %s60
      %s63 = sphi 0, %s62
      %s77 = sphi 0, %s63
      %s81 = sphi 0, %s81
      %s83 = sphi 0, %s81
      %s84 = sphi 0, %s83
      %s98 = sphi 0, %s84
      %s102 = sphi 0, %s102
      %s104 = sphi 0, %s102
      %s105 = sphi 0, %s104
      %s119 = sphi 0, %s105
      %s127 = sphi 0, %s129
      %s130 = sphi 0, %s127
      %s131 = sphi 0, %s130
      %s147 = sphi 0, %s131
    $region4: #{discriminator2d_forward.4} parent=1 // loop_header_branch
      %13 = sbr.rel (%p11) target = $region8
    $region5: #{discriminator2d_forward.4} parent=1 // loop_body
      %s15 = ssub.s32 %s10, 1
      %s16 = ssub.s32 %s10, 2
      %s23 = sadd.s32 1, %s18
      %p24 = scmp.ge.s32.totalorder %s23, 1
      %s25 = scalar_select %p24, 0, %s23
      %s26 = sadd.s32 1, %s17
      %s27 = scalar_select %p24, %s26, %s17
      %p28 = scmp.ge.s32.totalorder %s27, 2
      %s29 = scalar_select %p28, 0, %s27
      %s30 = ssub.s32 1, %s17
      %s31 = smul.u32 %s30, %s18
      %s32 = ssub.s32 1, %s29
      %s33 = smul.u32 %s32, %s25
      %s34 = ssub.s32 %s31, %s33
      %p35 = scmp.eq.s32.totalorder %s34, 0
      %s37 = sadd.s32 %s36, 1
      %s38 = scalar_select %p35, %s36, %s37
      %p41 = pneg %p35
      %p42 = scmp.eq.s32.totalorder %s10, 1
      %p43 = por %p41, %p42
      %p44 = scmp.ne.s32.totalorder %s36, %s39
      %p45 = scmp.eq.s32.totalorder %s10, 0
      %p46 = por %p44, %p45
      %p47 = scmp.ne.s32.totalorder %s36, %s39
      %p48 = scmp.eq.s32.totalorder %s15, 1
      %p49 = por %p47, %p48
      %p50 = scmp.ne.s32.totalorder %s39, %s40
      %p51 = scmp.eq.s32.totalorder %s15, 0
      %p52 = por %p50, %p51
      %p53 = scmp.ne.s32.totalorder %s39, %s40
      %p54 = scmp.eq.s32.totalorder %s16, 1
      %p55 = por %p53, %p54
      %p57 = scmp.ne.s32.totalorder %s40, %s56
      %p58 = scmp.eq.s32.totalorder %s16, 0
      %p59 = por %p57, %p58
      %s61 = sadd.s32 %s60, 1
      %p64 = scmp.eq.s32.totalorder %s10, 1
      %p65 = scmp.ne.s32.totalorder %s60, %s62
      %p66 = scmp.eq.s32.totalorder %s10, 0
      %p67 = por %p65, %p66
      %p68 = scmp.ne.s32.totalorder %s60, %s62
      %p69 = scmp.eq.s32.totalorder %s15, 1
      %p70 = por %p68, %p69
      %p71 = scmp.ne.s32.totalorder %s62, %s63
      %p72 = scmp.eq.s32.totalorder %s15, 0
      %p73 = por %p71, %p72
      %p74 = scmp.ne.s32.totalorder %s62, %s63
      %p75 = scmp.eq.s32.totalorder %s16, 1
      %p76 = por %p74, %p75
      %p78 = scmp.ne.s32.totalorder %s63, %s77
      %p79 = scmp.eq.s32.totalorder %s16, 0
      %p80 = por %p78, %p79
      %s82 = sadd.s32 %s81, 1
      %p85 = scmp.eq.s32.totalorder %s10, 1
      %p86 = scmp.ne.s32.totalorder %s81, %s83
      %p87 = scmp.eq.s32.totalorder %s10, 0
      %p88 = por %p86, %p87
      %p89 = scmp.ne.s32.totalorder %s81, %s83
      %p90 = scmp.eq.s32.totalorder %s15, 1
      %p91 = por %p89, %p90
      %p92 = scmp.ne.s32.totalorder %s83, %s84
      %p93 = scmp.eq.s32.totalorder %s15, 0
      %p94 = por %p92, %p93
      %p95 = scmp.ne.s32.totalorder %s83, %s84
      %p96 = scmp.eq.s32.totalorder %s16, 1
      %p97 = por %p95, %p96
      %p99 = scmp.ne.s32.totalorder %s84, %s98
      %p100 = scmp.eq.s32.totalorder %s16, 0
      %p101 = por %p99, %p100
      %s103 = sadd.s32 %s102, 1
      %p106 = scmp.eq.s32.totalorder %s10, 1
      %p107 = scmp.ne.s32.totalorder %s102, %s104
      %p108 = scmp.eq.s32.totalorder %s10, 0
      %p109 = por %p107, %p108
      %p110 = scmp.ne.s32.totalorder %s102, %s104
      %p111 = scmp.eq.s32.totalorder %s15, 1
      %p112 = por %p110, %p111
      %p113 = scmp.ne.s32.totalorder %s104, %s105
      %p114 = scmp.eq.s32.totalorder %s15, 0
      %p115 = por %p113, %p114
      %p116 = scmp.ne.s32.totalorder %s104, %s105
      %p117 = scmp.eq.s32.totalorder %s16, 1
      %p118 = por %p116, %p117
      %p120 = scmp.ne.s32.totalorder %s105, %s119
      %p121 = scmp.eq.s32.totalorder %s16, 0
      %p122 = por %p120, %p121
      %s123 = smul.u32 %s17, %s18
      %s124 = smul.u32 %s29, %s25
      %s125 = ssub.s32 %s123, %s124
      %p126 = scmp.eq.s32.totalorder %s125, 0
      %s128 = sadd.s32 %s127, 1
      %s129 = scalar_select %p126, %s127, %s128
      %p132 = pneg %p126
      %p133 = scmp.eq.s32.totalorder %s10, 1
      %p134 = por %p132, %p133
      %p135 = scmp.ne.s32.totalorder %s127, %s130
      %p136 = scmp.eq.s32.totalorder %s10, 0
      %p137 = por %p135, %p136
      %p138 = scmp.ne.s32.totalorder %s127, %s130
      %p139 = scmp.eq.s32.totalorder %s15, 1
      %p140 = por %p138, %p139
      %p141 = scmp.ne.s32.totalorder %s130, %s131
      %p142 = scmp.eq.s32.totalorder %s15, 0
      %p143 = por %p141, %p142
      %p144 = scmp.ne.s32.totalorder %s130, %s131
      %p145 = scmp.eq.s32.totalorder %s16, 1
      %p146 = por %p144, %p145
      %p148 = scmp.ne.s32.totalorder %s131, %s147
      %p149 = scmp.eq.s32.totalorder %s16, 0
      %p150 = por %p148, %p149
      %p151 = scmp.le.s32.totalorder 1, %s10
      %p152 = scmp.lt.s32.totalorder %s10, 3
      %p153 = pnand %p151, %p152
      %p154 = pneg %p153
      // Predicated region
      $region9: #{discriminator2d_forward.4} parent=5 // pred_check
        _
      $region10: #{discriminator2d_forward.4} parent=5 // pred_check_branch
        %156 = sbr.rel (%p153) target = $region12
      $region11: #{discriminator2d_forward.4} parent=5 // pred_region
        %s157 = ssub.s32 %s10, 1
        // Predicated region
        $region13: #{discriminator2d_forward.4} parent=11 // pred_check
          %p158 = pneg %p73
        $region14: #{discriminator2d_forward.4} parent=11 // pred_check_branch
          %160 = sbr.rel (%p158) target = $region16
        $region15: #{discriminator2d_forward.4} parent=11 // pred_region
          _
        $region16: #{discriminator2d_forward.4} parent=11 // pred_fallthru
          _
        // Predicated region
        $region17: #{discriminator2d_forward.4} parent=11 // pred_check
          %p161 = pneg %p94
        $region18: #{discriminator2d_forward.4} parent=11 // pred_check_branch
          %163 = sbr.rel (%p161) target = $region20
        $region19: #{discriminator2d_forward.4} parent=11 // pred_region
          _
        $region20: #{discriminator2d_forward.4} parent=11 // pred_fallthru
          _
        // Predicated region
        $region21: #{discriminator2d_forward.4} parent=11 // pred_check
          %p164 = pneg %p115
        $region22: #{discriminator2d_forward.4} parent=11 // pred_check_branch
          %166 = sbr.rel (%p164) target = $region24
        $region23: #{discriminator2d_forward.4} parent=11 // pred_region
          _
        $region24: #{discriminator2d_forward.4} parent=11 // pred_fallthru
          _
      $region12: #{discriminator2d_forward.4} parent=5 // pred_fallthru
        _
      %p167 = scmp.lt.s32.totalorder %s10, 2
      // Predicated region
      $region25: #{discriminator2d_forward.4} parent=5 // pred_check
        %p168 = pneg %p167
      $region26: #{discriminator2d_forward.4} parent=5 // pred_check_branch
        %170 = sbr.rel (%p168) target = $region28
      $region27: #{discriminator2d_forward.4} parent=5 // pred_region
        // Predicated region
        $region29: #{discriminator2d_forward.4} parent=27 // pred_check
          %p171 = pneg %p46
        $region30: #{discriminator2d_forward.4} parent=27 // pred_check_branch
          %173 = sbr.rel (%p171) target = $region32
        $region31: #{discriminator2d_forward.4} parent=27 // pred_region
          %s174 = ssub.s32 1, %s17
          %s175 = smul.u32 %s174, %s18
          %s176 = smul.u32 14, %s175
          %s177 = ssub.s32 13, %s176
          %s178 = smul.u32 64, %s177
          %s179 = smul.u32 %s178, 8
          %p180 = scmp.lt.s32.totalorder %s176, 12
          %s181 = scalar_select %p180, %s176, 12
          %s182 = smul.addr %s181, 8
          %s183 = smul.addr %s182, 4
          %s184 = scalar_lea.vmem %s0, %s183
          %s185 = ssub.s32 1, %s17
          %s186 = smul.u32 %s185, %s18
          %s187 = smul.u32 14, %s186
          %s188 = ssub.s32 13, %s187
          %s189 = smul.u32 64, %s188
          %s190 = smul.u32 %s189, 8
        $region32: #{discriminator2d_forward.4} parent=27 // pred_fallthru
          _
      $region28: #{discriminator2d_forward.4} parent=5 // pred_fallthru
        _
      %p191 = scmp.le.s32.totalorder 1, %s10
      %p192 = scmp.lt.s32.totalorder %s10, 3
      %p193 = pnand %p191, %p192
      %p194 = pneg %p193
      // Predicated region
      $region33: #{discriminator2d_forward.4} parent=5 // pred_check
        _
      $region34: #{discriminator2d_forward.4} parent=5 // pred_check_branch
        %196 = sbr.rel (%p193) target = $region36
      $region35: #{discriminator2d_forward.4} parent=5 // pred_region
        %s197 = ssub.s32 %s10, 1
        %s198 = ssub.s32 1, %s19
        %s199 = smul.u32 %s198, %s20
        %s200 = smul.u32 14, %s199
        %s201 = ssub.s32 13, %s200
        %s202 = smul.u32 64, %s201
        %s203 = smul.u32 %s202, 8
        %p204 = scmp.lt.s32.totalorder %s200, 12
        %s205 = scalar_select %p204, %s200, 12
        %s206 = smul.addr %s205, 8
        %s207 = smul.addr %s206, 4
        %s208 = scalar_lea.vmem %s0, %s207
        %p209 = pneg %p52
        %p210 = pneg %p49
        %p211 = pneg %p73
        %p212 = pneg %p70
        %p213 = pneg %p94
        %p214 = pneg %p91
        %p215 = pneg %p115
        %p216 = pneg %p112
        %p217 = pneg %p143
        %p218 = pneg %p140
        %s219 = sand.u32 %s130, 1
        %s220 = sand.u32 %s130, 1
        %s221 = smul.addr %s220, 56
        %s222 = scalar_lea.vmem [#allocation7], %s221
        %s223 = ssub.s32 1, %s19
        %s224 = smul.u32 %s223, %s20
        %s225 = smul.u32 14, %s224
        %s226 = ssub.s32 13, %s225
        %s227 = smul.u32 64, %s226
        %s228 = smul.u32 %s227, 8
        %p229 = scmp.lt.s32.totalorder %s225, 12
        %s230 = scalar_select %p229, %s225, 12
        %s231 = smul.addr %s230, 8
        %s232 = smul.addr %s231, 4
        %s233 = scalar_lea.vmem %s0, %s232
        %s234 = ssub.s32 1, %s19
        %s235 = smul.u32 %s234, %s20
        %s236 = smul.u32 14, %s235
        %s237 = ssub.s32 13, %s236
        %s238 = smul.u32 64, %s237
        %s239 = smul.u32 %s238, 8
        %s240 = smul.u32 %s19, %s20
        %s241 = smul.u32 14, %s240
        %s242 = ssub.s32 13, %s241
        %s243 = smul.u32 64, %s242
        %s245 = smul.u32 %s20, 112
        %p246 = scmp.eq.s32.totalorder %s19, 0
        %p247 = scmp.eq.s32.totalorder %s20, 0
        %p248 = pnand %p246, %p247
        %p249 = pneg %p248
        // Predicated region
        $region37: #{discriminator2d_forward.4} parent=35 // pred_check
          _
        $region38: #{discriminator2d_forward.4} parent=35 // pred_check_branch
          %251 = sbr.rel (%p248) target = $region40
        $region39: #{discriminator2d_forward.4} parent=35 // pred_region
          %252 = vst [vmem:[#allocation3] sm:$0x1] 0.0
          %253 = vst [vmem:[#allocation4] sm:$0x1] 0.0
        $region40: #{discriminator2d_forward.4} parent=35 // pred_fallthru
          _
        // Predicated region
        $region41: #{discriminator2d_forward.4} parent=35 // pred_check
          %p254 = pneg %p246
        $region42: #{discriminator2d_forward.4} parent=35 // pred_check_branch
          %256 = sbr.rel (%p254) target = $region44
        $region43: #{discriminator2d_forward.4} parent=35 // pred_region
          %v257 = vld [vmem:[%s233] sm:$0xff]
          %v258 = vld [vmem:[%s233 + $0x8] sm:$0xff]
          %v259 = vld [vmem:[%s233 + $0x10] sm:$0xff]
          %v260 = vld [vmem:[%s233 + $0x18] sm:$0xff]
          %v261 = vld [vmem:[%s233 + $0x20] sm:$0xff]
          %v262 = vld [vmem:[%s233 + $0x28] sm:$0xff]
          %v263 = vld [vmem:[%s233 + $0x30] sm:$0xff]
          %v264 = vld [vmem:[%s233 + $0x38] sm:$0xff]
          %v265 = vld [vmem:[%s233 + $0x40] sm:$0xff]
          %v266 = vld [vmem:[%s233 + $0x48] sm:$0xff]
          %v267 = vld [vmem:[%s233 + $0x50] sm:$0xff]
          %v268 = vld [vmem:[%s233 + $0x58] sm:$0xff]
          %v269 = vld [vmem:[%s233 + $0x60] sm:$0xff]
          %v270 = vld [vmem:[%s233 + $0x68] sm:$0xff]
          %v271 = vld [vmem:[%s233 + $0x70] sm:$0xff]
          %v272 = vld [vmem:[%s233 + $0x78] sm:$0xff]
          %v273 = vld [vmem:[%s233 + $0x80] sm:$0xff]
          %v274 = vld [vmem:[%s233 + $0x88] sm:$0xff]
          %v275 = vld [vmem:[%s233 + $0x90] sm:$0xff]
          %v276 = vld [vmem:[%s233 + $0x98] sm:$0xff]
          %v277 = vld [vmem:[%s233 + $0xa0] sm:$0xff]
          %v278 = vld [vmem:[%s233 + $0xa8] sm:$0xff]
          %v279 = vld [vmem:[%s233 + $0xb0] sm:$0xff]
          %v280 = vld [vmem:[%s233 + $0xb8] sm:$0xff]
          %v281 = vld [vmem:[%s233 + $0xc0] sm:$0xff]
          %v282 = vld [vmem:[%s233 + $0xc8] sm:$0xff]
          %v283 = vld [vmem:[%s233 + $0xd0] sm:$0xff]
          %v284 = vld [vmem:[%s233 + $0xd8] sm:$0xff]
          %v285 = vld [vmem:[%s233 + $0xe0] sm:$0xff]
          %v286 = vld [vmem:[%s233 + $0xe8] sm:$0xff]
          %v287 = vld [vmem:[%s233 + $0xf0] sm:$0xff]
          %v288 = vld [vmem:[%s233 + $0xf8] sm:$0xff]
          %v289 = vld [vmem:[%s233 + $0x100] sm:$0xff]
          %v290 = vld [vmem:[%s233 + $0x108] sm:$0xff]
          %v291 = vld [vmem:[%s233 + $0x110] sm:$0xff]
          %v292 = vld [vmem:[%s233 + $0x118] sm:$0xff]
          %v293 = vld [vmem:[%s233 + $0x120] sm:$0xff]
          %v294 = vld [vmem:[%s233 + $0x128] sm:$0xff]
          %v295 = vld [vmem:[%s233 + $0x130] sm:$0xff]
          %v296 = vld [vmem:[%s233 + $0x138] sm:$0xff]
          %v297 = vld [vmem:[%s233 + $0x140] sm:$0xff]
          %v298 = vld [vmem:[%s233 + $0x148] sm:$0xff]
          %v299 = vld [vmem:[%s233 + $0x150] sm:$0xff]
          %v300 = vld [vmem:[%s233 + $0x158] sm:$0xff]
          %v301 = vld [vmem:[%s233 + $0x160] sm:$0xff]
          %v302 = vld [vmem:[%s233 + $0x168] sm:$0xff]
          %v303 = vld [vmem:[%s233 + $0x170] sm:$0xff]
          %v304 = vld [vmem:[%s233 + $0x178] sm:$0xff]
          %v305 = vld [vmem:[%s233 + $0x180] sm:$0xff]
          %v306 = vld [vmem:[%s233 + $0x188] sm:$0xff]
          %v307 = vld [vmem:[%s233 + $0x190] sm:$0xff]
          %v308 = vld [vmem:[%s233 + $0x198] sm:$0xff]
          %v309 = vld [vmem:[%s233 + $0x1a0] sm:$0xff]
          %v310 = vld [vmem:[%s233 + $0x1a8] sm:$0xff]
          %v311 = vld [vmem:[%s233 + $0x1b0] sm:$0xff]
          %v312 = vld [vmem:[%s233 + $0x1b8] sm:$0xff]
          %v313 = vld [vmem:[%s1] sm:$0xf]
          %v314 = vld [vmem:[%s1 + $0x4] sm:$0xf]
          %v315 = vld [vmem:[%s1 + $0x8] sm:$0xf]
          %v316 = vld [vmem:[%s1 + $0xc] sm:$0xf]
          %v317 = vld [vmem:[%s1 + $0x10] sm:$0xf]
          %v318 = vld [vmem:[%s1 + $0x14] sm:$0xf]
          %v319 = vld [vmem:[%s1 + $0x18] sm:$0xf]
          %v320 = vld [vmem:[%s1 + $0x1c] sm:$0xf]
          %v321 = vld [vmem:[%s1 + $0x20] sm:$0xf]
          %v322 = vld [vmem:[%s1 + $0x24] sm:$0xf]
          %v323 = vld [vmem:[%s1 + $0x28] sm:$0xf]
          %v324 = vld [vmem:[%s1 + $0x2c] sm:$0xf]
          %v325 = vld [vmem:[%s1 + $0x30] sm:$0xf]
          %v326 = vld [vmem:[%s1 + $0x34] sm:$0xf]
          %v327 = vld [vmem:[%s1 + $0x38] sm:$0xf]
          %v328 = vld [vmem:[%s1 + $0x3c] sm:$0xf]
          %v329 = vld [vmem:[%s1 + $0x40] sm:$0xf]
          %v330 = vld [vmem:[%s1 + $0x44] sm:$0xf]
          %v331 = vld [vmem:[%s1 + $0x48] sm:$0xf]
          %v332 = vld [vmem:[%s1 + $0x4c] sm:$0xf]
          %v333 = vld [vmem:[%s1 + $0x50] sm:$0xf]
          %v334 = vld [vmem:[%s1 + $0x54] sm:$0xf]
          %v335 = vld [vmem:[%s1 + $0x58] sm:$0xf]
          %v336 = vld [vmem:[%s1 + $0x5c] sm:$0xf]
          %v337 = vld [vmem:[%s1 + $0x60] sm:$0xf]
          %v338 = vld [vmem:[%s1 + $0x64] sm:$0xf]
          %v339 = vld [vmem:[%s1 + $0x68] sm:$0xf]
          %v340 = vld [vmem:[%s1 + $0x6c] sm:$0xf]
          %v341 = vld [vmem:[%s1 + $0x70] sm:$0xf]
          %v342 = vld [vmem:[%s1 + $0x74] sm:$0xf]
          %v343 = vld [vmem:[%s1 + $0x78] sm:$0xf]
          %v344 = vld [vmem:[%s1 + $0x7c] sm:$0xf]
          %v345 = vld [vmem:[%s1 + $0x80] sm:$0xf]
          %v346 = vld [vmem:[%s1 + $0x84] sm:$0xf]
          %v347 = vld [vmem:[%s1 + $0x88] sm:$0xf]
          %v348 = vld [vmem:[%s1 + $0x8c] sm:$0xf]
          %v349 = vld [vmem:[%s1 + $0x90] sm:$0xf]
          %v350 = vld [vmem:[%s1 + $0x94] sm:$0xf]
          %v351 = vld [vmem:[%s1 + $0x98] sm:$0xf]
          %v352 = vld [vmem:[%s1 + $0x9c] sm:$0xf]
          %v353 = vld [vmem:[%s1 + $0xa0] sm:$0xf]
          %v354 = vld [vmem:[%s1 + $0xa4] sm:$0xf]
          %v355 = vld [vmem:[%s1 + $0xa8] sm:$0xf]
          %v356 = vld [vmem:[%s1 + $0xac] sm:$0xf]
          %v357 = vld [vmem:[%s1 + $0xb0] sm:$0xf]
          %v358 = vld [vmem:[%s1 + $0xb4] sm:$0xf]
          %v359 = vld [vmem:[%s1 + $0xb8] sm:$0xf]
          %v360 = vld [vmem:[%s1 + $0xbc] sm:$0xf]
          %v361 = vld [vmem:[%s1 + $0xc0] sm:$0xf]
          %v362 = vld [vmem:[%s1 + $0xc4] sm:$0xf]
          %v363 = vld [vmem:[%s1 + $0xc8] sm:$0xf]
          %v364 = vld [vmem:[%s1 + $0xcc] sm:$0xf]
          %v365 = vld [vmem:[%s1 + $0xd0] sm:$0xf]
          %v366 = vld [vmem:[%s1 + $0xd4] sm:$0xf]
          %v367 = vld [vmem:[%s1 + $0xd8] sm:$0xf]
          %v368 = vld [vmem:[%s1 + $0xdc] sm:$0xf]
          %v369 = vld [vmem:[%s1 + $0xe0] sm:$0xf]
          %v370 = vld [vmem:[%s1 + $0xe4] sm:$0xf]
          %v371 = vld [vmem:[%s1 + $0xe8] sm:$0xf]
          %v372 = vld [vmem:[%s1 + $0xec] sm:$0xf]
          %v373 = vld [vmem:[%s1 + $0xf0] sm:$0xf]
          %v374 = vld [vmem:[%s1 + $0xf4] sm:$0xf]
          %v375 = vld [vmem:[%s1 + $0xf8] sm:$0xf]
          %v376 = vld [vmem:[%s1 + $0xfc] sm:$0xf]
          %v377 = vld [vmem:[%s1 + $0x100] sm:$0xf]
          %v378 = vld [vmem:[%s1 + $0x104] sm:$0xf]
          %v379 = vld [vmem:[%s1 + $0x108] sm:$0xf]
          %v380 = vld [vmem:[%s1 + $0x10c] sm:$0xf]
          %v381 = vld [vmem:[%s1 + $0x110] sm:$0xf]
          %v382 = vld [vmem:[%s1 + $0x114] sm:$0xf]
          %v383 = vld [vmem:[%s1 + $0x118] sm:$0xf]
          %v384 = vld [vmem:[%s1 + $0x11c] sm:$0xf]
          %v385 = vld [vmem:[%s1 + $0x120] sm:$0xf]
          %v386 = vld [vmem:[%s1 + $0x124] sm:$0xf]
          %v387 = vld [vmem:[%s1 + $0x128] sm:$0xf]
          %v388 = vld [vmem:[%s1 + $0x12c] sm:$0xf]
          %v389 = vld [vmem:[%s1 + $0x130] sm:$0xf]
          %v390 = vld [vmem:[%s1 + $0x134] sm:$0xf]
          %v391 = vld [vmem:[%s1 + $0x138] sm:$0xf]
          %v392 = vld [vmem:[%s1 + $0x13c] sm:$0xf]
          %v393 = vld [vmem:[%s1 + $0x140] sm:$0xf]
          %v394 = vld [vmem:[%s1 + $0x144] sm:$0xf]
          %v395 = vld [vmem:[%s1 + $0x148] sm:$0xf]
          %v396 = vld [vmem:[%s1 + $0x14c] sm:$0xf]
          %v397 = vld [vmem:[%s1 + $0x150] sm:$0xf]
          %v398 = vld [vmem:[%s1 + $0x154] sm:$0xf]
          %v399 = vld [vmem:[%s1 + $0x158] sm:$0xf]
          %v400 = vld [vmem:[%s1 + $0x15c] sm:$0xf]
          %v401 = vld [vmem:[%s1 + $0x160] sm:$0xf]
          %v402 = vld [vmem:[%s1 + $0x164] sm:$0xf]
          %v403 = vld [vmem:[%s1 + $0x168] sm:$0xf]
          %v404 = vld [vmem:[%s1 + $0x16c] sm:$0xf]
          %v405 = vld [vmem:[%s1 + $0x170] sm:$0xf]
          %v406 = vld [vmem:[%s1 + $0x174] sm:$0xf]
          %v407 = vld [vmem:[%s1 + $0x178] sm:$0xf]
          %v408 = vld [vmem:[%s1 + $0x17c] sm:$0xf]
          %v409 = vld [vmem:[%s1 + $0x180] sm:$0xf]
          %v410 = vld [vmem:[%s1 + $0x184] sm:$0xf]
          %v411 = vld [vmem:[%s1 + $0x188] sm:$0xf]
          %v412 = vld [vmem:[%s1 + $0x18c] sm:$0xf]
          %v413 = vld [vmem:[%s1 + $0x190] sm:$0xf]
          %v414 = vld [vmem:[%s1 + $0x194] sm:$0xf]
          %v415 = vld [vmem:[%s1 + $0x198] sm:$0xf]
          %v416 = vld [vmem:[%s1 + $0x19c] sm:$0xf]
          %v417 = vld [vmem:[%s1 + $0x1a0] sm:$0xf]
          %v418 = vld [vmem:[%s1 + $0x1a4] sm:$0xf]
          %v419 = vld [vmem:[%s1 + $0x1a8] sm:$0xf]
          %v420 = vld [vmem:[%s1 + $0x1ac] sm:$0xf]
          %v421 = vld [vmem:[%s1 + $0x1b0] sm:$0xf]
          %v422 = vld [vmem:[%s1 + $0x1b4] sm:$0xf]
          %v423 = vld [vmem:[%s1 + $0x1b8] sm:$0xf]
          %v424 = vld [vmem:[%s1 + $0x1bc] sm:$0xf]
          %v425 = vld [vmem:[%s1 + $0x1c0] sm:$0xf]
          %v426 = vld [vmem:[%s1 + $0x1c4] sm:$0xf]
          %v427 = vld [vmem:[%s1 + $0x1c8] sm:$0xf]
          %v428 = vld [vmem:[%s1 + $0x1cc] sm:$0xf]
          %v429 = vld [vmem:[%s1 + $0x1d0] sm:$0xf]
          %v430 = vld [vmem:[%s1 + $0x1d4] sm:$0xf]
          %v431 = vld [vmem:[%s1 + $0x1d8] sm:$0xf]
          %v432 = vld [vmem:[%s1 + $0x1dc] sm:$0xf]
          %v433 = vld [vmem:[%s1 + $0x1e0] sm:$0xf]
          %v434 = vld [vmem:[%s1 + $0x1e4] sm:$0xf]
          %v435 = vld [vmem:[%s1 + $0x1e8] sm:$0xf]
          %v436 = vld [vmem:[%s1 + $0x1ec] sm:$0xf]
          %v437 = vld [vmem:[%s1 + $0x1f0] sm:$0xf]
          %v438 = vld [vmem:[%s1 + $0x1f4] sm:$0xf]
          %v439 = vld [vmem:[%s1 + $0x1f8] sm:$0xf]
          %v440 = vld [vmem:[%s1 + $0x1fc] sm:$0xf]
          %v497 = vunpack.c.l.b16 %v257
          %v498 = vunpack.c.h.b16 %v257
          %v499 = vunpack.c.l.b16 %v258
          %v500 = vunpack.c.h.b16 %v258
          %v501 = vunpack.c.l.b16 %v259
          %v502 = vunpack.c.h.b16 %v259
          %v503 = vunpack.c.l.b16 %v260
          %v504 = vunpack.c.h.b16 %v260
          %v505 = vunpack.c.l.b16 %v261
          %v506 = vunpack.c.h.b16 %v261
          %v507 = vunpack.c.l.b16 %v262
          %v508 = vunpack.c.h.b16 %v262
          %v509 = vunpack.c.l.b16 %v263
          %v510 = vunpack.c.h.b16 %v263
          %v511 = vunpack.c.l.b16 %v264
          %v512 = vunpack.c.h.b16 %v264
          %v513 = vunpack.c.l.b16 %v265
          %v514 = vunpack.c.h.b16 %v265
          %v515 = vunpack.c.l.b16 %v266
          %v516 = vunpack.c.h.b16 %v266
          %v517 = vunpack.c.l.b16 %v267
          %v518 = vunpack.c.h.b16 %v267
          %v519 = vunpack.c.l.b16 %v268
          %v520 = vunpack.c.h.b16 %v268
          %v521 = vunpack.c.l.b16 %v269
          %v522 = vunpack.c.h.b16 %v269
          %v523 = vunpack.c.l.b16 %v270
          %v524 = vunpack.c.h.b16 %v270
          %v525 = vunpack.c.l.b16 %v271
          %v526 = vunpack.c.h.b16 %v271
          %v527 = vunpack.c.l.b16 %v272
          %v528 = vunpack.c.h.b16 %v272
          %v529 = vunpack.c.l.b16 %v273
          %v530 = vunpack.c.h.b16 %v273
          %v531 = vunpack.c.l.b16 %v274
          %v532 = vunpack.c.h.b16 %v274
          %v533 = vunpack.c.l.b16 %v275
          %v534 = vunpack.c.h.b16 %v275
          %v535 = vunpack.c.l.b16 %v276
          %v536 = vunpack.c.h.b16 %v276
          %v537 = vunpack.c.l.b16 %v277
          %v538 = vunpack.c.h.b16 %v277
          %v539 = vunpack.c.l.b16 %v278
          %v540 = vunpack.c.h.b16 %v278
          %v541 = vunpack.c.l.b16 %v279
          %v542 = vunpack.c.h.b16 %v279
          %v543 = vunpack.c.l.b16 %v280
          %v544 = vunpack.c.h.b16 %v280
          %v545 = vunpack.c.l.b16 %v281
          %v546 = vunpack.c.h.b16 %v281
          %v547 = vunpack.c.l.b16 %v282
          %v548 = vunpack.c.h.b16 %v282
          %v549 = vunpack.c.l.b16 %v283
          %v550 = vunpack.c.h.b16 %v283
          %v551 = vunpack.c.l.b16 %v284
          %v552 = vunpack.c.h.b16 %v284
          %v553 = vunpack.c.l.b16 %v285
          %v554 = vunpack.c.h.b16 %v285
          %v555 = vunpack.c.l.b16 %v286
          %v556 = vunpack.c.h.b16 %v286
          %v557 = vunpack.c.l.b16 %v287
          %v558 = vunpack.c.h.b16 %v287
          %v559 = vunpack.c.l.b16 %v288
          %v560 = vunpack.c.h.b16 %v288
          %v561 = vunpack.c.l.b16 %v289
          %v562 = vunpack.c.h.b16 %v289
          %v563 = vunpack.c.l.b16 %v290
          %v564 = vunpack.c.h.b16 %v290
          %v565 = vunpack.c.l.b16 %v291
          %v566 = vunpack.c.h.b16 %v291
          %v567 = vunpack.c.l.b16 %v292
          %v568 = vunpack.c.h.b16 %v292
          %v569 = vunpack.c.l.b16 %v293
          %v570 = vunpack.c.h.b16 %v293
          %v571 = vunpack.c.l.b16 %v294
          %v572 = vunpack.c.h.b16 %v294
          %v573 = vunpack.c.l.b16 %v295
          %v574 = vunpack.c.h.b16 %v295
          %v575 = vunpack.c.l.b16 %v296
          %v576 = vunpack.c.h.b16 %v296
          %v577 = vunpack.c.l.b16 %v297
          %v578 = vunpack.c.h.b16 %v297
          %v579 = vunpack.c.l.b16 %v298
          %v580 = vunpack.c.h.b16 %v298
          %v581 = vunpack.c.l.b16 %v299
          %v582 = vunpack.c.h.b16 %v299
          %v583 = vunpack.c.l.b16 %v300
          %v584 = vunpack.c.h.b16 %v300
          %v585 = vunpack.c.l.b16 %v301
          %v586 = vunpack.c.h.b16 %v301
          %v587 = vunpack.c.l.b16 %v302
          %v588 = vunpack.c.h.b16 %v302
          %v589 = vunpack.c.l.b16 %v303
          %v590 = vunpack.c.h.b16 %v303
          %v591 = vunpack.c.l.b16 %v304
          %v592 = vunpack.c.h.b16 %v304
          %v593 = vunpack.c.l.b16 %v305
          %v594 = vunpack.c.h.b16 %v305
          %v595 = vunpack.c.l.b16 %v306
          %v596 = vunpack.c.h.b16 %v306
          %v597 = vunpack.c.l.b16 %v307
          %v598 = vunpack.c.h.b16 %v307
          %v599 = vunpack.c.l.b16 %v308
          %v600 = vunpack.c.h.b16 %v308
          %v601 = vunpack.c.l.b16 %v309
          %v602 = vunpack.c.h.b16 %v309
          %v603 = vunpack.c.l.b16 %v310
          %v604 = vunpack.c.h.b16 %v310
          %v605 = vunpack.c.l.b16 %v311
          %v606 = vunpack.c.h.b16 %v311
          %v607 = vunpack.c.l.b16 %v312
          %v608 = vunpack.c.h.b16 %v312
          %v609 = vpack.c.b16 %v505, %v497
          %v610 = vpack.c.b16 %v506, %v498
          %v611 = vpack.c.b16 %v507, %v499
          %v612 = vpack.c.b16 %v508, %v500
          %v613 = vpack.c.b16 %v509, %v501
          %v614 = vpack.c.b16 %v510, %v502
          %v615 = vpack.c.b16 %v511, %v503
          %v616 = vpack.c.b16 %v512, %v504
          %v617 = vpack.c.b16 %v521, %v513
          %v618 = vpack.c.b16 %v522, %v514
          %v619 = vpack.c.b16 %v523, %v515
          %v620 = vpack.c.b16 %v524, %v516
          %v621 = vpack.c.b16 %v525, %v517
          %v622 = vpack.c.b16 %v526, %v518
          %v623 = vpack.c.b16 %v527, %v519
          %v624 = vpack.c.b16 %v528, %v520
          %v625 = vpack.c.b16 %v537, %v529
          %v626 = vpack.c.b16 %v538, %v530
          %v627 = vpack.c.b16 %v539, %v531
          %v628 = vpack.c.b16 %v540, %v532
          %v629 = vpack.c.b16 %v541, %v533
          %v630 = vpack.c.b16 %v542, %v534
          %v631 = vpack.c.b16 %v543, %v535
          %v632 = vpack.c.b16 %v544, %v536
          %v633 = vpack.c.b16 %v553, %v545
          %v634 = vpack.c.b16 %v554, %v546
          %v635 = vpack.c.b16 %v555, %v547
          %v636 = vpack.c.b16 %v556, %v548
          %v637 = vpack.c.b16 %v557, %v549
          %v638 = vpack.c.b16 %v558, %v550
          %v639 = vpack.c.b16 %v559, %v551
          %v640 = vpack.c.b16 %v560, %v552
          %v641 = vpack.c.b16 %v569, %v561
          %v642 = vpack.c.b16 %v570, %v562
          %v643 = vpack.c.b16 %v571, %v563
          %v644 = vpack.c.b16 %v572, %v564
          %v645 = vpack.c.b16 %v573, %v565
          %v646 = vpack.c.b16 %v574, %v566
          %v647 = vpack.c.b16 %v575, %v567
          %v648 = vpack.c.b16 %v576, %v568
          %v649 = vpack.c.b16 %v585, %v577
          %v650 = vpack.c.b16 %v586, %v578
          %v651 = vpack.c.b16 %v587, %v579
          %v652 = vpack.c.b16 %v588, %v580
          %v653 = vpack.c.b16 %v589, %v581
          %v654 = vpack.c.b16 %v590, %v582
          %v655 = vpack.c.b16 %v591, %v583
          %v656 = vpack.c.b16 %v592, %v584
          %v657 = vpack.c.b16 %v601, %v593
          %v658 = vpack.c.b16 %v602, %v594
          %v659 = vpack.c.b16 %v603, %v595
          %v660 = vpack.c.b16 %v604, %v596
          %v661 = vpack.c.b16 %v605, %v597
          %v662 = vpack.c.b16 %v606, %v598
          %v663 = vpack.c.b16 %v607, %v599
          %v664 = vpack.c.b16 %v608, %v600
          %v849 = vunpack.c.l.b16 %v313
          %v850 = vunpack.c.l.b16 %v314
          %v851 = vunpack.c.l.b16 %v315
          %v852 = vunpack.c.l.b16 %v316
          %v853 = vunpack.c.l.b16 %v317
          %v854 = vunpack.c.l.b16 %v318
          %v855 = vunpack.c.l.b16 %v319
          %v856 = vunpack.c.l.b16 %v320
          %v857 = vunpack.c.l.b16 %v321
          %v858 = vunpack.c.l.b16 %v322
          %v859 = vunpack.c.l.b16 %v323
          %v860 = vunpack.c.l.b16 %v324
          %v861 = vunpack.c.l.b16 %v325
          %v862 = vunpack.c.l.b16 %v326
          %v863 = vunpack.c.l.b16 %v327
          %v864 = vunpack.c.l.b16 %v328
          %v865 = vunpack.c.l.b16 %v329
          %v866 = vunpack.c.l.b16 %v330
          %v867 = vunpack.c.l.b16 %v331
          %v868 = vunpack.c.l.b16 %v332
          %v869 = vunpack.c.l.b16 %v333
          %v870 = vunpack.c.l.b16 %v334
          %v871 = vunpack.c.l.b16 %v335
          %v872 = vunpack.c.l.b16 %v336
          %v873 = vunpack.c.l.b16 %v337
          %v874 = vunpack.c.l.b16 %v338
          %v875 = vunpack.c.l.b16 %v339
          %v876 = vunpack.c.l.b16 %v340
          %v877 = vunpack.c.l.b16 %v341
          %v878 = vunpack.c.l.b16 %v342
          %v879 = vunpack.c.l.b16 %v343
          %v880 = vunpack.c.l.b16 %v344
          %v881 = vunpack.c.l.b16 %v345
          %v882 = vunpack.c.l.b16 %v346
          %v883 = vunpack.c.l.b16 %v347
          %v884 = vunpack.c.l.b16 %v348
          %v885 = vunpack.c.l.b16 %v349
          %v886 = vunpack.c.l.b16 %v350
          %v887 = vunpack.c.l.b16 %v351
          %v888 = vunpack.c.l.b16 %v352
          %v889 = vunpack.c.l.b16 %v353
          %v890 = vunpack.c.l.b16 %v354
          %v891 = vunpack.c.l.b16 %v355
          %v892 = vunpack.c.l.b16 %v356
          %v893 = vunpack.c.l.b16 %v357
          %v894 = vunpack.c.l.b16 %v358
          %v895 = vunpack.c.l.b16 %v359
          %v896 = vunpack.c.l.b16 %v360
          %v897 = vunpack.c.l.b16 %v361
          %v898 = vunpack.c.l.b16 %v362
          %v899 = vunpack.c.l.b16 %v363
          %v900 = vunpack.c.l.b16 %v364
          %v901 = vunpack.c.l.b16 %v365
          %v902 = vunpack.c.l.b16 %v366
          %v903 = vunpack.c.l.b16 %v367
          %v904 = vunpack.c.l.b16 %v368
          %v905 = vunpack.c.l.b16 %v369
          %v906 = vunpack.c.l.b16 %v370
          %v907 = vunpack.c.l.b16 %v371
          %v908 = vunpack.c.l.b16 %v372
          %v909 = vunpack.c.l.b16 %v373
          %v910 = vunpack.c.l.b16 %v374
          %v911 = vunpack.c.l.b16 %v375
          %v912 = vunpack.c.l.b16 %v376
          %v913 = vunpack.c.l.b16 %v377
          %v914 = vunpack.c.l.b16 %v378
          %v915 = vunpack.c.l.b16 %v379
          %v916 = vunpack.c.l.b16 %v380
          %v917 = vunpack.c.l.b16 %v381
          %v918 = vunpack.c.l.b16 %v382
          %v919 = vunpack.c.l.b16 %v383
          %v920 = vunpack.c.l.b16 %v384
          %v921 = vunpack.c.l.b16 %v385
          %v922 = vunpack.c.l.b16 %v386
          %v923 = vunpack.c.l.b16 %v387
          %v924 = vunpack.c.l.b16 %v388
          %v925 = vunpack.c.l.b16 %v389
          %v926 = vunpack.c.l.b16 %v390
          %v927 = vunpack.c.l.b16 %v391
          %v928 = vunpack.c.l.b16 %v392
          %v929 = vunpack.c.l.b16 %v393
          %v930 = vunpack.c.l.b16 %v394
          %v931 = vunpack.c.l.b16 %v395
          %v932 = vunpack.c.l.b16 %v396
          %v933 = vunpack.c.l.b16 %v397
          %v934 = vunpack.c.l.b16 %v398
          %v935 = vunpack.c.l.b16 %v399
          %v936 = vunpack.c.l.b16 %v400
          %v937 = vunpack.c.l.b16 %v401
          %v938 = vunpack.c.l.b16 %v402
          %v939 = vunpack.c.l.b16 %v403
          %v940 = vunpack.c.l.b16 %v404
          %v941 = vunpack.c.l.b16 %v405
          %v942 = vunpack.c.l.b16 %v406
          %v943 = vunpack.c.l.b16 %v407
          %v944 = vunpack.c.l.b16 %v408
          %v945 = vunpack.c.l.b16 %v409
          %v946 = vunpack.c.l.b16 %v410
          %v947 = vunpack.c.l.b16 %v411
          %v948 = vunpack.c.l.b16 %v412
          %v949 = vunpack.c.l.b16 %v413
          %v950 = vunpack.c.l.b16 %v414
          %v951 = vunpack.c.l.b16 %v415
          %v952 = vunpack.c.l.b16 %v416
          %v953 = vunpack.c.l.b16 %v417
          %v954 = vunpack.c.l.b16 %v418
          %v955 = vunpack.c.l.b16 %v419
          %v956 = vunpack.c.l.b16 %v420
          %v957 = vunpack.c.l.b16 %v421
          %v958 = vunpack.c.l.b16 %v422
          %v959 = vunpack.c.l.b16 %v423
          %v960 = vunpack.c.l.b16 %v424
          %v961 = vunpack.c.l.b16 %v425
          %v962 = vunpack.c.l.b16 %v426
          %v963 = vunpack.c.l.b16 %v427
          %v964 = vunpack.c.l.b16 %v428
          %v965 = vunpack.c.l.b16 %v429
          %v966 = vunpack.c.l.b16 %v430
          %v967 = vunpack.c.l.b16 %v431
          %v968 = vunpack.c.l.b16 %v432
          %v969 = vunpack.c.l.b16 %v433
          %v970 = vunpack.c.l.b16 %v434
          %v971 = vunpack.c.l.b16 %v435
          %v972 = vunpack.c.l.b16 %v436
          %v973 = vunpack.c.l.b16 %v437
          %v974 = vunpack.c.l.b16 %v438
          %v975 = vunpack.c.l.b16 %v439
          %v976 = vunpack.c.l.b16 %v440
          %v977 = vpack.c.b16 %v850, %v849
          %v978 = vpack.c.b16 %v852, %v851
          %v979 = vpack.c.b16 %v854, %v853
          %v980 = vpack.c.b16 %v856, %v855
          %v981 = vpack.c.b16 %v858, %v857
          %v982 = vpack.c.b16 %v860, %v859
          %v983 = vpack.c.b16 %v862, %v861
          %v984 = vpack.c.b16 %v864, %v863
          %v985 = vpack.c.b16 %v866, %v865
          %v986 = vpack.c.b16 %v868, %v867
          %v987 = vpack.c.b16 %v870, %v869
          %v988 = vpack.c.b16 %v872, %v871
          %v989 = vpack.c.b16 %v874, %v873
          %v990 = vpack.c.b16 %v876, %v875
          %v991 = vpack.c.b16 %v878, %v877
          %v992 = vpack.c.b16 %v880, %v879
          %v993 = vpack.c.b16 %v882, %v881
          %v994 = vpack.c.b16 %v884, %v883
          %v995 = vpack.c.b16 %v886, %v885
          %v996 = vpack.c.b16 %v888, %v887
          %v997 = vpack.c.b16 %v890, %v889
          %v998 = vpack.c.b16 %v892, %v891
          %v999 = vpack.c.b16 %v894, %v893
          %v1000 = vpack.c.b16 %v896, %v895
          %v1001 = vpack.c.b16 %v898, %v897
          %v1002 = vpack.c.b16 %v900, %v899
          %v1003 = vpack.c.b16 %v902, %v901
          %v1004 = vpack.c.b16 %v904, %v903
          %v1005 = vpack.c.b16 %v906, %v905
          %v1006 = vpack.c.b16 %v908, %v907
          %v1007 = vpack.c.b16 %v910, %v909
          %v1008 = vpack.c.b16 %v912, %v911
          %v1009 = vpack.c.b16 %v914, %v913
          %v1010 = vpack.c.b16 %v916, %v915
          %v1011 = vpack.c.b16 %v918, %v917
          %v1012 = vpack.c.b16 %v920, %v919
          %v1013 = vpack.c.b16 %v922, %v921
          %v1014 = vpack.c.b16 %v924, %v923
          %v1015 = vpack.c.b16 %v926, %v925
          %v1016 = vpack.c.b16 %v928, %v927
          %v1017 = vpack.c.b16 %v930, %v929
          %v1018 = vpack.c.b16 %v932, %v931
          %v1019 = vpack.c.b16 %v934, %v933
          %v1020 = vpack.c.b16 %v936, %v935
          %v1021 = vpack.c.b16 %v938, %v937
          %v1022 = vpack.c.b16 %v940, %v939
          %v1023 = vpack.c.b16 %v942, %v941
          %v1024 = vpack.c.b16 %v944, %v943
          %v1025 = vpack.c.b16 %v946, %v945
          %v1026 = vpack.c.b16 %v948, %v947
          %v1027 = vpack.c.b16 %v950, %v949
          %v1028 = vpack.c.b16 %v952, %v951
          %v1029 = vpack.c.b16 %v954, %v953
          %v1030 = vpack.c.b16 %v956, %v955
          %v1031 = vpack.c.b16 %v958, %v957
          %v1032 = vpack.c.b16 %v960, %v959
          %v1033 = vpack.c.b16 %v962, %v961
          %v1034 = vpack.c.b16 %v964, %v963
          %v1035 = vpack.c.b16 %v966, %v965
          %v1036 = vpack.c.b16 %v968, %v967
          %v1037 = vpack.c.b16 %v970, %v969
          %v1038 = vpack.c.b16 %v972, %v971
          %v1039 = vpack.c.b16 %v974, %v973
          %v1040 = vpack.c.b16 %v976, %v975
          %1105 = vmatprep.subr.bf16.mxu0 0
          %1106 = vmatpush1.bf16.msra.mxu0 %v984
          %1107 = vmatprep.subr.bf16.mxu0 0
          %1108 = vmatpush1.bf16.msra.mxu0 %v983
          %1109 = vmatprep.subr.bf16.mxu0 0
          %1110 = vmatpush1.bf16.msra.mxu0 %v982
          %1111 = vmatprep.subr.bf16.mxu0 0
          %1112 = vmatpush1.bf16.msra.mxu0 %v981
          %1113 = vmatprep.subr.bf16.mxu0 0
          %1114 = vmatpush1.bf16.msra.mxu0 %v980
          %1115 = vmatprep.subr.bf16.mxu0 0
          %1116 = vmatpush1.bf16.msra.mxu0 %v979
          %1117 = vmatprep.subr.bf16.mxu0 0
          %1118 = vmatpush1.bf16.msra.mxu0 %v978
          %1119 = vmatprep.subr.bf16.mxu0 0
          %1120 = vmatpush1.bf16.msra.mxu0 %v977
          %1121 = vmatprep.subr.bf16.mxu0 0
          %1122 = vmatpush2.bf16.msra.mxu0 %v992
          %1123 = vmatprep.subr.bf16.mxu0 0
          %1124 = vmatpush2.bf16.msra.mxu0 %v991
          %1125 = vmatprep.subr.bf16.mxu0 0
          %1126 = vmatpush2.bf16.msra.mxu0 %v990
          %1127 = vmatprep.subr.bf16.mxu0 0
          %1128 = vmatpush2.bf16.msra.mxu0 %v989
          %1129 = vmatprep.subr.bf16.mxu0 0
          %1130 = vmatpush2.bf16.msra.mxu0 %v988
          %1131 = vmatprep.subr.bf16.mxu0 0
          %1132 = vmatpush2.bf16.msra.mxu0 %v987
          %1133 = vmatprep.subr.bf16.mxu0 0
          %1134 = vmatpush2.bf16.msra.mxu0 %v986
          %1135 = vmatprep.subr.bf16.mxu0 0
          %1136 = vmatpush2.bf16.msra.mxu0 %v985
          %1137 = vmatprep.mubr.bf16.mxu0 %v610
          %1138 = vmatmul.mubr.bf16.gmra.mxu0 %v609
          %v1139 = vpop.f32.mrf.mxu0
          %v1140 = vadd.f32 0.0, %v1139
          %v1141 = vpop.f32.mrf.mxu0
          %v1142 = vpop.f32.mrf.mxu0
          %v1143 = vadd.f32 0.0, %v1142
          %v1144 = vpop.f32.mrf.mxu0
          %1145 = vmatprep.mubr.bf16.mxu0 %v618
          %1146 = vmatmul.mubr.bf16.gmra.mxu0 %v617
          %v1147 = vpop.f32.mrf.mxu0
          %v1148 = vadd.f32 0.0, %v1147
          %v1149 = vpop.f32.mrf.mxu0
          %v1150 = vpop.f32.mrf.mxu0
          %v1151 = vadd.f32 0.0, %v1150
          %v1152 = vpop.f32.mrf.mxu0
          %1153 = vmatprep.mubr.bf16.mxu0 %v626
          %1154 = vmatmul.mubr.bf16.gmra.mxu0 %v625
          %v1155 = vpop.f32.mrf.mxu0
          %v1156 = vadd.f32 0.0, %v1155
          %v1157 = vpop.f32.mrf.mxu0
          %v1158 = vpop.f32.mrf.mxu0
          %v1159 = vadd.f32 0.0, %v1158
          %v1160 = vpop.f32.mrf.mxu0
          %1161 = vmatprep.mubr.bf16.mxu0 %v634
          %1162 = vmatmul.mubr.bf16.gmra.mxu0 %v633
          %v1163 = vpop.f32.mrf.mxu0
          %v1164 = vadd.f32 0.0, %v1163
          %v1165 = vpop.f32.mrf.mxu0
          %v1166 = vpop.f32.mrf.mxu0
          %v1167 = vadd.f32 0.0, %v1166
          %v1168 = vpop.f32.mrf.mxu0
          %1169 = vmatprep.mubr.bf16.mxu0 %v642
          %1170 = vmatmul.mubr.bf16.gmra.mxu0 %v641
          %v1171 = vpop.f32.mrf.mxu0
          %v1172 = vadd.f32 0.0, %v1171
          %v1173 = vpop.f32.mrf.mxu0
          %v1174 = vpop.f32.mrf.mxu0
          %v1175 = vadd.f32 0.0, %v1174
          %v1176 = vpop.f32.mrf.mxu0
          %1177 = vmatprep.mubr.bf16.mxu0 %v650
          %1178 = vmatmul.mubr.bf16.gmra.mxu0 %v649
          %v1179 = vpop.f32.mrf.mxu0
          %v1180 = vadd.f32 0.0, %v1179
          %v1181 = vpop.f32.mrf.mxu0
          %v1182 = vpop.f32.mrf.mxu0
          %v1183 = vadd.f32 0.0, %v1182
          %v1184 = vpop.f32.mrf.mxu0
          %1185 = vmatprep.mubr.bf16.mxu0 %v658
          %1186 = vmatmul.mubr.bf16.gmra.mxu0 %v657
          %v1187 = vpop.f32.mrf.mxu0
          %v1188 = vadd.f32 0.0, %v1187
          %v1189 = vpop.f32.mrf.mxu0
          %v1190 = vpop.f32.mrf.mxu0
          %v1191 = vadd.f32 0.0, %v1190
          %v1192 = vpop.f32.mrf.mxu0
          %1193 = vdwg.mxu0
          %1194 = vmatprep.subr.bf16.mxu0 0
          %1195 = vmatpush1.bf16.msra.mxu0 %v1000
          %1196 = vmatprep.subr.bf16.mxu0 0
          %1197 = vmatpush1.bf16.msra.mxu0 %v999
          %1198 = vmatprep.subr.bf16.mxu0 0
          %1199 = vmatpush1.bf16.msra.mxu0 %v998
          %1200 = vmatprep.subr.bf16.mxu0 0
          %1201 = vmatpush1.bf16.msra.mxu0 %v997
          %1202 = vmatprep.subr.bf16.mxu0 0
          %1203 = vmatpush1.bf16.msra.mxu0 %v996
          %1204 = vmatprep.subr.bf16.mxu0 0
          %1205 = vmatpush1.bf16.msra.mxu0 %v995
          %1206 = vmatprep.subr.bf16.mxu0 0
          %1207 = vmatpush1.bf16.msra.mxu0 %v994
          %1208 = vmatprep.subr.bf16.mxu0 0
          %1209 = vmatpush1.bf16.msra.mxu0 %v993
          %1210 = vmatprep.subr.bf16.mxu0 0
          %1211 = vmatpush2.bf16.msra.mxu0 %v1008
          %1212 = vmatprep.subr.bf16.mxu0 0
          %1213 = vmatpush2.bf16.msra.mxu0 %v1007
          %1214 = vmatprep.subr.bf16.mxu0 0
          %1215 = vmatpush2.bf16.msra.mxu0 %v1006
          %1216 = vmatprep.subr.bf16.mxu0 0
          %1217 = vmatpush2.bf16.msra.mxu0 %v1005
          %1218 = vmatprep.subr.bf16.mxu0 0
          %1219 = vmatpush2.bf16.msra.mxu0 %v1004
          %1220 = vmatprep.subr.bf16.mxu0 0
          %1221 = vmatpush2.bf16.msra.mxu0 %v1003
          %1222 = vmatprep.subr.bf16.mxu0 0
          %1223 = vmatpush2.bf16.msra.mxu0 %v1002
          %1224 = vmatprep.subr.bf16.mxu0 0
          %1225 = vmatpush2.bf16.msra.mxu0 %v1001
          %1226 = vmatprep.mubr.bf16.mxu0 %v612
          %1227 = vmatmul.mubr.bf16.gmra.mxu0 %v611
          %v1228 = vpop.f32.mrf.mxu0
          %v1229 = vadd.f32 %v1140, %v1228
          %v1230 = vpop.f32.mrf.mxu0
          %v1231 = vpop.f32.mrf.mxu0
          %v1232 = vadd.f32 %v1143, %v1231
          %v1233 = vpop.f32.mrf.mxu0
          %1234 = vmatprep.mubr.bf16.mxu0 %v620
          %1235 = vmatmul.mubr.bf16.gmra.mxu0 %v619
          %v1236 = vpop.f32.mrf.mxu0
          %v1237 = vadd.f32 %v1148, %v1236
          %v1238 = vpop.f32.mrf.mxu0
          %v1239 = vpop.f32.mrf.mxu0
          %v1240 = vadd.f32 %v1151, %v1239
          %v1241 = vpop.f32.mrf.mxu0
          %1242 = vmatprep.mubr.bf16.mxu0 %v628
          %1243 = vmatmul.mubr.bf16.gmra.mxu0 %v627
          %v1244 = vpop.f32.mrf.mxu0
          %v1245 = vadd.f32 %v1156, %v1244
          %v1246 = vpop.f32.mrf.mxu0
          %v1247 = vpop.f32.mrf.mxu0
          %v1248 = vadd.f32 %v1159, %v1247
          %v1249 = vpop.f32.mrf.mxu0
          %1250 = vmatprep.mubr.bf16.mxu0 %v636
          %1251 = vmatmul.mubr.bf16.gmra.mxu0 %v635
          %v1252 = vpop.f32.mrf.mxu0
          %v1253 = vadd.f32 %v1164, %v1252
          %v1254 = vpop.f32.mrf.mxu0
          %v1255 = vpop.f32.mrf.mxu0
          %v1256 = vadd.f32 %v1167, %v1255
          %v1257 = vpop.f32.mrf.mxu0
          %1258 = vmatprep.mubr.bf16.mxu0 %v644
          %1259 = vmatmul.mubr.bf16.gmra.mxu0 %v643
          %v1260 = vpop.f32.mrf.mxu0
          %v1261 = vadd.f32 %v1172, %v1260
          %v1262 = vpop.f32.mrf.mxu0
          %v1263 = vpop.f32.mrf.mxu0
          %v1264 = vadd.f32 %v1175, %v1263
          %v1265 = vpop.f32.mrf.mxu0
          %1266 = vmatprep.mubr.bf16.mxu0 %v652
          %1267 = vmatmul.mubr.bf16.gmra.mxu0 %v651
          %v1268 = vpop.f32.mrf.mxu0
          %v1269 = vadd.f32 %v1180, %v1268
          %v1270 = vpop.f32.mrf.mxu0
          %v1271 = vpop.f32.mrf.mxu0
          %v1272 = vadd.f32 %v1183, %v1271
          %v1273 = vpop.f32.mrf.mxu0
          %1274 = vmatprep.mubr.bf16.mxu0 %v660
          %1275 = vmatmul.mubr.bf16.gmra.mxu0 %v659
          %v1276 = vpop.f32.mrf.mxu0
          %v1277 = vadd.f32 %v1188, %v1276
          %v1278 = vpop.f32.mrf.mxu0
          %v1279 = vpop.f32.mrf.mxu0
          %v1280 = vadd.f32 %v1191, %v1279
          %v1281 = vpop.f32.mrf.mxu0
          %1282 = vdwg.mxu0
          %1283 = vmatprep.subr.bf16.mxu0 0
          %1284 = vmatpush1.bf16.msra.mxu0 %v1016
          %1285 = vmatprep.subr.bf16.mxu0 0
          %1286 = vmatpush1.bf16.msra.mxu0 %v1015
          %1287 = vmatprep.subr.bf16.mxu0 0
          %1288 = vmatpush1.bf16.msra.mxu0 %v1014
          %1289 = vmatprep.subr.bf16.mxu0 0
          %1290 = vmatpush1.bf16.msra.mxu0 %v1013
          %1291 = vmatprep.subr.bf16.mxu0 0
          %1292 = vmatpush1.bf16.msra.mxu0 %v1012
          %1293 = vmatprep.subr.bf16.mxu0 0
          %1294 = vmatpush1.bf16.msra.mxu0 %v1011
          %1295 = vmatprep.subr.bf16.mxu0 0
          %1296 = vmatpush1.bf16.msra.mxu0 %v1010
          %1297 = vmatprep.subr.bf16.mxu0 0
          %1298 = vmatpush1.bf16.msra.mxu0 %v1009
          %1299 = vmatprep.subr.bf16.mxu0 0
          %1300 = vmatpush2.bf16.msra.mxu0 %v1024
          %1301 = vmatprep.subr.bf16.mxu0 0
          %1302 = vmatpush2.bf16.msra.mxu0 %v1023
          %1303 = vmatprep.subr.bf16.mxu0 0
          %1304 = vmatpush2.bf16.msra.mxu0 %v1022
          %1305 = vmatprep.subr.bf16.mxu0 0
          %1306 = vmatpush2.bf16.msra.mxu0 %v1021
          %1307 = vmatprep.subr.bf16.mxu0 0
          %1308 = vmatpush2.bf16.msra.mxu0 %v1020
          %1309 = vmatprep.subr.bf16.mxu0 0
          %1310 = vmatpush2.bf16.msra.mxu0 %v1019
          %1311 = vmatprep.subr.bf16.mxu0 0
          %1312 = vmatpush2.bf16.msra.mxu0 %v1018
          %1313 = vmatprep.subr.bf16.mxu0 0
          %1314 = vmatpush2.bf16.msra.mxu0 %v1017
          %1315 = vmatprep.mubr.bf16.mxu0 %v614
          %1316 = vmatmul.mubr.bf16.gmra.mxu0 %v613
          %v1317 = vpop.f32.mrf.mxu0
          %v1318 = vadd.f32 %v1229, %v1317
          %v1319 = vpop.f32.mrf.mxu0
          %v1320 = vpop.f32.mrf.mxu0
          %v1321 = vadd.f32 %v1232, %v1320
          %v1322 = vpop.f32.mrf.mxu0
          %1323 = vmatprep.mubr.bf16.mxu0 %v622
          %1324 = vmatmul.mubr.bf16.gmra.mxu0 %v621
          %v1325 = vpop.f32.mrf.mxu0
          %v1326 = vadd.f32 %v1237, %v1325
          %v1327 = vpop.f32.mrf.mxu0
          %v1328 = vpop.f32.mrf.mxu0
          %v1329 = vadd.f32 %v1240, %v1328
          %v1330 = vpop.f32.mrf.mxu0
          %1331 = vmatprep.mubr.bf16.mxu0 %v630
          %1332 = vmatmul.mubr.bf16.gmra.mxu0 %v629
          %v1333 = vpop.f32.mrf.mxu0
          %v1334 = vadd.f32 %v1245, %v1333
          %v1335 = vpop.f32.mrf.mxu0
          %v1336 = vpop.f32.mrf.mxu0
          %v1337 = vadd.f32 %v1248, %v1336
          %v1338 = vpop.f32.mrf.mxu0
          %1339 = vmatprep.mubr.bf16.mxu0 %v638
          %1340 = vmatmul.mubr.bf16.gmra.mxu0 %v637
          %v1341 = vpop.f32.mrf.mxu0
          %v1342 = vadd.f32 %v1253, %v1341
          %v1343 = vpop.f32.mrf.mxu0
          %v1344 = vpop.f32.mrf.mxu0
          %v1345 = vadd.f32 %v1256, %v1344
          %v1346 = vpop.f32.mrf.mxu0
          %1347 = vmatprep.mubr.bf16.mxu0 %v646
          %1348 = vmatmul.mubr.bf16.gmra.mxu0 %v645
          %v1349 = vpop.f32.mrf.mxu0
          %v1350 = vadd.f32 %v1261, %v1349
          %v1351 = vpop.f32.mrf.mxu0
          %v1352 = vpop.f32.mrf.mxu0
          %v1353 = vadd.f32 %v1264, %v1352
          %v1354 = vpop.f32.mrf.mxu0
          %1355 = vmatprep.mubr.bf16.mxu0 %v654
          %1356 = vmatmul.mubr.bf16.gmra.mxu0 %v653
          %v1357 = vpop.f32.mrf.mxu0
          %v1358 = vadd.f32 %v1269, %v1357
          %v1359 = vpop.f32.mrf.mxu0
          %v1360 = vpop.f32.mrf.mxu0
          %v1361 = vadd.f32 %v1272, %v1360
          %v1362 = vpop.f32.mrf.mxu0
          %1363 = vmatprep.mubr.bf16.mxu0 %v662
          %1364 = vmatmul.mubr.bf16.gmra.mxu0 %v661
          %v1365 = vpop.f32.mrf.mxu0
          %v1366 = vadd.f32 %v1277, %v1365
          %v1367 = vpop.f32.mrf.mxu0
          %v1368 = vpop.f32.mrf.mxu0
          %v1369 = vadd.f32 %v1280, %v1368
          %v1370 = vpop.f32.mrf.mxu0
          %1371 = vdwg.mxu0
          %1372 = vmatprep.subr.bf16.mxu0 0
          %1373 = vmatpush1.bf16.msra.mxu0 %v1032
          %1374 = vmatprep.subr.bf16.mxu0 0
          %1375 = vmatpush1.bf16.msra.mxu0 %v1031
          %1376 = vmatprep.subr.bf16.mxu0 0
          %1377 = vmatpush1.bf16.msra.mxu0 %v1030
          %1378 = vmatprep.subr.bf16.mxu0 0
          %1379 = vmatpush1.bf16.msra.mxu0 %v1029
          %1380 = vmatprep.subr.bf16.mxu0 0
          %1381 = vmatpush1.bf16.msra.mxu0 %v1028
          %1382 = vmatprep.subr.bf16.mxu0 0
          %1383 = vmatpush1.bf16.msra.mxu0 %v1027
          %1384 = vmatprep.subr.bf16.mxu0 0
          %1385 = vmatpush1.bf16.msra.mxu0 %v1026
          %1386 = vmatprep.subr.bf16.mxu0 0
          %1387 = vmatpush1.bf16.msra.mxu0 %v1025
          %1388 = vmatprep.subr.bf16.mxu0 0
          %1389 = vmatpush2.bf16.msra.mxu0 %v1040
          %1390 = vmatprep.subr.bf16.mxu0 0
          %1391 = vmatpush2.bf16.msra.mxu0 %v1039
          %1392 = vmatprep.subr.bf16.mxu0 0
          %1393 = vmatpush2.bf16.msra.mxu0 %v1038
          %1394 = vmatprep.subr.bf16.mxu0 0
          %1395 = vmatpush2.bf16.msra.mxu0 %v1037
          %1396 = vmatprep.subr.bf16.mxu0 0
          %1397 = vmatpush2.bf16.msra.mxu0 %v1036
          %1398 = vmatprep.subr.bf16.mxu0 0
          %1399 = vmatpush2.bf16.msra.mxu0 %v1035
          %1400 = vmatprep.subr.bf16.mxu0 0
          %1401 = vmatpush2.bf16.msra.mxu0 %v1034
          %1402 = vmatprep.subr.bf16.mxu0 0
          %1403 = vmatpush2.bf16.msra.mxu0 %v1033
          %1404 = vmatprep.mubr.bf16.mxu0 %v616
          %1405 = vmatmul.mubr.bf16.gmra.mxu0 %v615
          %v1406 = vpop.f32.mrf.mxu0
          %v1407 = vadd.f32 %v1318, %v1406
          %v1408 = vpop.f32.mrf.mxu0
          %v1409 = vpop.f32.mrf.mxu0
          %v1410 = vadd.f32 %v1321, %v1409
          %v1411 = vpop.f32.mrf.mxu0
          %1412 = vmatprep.mubr.bf16.mxu0 %v624
          %1413 = vmatmul.mubr.bf16.gmra.mxu0 %v623
          %v1414 = vpop.f32.mrf.mxu0
          %v1415 = vadd.f32 %v1326, %v1414
          %v1416 = vpop.f32.mrf.mxu0
          %v1417 = vpop.f32.mrf.mxu0
          %v1418 = vadd.f32 %v1329, %v1417
          %v1419 = vpop.f32.mrf.mxu0
          %1420 = vmatprep.mubr.bf16.mxu0 %v632
          %1421 = vmatmul.mubr.bf16.gmra.mxu0 %v631
          %v1422 = vpop.f32.mrf.mxu0
          %v1423 = vadd.f32 %v1334, %v1422
          %v1424 = vpop.f32.mrf.mxu0
          %v1425 = vpop.f32.mrf.mxu0
          %v1426 = vadd.f32 %v1337, %v1425
          %v1427 = vpop.f32.mrf.mxu0
          %1428 = vmatprep.mubr.bf16.mxu0 %v640
          %1429 = vmatmul.mubr.bf16.gmra.mxu0 %v639
          %v1430 = vpop.f32.mrf.mxu0
          %v1431 = vadd.f32 %v1342, %v1430
          %v1432 = vpop.f32.mrf.mxu0
          %v1433 = vpop.f32.mrf.mxu0
          %v1434 = vadd.f32 %v1345, %v1433
          %v1435 = vpop.f32.mrf.mxu0
          %1436 = vmatprep.mubr.bf16.mxu0 %v648
          %1437 = vmatmul.mubr.bf16.gmra.mxu0 %v647
          %v1438 = vpop.f32.mrf.mxu0
          %v1439 = vadd.f32 %v1350, %v1438
          %v1440 = vpop.f32.mrf.mxu0
          %v1441 = vpop.f32.mrf.mxu0
          %v1442 = vadd.f32 %v1353, %v1441
          %v1443 = vpop.f32.mrf.mxu0
          %1444 = vmatprep.mubr.bf16.mxu0 %v656
          %1445 = vmatmul.mubr.bf16.gmra.mxu0 %v655
          %v1446 = vpop.f32.mrf.mxu0
          %v1447 = vadd.f32 %v1358, %v1446
          %v1448 = vpop.f32.mrf.mxu0
          %v1449 = vpop.f32.mrf.mxu0
          %v1450 = vadd.f32 %v1361, %v1449
          %v1451 = vpop.f32.mrf.mxu0
          %1452 = vmatprep.mubr.bf16.mxu0 %v664
          %1453 = vmatmul.mubr.bf16.gmra.mxu0 %v663
          %v1454 = vpop.f32.mrf.mxu0
          %v1455 = vadd.f32 %v1366, %v1454
          %v1456 = vpop.f32.mrf.mxu0
          %v1457 = vpop.f32.mrf.mxu0
          %v1458 = vadd.f32 %v1369, %v1457
          %v1459 = vpop.f32.mrf.mxu0
          %1460 = vdwg.mxu0
          %v1461 = vlaneseq
          %v1462 = vshrl.u32 %v1461, 7
          %v1463 = vadd.s32 %v1462, 8
          %v1464 = vadd.s32 %v1462, 16
          %v1465 = vadd.s32 %v1462, 24
          %v1466 = vadd.s32 %v1462, 32
          %v1467 = vadd.s32 %v1462, 40
          %v1468 = vadd.s32 %v1462, 48
          %v1469 = vadd.s32 %v1462, 56
          %v1470 = vadd.s32 %v1462, 64
          %v1471 = vadd.s32 %v1462, 72
          %v1472 = vadd.s32 %v1462, 80
          %v1473 = vadd.s32 %v1462, 88
          %v1474 = vadd.s32 %v1462, 96
          %v1475 = vadd.s32 %v1462, 104
          %v1476 = vstv %s245
          %v1477 = vadd.s32 %v1476, %v1462
          %v1478 = vadd.s32 %v1476, %v1463
          %v1479 = vadd.s32 %v1476, %v1464
          %v1480 = vadd.s32 %v1476, %v1465
          %v1481 = vadd.s32 %v1476, %v1466
          %v1482 = vadd.s32 %v1476, %v1467
          %v1483 = vadd.s32 %v1476, %v1468
          %v1484 = vadd.s32 %v1476, %v1469
          %v1485 = vadd.s32 %v1476, %v1470
          %v1486 = vadd.s32 %v1476, %v1471
          %v1487 = vadd.s32 %v1476, %v1472
          %v1488 = vadd.s32 %v1476, %v1473
          %v1489 = vadd.s32 %v1476, %v1474
          %v1490 = vadd.s32 %v1476, %v1475
          %vm1491 = vcmp.lt.s32.totalorder %v1477, 100
          %vm1492 = vcmp.lt.s32.totalorder %v1478, 100
          %vm1493 = vcmp.lt.s32.totalorder %v1479, 100
          %vm1494 = vcmp.lt.s32.totalorder %v1480, 100
          %vm1495 = vcmp.lt.s32.totalorder %v1481, 100
          %vm1496 = vcmp.lt.s32.totalorder %v1482, 100
          %vm1497 = vcmp.lt.s32.totalorder %v1483, 100
          %vm1498 = vcmp.lt.s32.totalorder %v1484, 100
          %vm1499 = vcmp.lt.s32.totalorder %v1485, 100
          %vm1500 = vcmp.lt.s32.totalorder %v1486, 100
          %vm1501 = vcmp.lt.s32.totalorder %v1487, 100
          %vm1502 = vcmp.lt.s32.totalorder %v1488, 100
          %vm1503 = vcmp.lt.s32.totalorder %v1489, 100
          %vm1504 = vcmp.lt.s32.totalorder %v1490, 100
          %v1505 = vsel %vm1491, %v1407, 0.0
          %v1506 = vsel %vm1492, %v1410, 0.0
          %v1507 = vsel %vm1493, %v1415, 0.0
          %v1508 = vsel %vm1494, %v1418, 0.0
          %v1509 = vsel %vm1495, %v1423, 0.0
          %v1510 = vsel %vm1496, %v1426, 0.0
          %v1511 = vsel %vm1497, %v1431, 0.0
          %v1512 = vsel %vm1498, %v1434, 0.0
          %v1513 = vsel %vm1499, %v1439, 0.0
          %v1514 = vsel %vm1500, %v1442, 0.0
          %v1515 = vsel %vm1501, %v1447, 0.0
          %v1516 = vsel %vm1502, %v1450, 0.0
          %v1517 = vsel %vm1503, %v1455, 0.0
          %v1518 = vsel %vm1504, %v1458, 0.0
          %s1519 = scalar_lea.vmem [#allocation2], %s245
          %1520 = vst [vmem:[%s1519] sm:$0xff] %v1505
          %1521 = vst [vmem:[%s1519 + $0x8] sm:$0xff] %v1506
          %1522 = vst [vmem:[%s1519 + $0x10] sm:$0xff] %v1507
          %1523 = vst [vmem:[%s1519 + $0x18] sm:$0xff] %v1508
          %1524 = vst [vmem:[%s1519 + $0x20] sm:$0xff] %v1509
          %1525 = vst [vmem:[%s1519 + $0x28] sm:$0xff] %v1510
          %1526 = vst [vmem:[%s1519 + $0x30] sm:$0xff] %v1511
          %1527 = vst [vmem:[%s1519 + $0x38] sm:$0xff] %v1512
          %1528 = vst [vmem:[%s1519 + $0x40] sm:$0xff] %v1513
          %1529 = vst [vmem:[%s1519 + $0x48] sm:$0xff] %v1514
          %1530 = vst [vmem:[%s1519 + $0x50] sm:$0xff] %v1515
          %1531 = vst [vmem:[%s1519 + $0x58] sm:$0xff] %v1516
          %1532 = vst [vmem:[%s1519 + $0x60] sm:$0xff] %v1517
          %1533 = vst [vmem:[%s1519 + $0x68] sm:$0xff] %v1518
          %v1534 = vld [vmem:[#allocation3] sm:$0x1]
          %v1535 = vadd.f32 %v1505, %v1506
          %v1536 = vadd.f32 %v1535, %v1507
          %v1537 = vadd.f32 %v1536, %v1508
          %v1538 = vadd.f32 %v1537, %v1509
          %v1539 = vadd.f32 %v1538, %v1510
          %v1540 = vadd.f32 %v1539, %v1511
          %v1541 = vadd.f32 %v1540, %v1512
          %v1542 = vadd.f32 %v1541, %v1513
          %v1543 = vadd.f32 %v1542, %v1514
          %v1544 = vadd.f32 %v1543, %v1515
          %v1545 = vadd.f32 %v1544, %v1516
          %v1546 = vadd.f32 %v1545, %v1517
          %v1547 = vadd.f32 %v1546, %v1518
          %v1548 = vrot.slane %v1547, 4
          %v1549 = vadd.f32 %v1547, %v1548
          %v1550 = vrot.slane %v1549, 2
          %v1551 = vadd.f32 %v1549, %v1550
          %v1552 = vrot.slane %v1551, 1
          %v1553 = vadd.f32 %v1551, %v1552
          %v1554 = vadd.f32 %v1534, %v1553
          %1555 = vst [vmem:[#allocation3] sm:$0x1] %v1554
          %v1556 = vld [vmem:[#allocation4] sm:$0x1]
          %v1557 = vmul.f32 %v1505, %v1505
          %v1558 = vmul.f32 %v1506, %v1506
          %v1559 = vmul.f32 %v1507, %v1507
          %v1560 = vmul.f32 %v1508, %v1508
          %v1561 = vmul.f32 %v1509, %v1509
          %v1562 = vmul.f32 %v1510, %v1510
          %v1563 = vmul.f32 %v1511, %v1511
          %v1564 = vmul.f32 %v1512, %v1512
          %v1565 = vmul.f32 %v1513, %v1513
          %v1566 = vmul.f32 %v1514, %v1514
          %v1567 = vmul.f32 %v1515, %v1515
          %v1568 = vmul.f32 %v1516, %v1516
          %v1569 = vmul.f32 %v1517, %v1517
          %v1570 = vmul.f32 %v1518, %v1518
          %v1571 = vadd.f32 %v1557, %v1558
          %v1572 = vadd.f32 %v1571, %v1559
          %v1573 = vadd.f32 %v1572, %v1560
          %v1574 = vadd.f32 %v1573, %v1561
          %v1575 = vadd.f32 %v1574, %v1562
          %v1576 = vadd.f32 %v1575, %v1563
          %v1577 = vadd.f32 %v1576, %v1564
          %v1578 = vadd.f32 %v1577, %v1565
          %v1579 = vadd.f32 %v1578, %v1566
          %v1580 = vadd.f32 %v1579, %v1567
          %v1581 = vadd.f32 %v1580, %v1568
          %v1582 = vadd.f32 %v1581, %v1569
          %v1583 = vadd.f32 %v1582, %v1570
          %v1584 = vrot.slane %v1583, 4
          %v1585 = vadd.f32 %v1583, %v1584
          %v1586 = vrot.slane %v1585, 2
          %v1587 = vadd.f32 %v1585, %v1586
          %v1588 = vrot.slane %v1587, 1
          %v1589 = vadd.f32 %v1587, %v1588
          %v1590 = vadd.f32 %v1556, %v1589
          %1591 = vst [vmem:[#allocation4] sm:$0x1] %v1590
        $region44: #{discriminator2d_forward.4} parent=35 // pred_fallthru
          _
        %p1592 = scmp.eq.s32.totalorder %s19, 1
        %p1593 = pnand %p1592, %p247
        %p1594 = pneg %p1593
        // Predicated region
        $region45: #{discriminator2d_forward.4} parent=35 // pred_check
          _
        $region46: #{discriminator2d_forward.4} parent=35 // pred_check_branch
          %1596 = sbr.rel (%p1593) target = $region48
        $region47: #{discriminator2d_forward.4} parent=35 // pred_region
          %v1597 = vld [vmem:[#allocation3] sm:$0x1]
          %v1598 = vmul.f32 %v1597, 0.01
          %v1599 = vld [vmem:[#allocation4] sm:$0x1]
          %v1600 = vmul.f32 %v1599, 0.01
          %v1601 = vmul.f32 %v1598, %v1598
          %v1602 = vsub.f32 %v1600, %v1601
          %v1603 = vmax.f32 %v1602, 0.0
          %v1604 = vld [vmem:[%s2] sm:$0x1]
          %v1605 = vadd.f32 %v1603, 1e-05
          %v1606 = vrsqrt.pop %v1605
          %v1607 = vmul.f32 %v1604, %v1606
          %1608 = vst [vmem:[#allocation5] sm:$0x1] %v1607
          %v1609 = vld [vmem:[%s3] sm:$0x1]
          %v1610 = vmul.f32 %v1598, %v1607
          %v1611 = vsub.f32 %v1609, %v1610
          %1612 = vst [vmem:[#allocation6] sm:$0x1] %v1611
        $region48: #{discriminator2d_forward.4} parent=35 // pred_fallthru
          _
        // Predicated region
        $region49: #{discriminator2d_forward.4} parent=35 // pred_check
          %p1613 = pneg %p1592
        $region50: #{discriminator2d_forward.4} parent=35 // pred_check_branch
          %1615 = sbr.rel (%p1613) target = $region52
        $region51: #{discriminator2d_forward.4} parent=35 // pred_region
          %s1616 = scalar_lea.vmem [#allocation2], %s245
          %v1617 = vld [vmem:[%s1616] sm:$0xff]
          %v1618 = vld [vmem:[%s1616 + $0x8] sm:$0xff]
          %v1619 = vld [vmem:[%s1616 + $0x10] sm:$0xff]
          %v1620 = vld [vmem:[%s1616 + $0x18] sm:$0xff]
          %v1621 = vld [vmem:[%s1616 + $0x20] sm:$0xff]
          %v1622 = vld [vmem:[%s1616 + $0x28] sm:$0xff]
          %v1623 = vld [vmem:[%s1616 + $0x30] sm:$0xff]
          %v1624 = vld [vmem:[%s1616 + $0x38] sm:$0xff]
          %v1625 = vld [vmem:[%s1616 + $0x40] sm:$0xff]
          %v1626 = vld [vmem:[%s1616 + $0x48] sm:$0xff]
          %v1627 = vld [vmem:[%s1616 + $0x50] sm:$0xff]
          %v1628 = vld [vmem:[%s1616 + $0x58] sm:$0xff]
          %v1629 = vld [vmem:[%s1616 + $0x60] sm:$0xff]
          %v1630 = vld [vmem:[%s1616 + $0x68] sm:$0xff]
          %v1631 = vld [vmem:[#allocation5] sm:$0x1]
          %v1633 = vlaneseq
          %v1634 = vshrl.u32 %v1633, 7
          %v1635 = vsub.s32 0, %v1634
          %v1636 = vrot.slane %v1631, %v1635
          %v1638 = vmul.f32 %v1617, %v1636
          %v1639 = vmul.f32 %v1618, %v1636
          %v1640 = vmul.f32 %v1619, %v1636
          %v1641 = vmul.f32 %v1620, %v1636
          %v1642 = vmul.f32 %v1621, %v1636
          %v1643 = vmul.f32 %v1622, %v1636
          %v1644 = vmul.f32 %v1623, %v1636
          %v1645 = vmul.f32 %v1624, %v1636
          %v1646 = vmul.f32 %v1625, %v1636
          %v1647 = vmul.f32 %v1626, %v1636
          %v1648 = vmul.f32 %v1627, %v1636
          %v1649 = vmul.f32 %v1628, %v1636
          %v1650 = vmul.f32 %v1629, %v1636
          %v1651 = vmul.f32 %v1630, %v1636
          %v1652 = vld [vmem:[#allocation6] sm:$0x1]
          %v1654 = vlaneseq
          %v1655 = vshrl.u32 %v1654, 7
          %v1656 = vsub.s32 0, %v1655
          %v1657 = vrot.slane %v1652, %v1656
          %v1659 = vadd.f32 %v1638, %v1657
          %v1660 = vadd.f32 %v1639, %v1657
          %v1661 = vadd.f32 %v1640, %v1657
          %v1662 = vadd.f32 %v1641, %v1657
          %v1663 = vadd.f32 %v1642, %v1657
          %v1664 = vadd.f32 %v1643, %v1657
          %v1665 = vadd.f32 %v1644, %v1657
          %v1666 = vadd.f32 %v1645, %v1657
          %v1667 = vadd.f32 %v1646, %v1657
          %v1668 = vadd.f32 %v1647, %v1657
          %v1669 = vadd.f32 %v1648, %v1657
          %v1670 = vadd.f32 %v1649, %v1657
          %v1671 = vadd.f32 %v1650, %v1657
          %v1672 = vadd.f32 %v1651, %v1657
          %vm1673 = vcmp.gt.f32.partialorder %v1659, 0.0
          %vm1674 = vcmp.gt.f32.partialorder %v1660, 0.0
          %vm1675 = vcmp.gt.f32.partialorder %v1661, 0.0
          %vm1676 = vcmp.gt.f32.partialorder %v1662, 0.0
          %vm1677 = vcmp.gt.f32.partialorder %v1663, 0.0
          %vm1678 = vcmp.gt.f32.partialorder %v1664, 0.0
          %vm1679 = vcmp.gt.f32.partialorder %v1665, 0.0
          %vm1680 = vcmp.gt.f32.partialorder %v1666, 0.0
          %vm1681 = vcmp.gt.f32.partialorder %v1667, 0.0
          %vm1682 = vcmp.gt.f32.partialorder %v1668, 0.0
          %vm1683 = vcmp.gt.f32.partialorder %v1669, 0.0
          %vm1684 = vcmp.gt.f32.partialorder %v1670, 0.0
          %vm1685 = vcmp.gt.f32.partialorder %v1671, 0.0
          %vm1686 = vcmp.gt.f32.partialorder %v1672, 0.0
          %v1687 = vmul.f32 %v1659, 0.2
          %v1688 = vmul.f32 %v1660, 0.2
          %v1689 = vmul.f32 %v1661, 0.2
          %v1690 = vmul.f32 %v1662, 0.2
          %v1691 = vmul.f32 %v1663, 0.2
          %v1692 = vmul.f32 %v1664, 0.2
          %v1693 = vmul.f32 %v1665, 0.2
          %v1694 = vmul.f32 %v1666, 0.2
          %v1695 = vmul.f32 %v1667, 0.2
          %v1696 = vmul.f32 %v1668, 0.2
          %v1697 = vmul.f32 %v1669, 0.2
          %v1698 = vmul.f32 %v1670, 0.2
          %v1699 = vmul.f32 %v1671, 0.2
          %v1700 = vmul.f32 %v1672, 0.2
          %v1701 = vsel %vm1673, %v1659, %v1687
          %v1702 = vsel %vm1674, %v1660, %v1688
          %v1703 = vsel %vm1675, %v1661, %v1689
          %v1704 = vsel %vm1676, %v1662, %v1690
          %v1705 = vsel %vm1677, %v1663, %v1691
          %v1706 = vsel %vm1678, %v1664, %v1692
          %v1707 = vsel %vm1679, %v1665, %v1693
          %v1708 = vsel %vm1680, %v1666, %v1694
          %v1709 = vsel %vm1681, %v1667, %v1695
          %v1710 = vsel %vm1682, %v1668, %v1696
          %v1711 = vsel %vm1683, %v1669, %v1697
          %v1712 = vsel %vm1684, %v1670, %v1698
          %v1713 = vsel %vm1685, %v1671, %v1699
          %v1714 = vsel %vm1686, %v1672, %v1700
          %v1715 = vpack.c.bf16 %v1702, %v1701
          %v1716 = vpack.c.bf16 %v1704, %v1703
          %v1717 = vpack.c.bf16 %v1706, %v1705
          %v1718 = vpack.c.bf16 %v1708, %v1707
          %v1719 = vpack.c.bf16 %v1710, %v1709
          %v1720 = vpack.c.bf16 %v1712, %v1711
          %v1721 = vpack.c.bf16 %v1714, %v1713
          %v1729 = vunpack.c.l.b16 %v1715
          %v1730 = vunpack.c.h.b16 %v1715
          %v1731 = vunpack.c.l.b16 %v1716
          %v1732 = vunpack.c.h.b16 %v1716
          %v1733 = vunpack.c.l.b16 %v1717
          %v1734 = vunpack.c.h.b16 %v1717
          %v1735 = vunpack.c.l.b16 %v1718
          %v1736 = vunpack.c.h.b16 %v1718
          %v1737 = vunpack.c.l.b16 %v1719
          %v1738 = vunpack.c.h.b16 %v1719
          %v1739 = vunpack.c.l.b16 %v1720
          %v1740 = vunpack.c.h.b16 %v1720
          %v1741 = vunpack.c.l.b16 %v1721
          %v1742 = vunpack.c.h.b16 %v1721
          %v1743 = vpack.c.b16 %v1729, %v1729
          %v1744 = vpack.c.b16 %v1730, %v1730
          %v1745 = vpack.c.b16 %v1731, %v1731
          %v1746 = vpack.c.b16 %v1732, %v1732
          %v1747 = vpack.c.b16 %v1733, %v1733
          %v1748 = vpack.c.b16 %v1734, %v1734
          %v1749 = vpack.c.b16 %v1735, %v1735
          %v1750 = vpack.c.b16 %v1736, %v1736
          %v1751 = vpack.c.b16 %v1737, %v1737
          %v1752 = vpack.c.b16 %v1738, %v1738
          %v1753 = vpack.c.b16 %v1739, %v1739
          %v1754 = vpack.c.b16 %v1740, %v1740
          %v1755 = vpack.c.b16 %v1741, %v1741
          %v1756 = vpack.c.b16 %v1742, %v1742
          %1771 = vst [vmem:[%s222] sm:$0xf] %v1743
          %1772 = vst [vmem:[%s222 + $0x4] sm:$0xf] %v1744
          %1773 = vst [vmem:[%s222 + $0x8] sm:$0xf] %v1745
          %1774 = vst [vmem:[%s222 + $0xc] sm:$0xf] %v1746
          %1775 = vst [vmem:[%s222 + $0x10] sm:$0xf] %v1747
          %1776 = vst [vmem:[%s222 + $0x14] sm:$0xf] %v1748
          %1777 = vst [vmem:[%s222 + $0x18] sm:$0xf] %v1749
          %1778 = vst [vmem:[%s222 + $0x1c] sm:$0xf] %v1750
          %1779 = vst [vmem:[%s222 + $0x20] sm:$0xf] %v1751
          %1780 = vst [vmem:[%s222 + $0x24] sm:$0xf] %v1752
          %1781 = vst [vmem:[%s222 + $0x28] sm:$0xf] %v1753
          %1782 = vst [vmem:[%s222 + $0x2c] sm:$0xf] %v1754
          %1783 = vst [vmem:[%s222 + $0x30] sm:$0xf] %v1755
          %1784 = vst [vmem:[%s222 + $0x34] sm:$0xf] %v1756
        $region52: #{discriminator2d_forward.4} parent=35 // pred_fallthru
          _
        %s1785 = sand.u32 %s130, 1
        %s1786 = sand.u32 %s130, 1
        %s1787 = smul.addr %s1786, 56
        %s1788 = scalar_lea.vmem [#allocation7], %s1787
        // Predicated region
        $region53: #{discriminator2d_forward.4} parent=35 // pred_check
          %p1789 = pneg %p140
        $region54: #{discriminator2d_forward.4} parent=35 // pred_check_branch
          %1791 = sbr.rel (%p1789) target = $region56
        $region55: #{discriminator2d_forward.4} parent=35 // pred_region
          %s1792 = smul.u32 %s19, %s20
          %s1793 = smul.u32 14, %s1792
          %s1794 = ssub.s32 13, %s1793
          %s1795 = smul.u32 64, %s1794
          %p1796 = scmp.ne.s32.totalorder 0, %s1795
          %s1797 = smul.addr %s1793, 4
          %s1798 = scalar_lea.vmem %s4, %s1797
          // Predicated region
          $region57: #{discriminator2d_forward.4} parent=55 // pred_check
            %p1799 = pneg %p1796
          $region58: #{discriminator2d_forward.4} parent=55 // pred_check_branch
            %1801 = sbr.rel (%p1799) target = $region60
          $region59: #{discriminator2d_forward.4} parent=55 // pred_region
            // Predicated region
            $region61: #{discriminator2d_forward.4} parent=59 // pred_check
              _
            $region62: #{discriminator2d_forward.4} parent=59 // pred_check_branch
              %1803 = sbr.rel target = $region64
            $region63: #{discriminator2d_forward.4} parent=59 // pred_region
              // Predicated region
              $region83: #{discriminator2d_forward.4} parent=63 // pred_check
                _
              $region84: #{discriminator2d_forward.4} parent=63 // pred_check_branch
                %1878 = sbr.rel (0) target = $region86
              $region85: #{discriminator2d_forward.4} parent=63 // pred_region
                %s1880 = ssub.s32 16, 1
                %s1881 = sdiv.u32.pop %s1794, 13
                %s1882 = srem.u32.pop %s1794, 13
                // While loop
                $region87: #{discriminator2d_forward.4} parent=85 // loop_pre_header
                  _
                $region88: #{discriminator2d_forward.4} parent=85 // loop_header
                  %s1884 = sphi 0, %s1886
                  %p1885 = scmp.ge.s32.totalorder %s1884, %s1881
                  %s1889 = sphi 0, %s1920
                  %s1890 = sphi %s1788, %s1923
                  %s1891 = sphi %s1798, %s1924
                $region89: #{discriminator2d_forward.4} parent=85 // loop_header_branch
                  %1888 = sbr.rel (%p1885) target = $region93
                $region90: #{discriminator2d_forward.4} parent=85 // loop_body
                  %v1892 = vld [vmem:[%s1890] sm:%s1880]
                  %1893 = vst [vmem:[%s1891] sm:%s1880] %v1892
                  %v1894 = vld [vmem:[%s1890 + $0x4] sm:%s1880]
                  %1895 = vst [vmem:[%s1891 + $0x4] sm:%s1880] %v1894
                  %v1896 = vld [vmem:[%s1890 + $0x8] sm:%s1880]
                  %1897 = vst [vmem:[%s1891 + $0x8] sm:%s1880] %v1896
                  %v1898 = vld [vmem:[%s1890 + $0xc] sm:%s1880]
                  %1899 = vst [vmem:[%s1891 + $0xc] sm:%s1880] %v1898
                  %v1900 = vld [vmem:[%s1890 + $0x10] sm:%s1880]
                  %1901 = vst [vmem:[%s1891 + $0x10] sm:%s1880] %v1900
                  %v1902 = vld [vmem:[%s1890 + $0x14] sm:%s1880]
                  %1903 = vst [vmem:[%s1891 + $0x14] sm:%s1880] %v1902
                  %v1904 = vld [vmem:[%s1890 + $0x18] sm:%s1880]
                  %1905 = vst [vmem:[%s1891 + $0x18] sm:%s1880] %v1904
                  %v1906 = vld [vmem:[%s1890 + $0x1c] sm:%s1880]
                  %1907 = vst [vmem:[%s1891 + $0x1c] sm:%s1880] %v1906
                  %v1908 = vld [vmem:[%s1890 + $0x20] sm:%s1880]
                  %1909 = vst [vmem:[%s1891 + $0x20] sm:%s1880] %v1908
                  %v1910 = vld [vmem:[%s1890 + $0x24] sm:%s1880]
                  %1911 = vst [vmem:[%s1891 + $0x24] sm:%s1880] %v1910
                  %v1912 = vld [vmem:[%s1890 + $0x28] sm:%s1880]
                  %1913 = vst [vmem:[%s1891 + $0x28] sm:%s1880] %v1912
                  %v1914 = vld [vmem:[%s1890 + $0x2c] sm:%s1880]
                  %1915 = vst [vmem:[%s1891 + $0x2c] sm:%s1880] %v1914
                  %v1916 = vld [vmem:[%s1890 + $0x30] sm:%s1880]
                  %1917 = vst [vmem:[%s1891 + $0x30] sm:%s1880] %v1916
                  %s1918 = sadd.s32 1, %s1889
                  %p1919 = scmp.ge.s32.totalorder %s1918, %s1881
                  %s1920 = scalar_select %p1919, 0, %s1918
                  %s1921 = smul.u32 %s1920, 52
                  %s1922 = smul.u32 %s1920, 52
                  %s1923 = scalar_lea.vmem %s1788, %s1921 [#allocation7]
                  %s1924 = scalar_lea.vmem %s1798, %s1922
                $region91: #{discriminator2d_forward.4} parent=85 // loop_footer
                  %s1886 = sadd.s32 %s1884, 1
                $region92: #{discriminator2d_forward.4} parent=85 // loop_footer_branch
                  %1883 = sbr.rel target = $region88
                $region93: #{discriminator2d_forward.4} parent=85 // loop_exit
                  _
                %s1925 = sdiv.u32.pop %s1794, 13
                %s1926 = srem.u32.pop %s1794, 13
                %s1927 = smul.u32 %s1925, 13
                %s1928 = smul.u32 4, %s1927
                %s1929 = scalar_lea.vmem %s1788, %s1928 [#allocation7]
                %s1930 = smul.u32 4, %s1927
                %s1931 = scalar_lea.vmem %s1798, %s1930
                // While loop
                $region94: #{discriminator2d_forward.4} parent=85 // loop_pre_header
                  _
                $region95: #{discriminator2d_forward.4} parent=85 // loop_header
                  %s1933 = sphi 0, %s1935
                  %p1934 = scmp.ge.s32.totalorder %s1933, %s1926
                  %s1938 = sphi 0, %s1945
                  %s1939 = sphi %s1929, %s1948
                  %s1940 = sphi %s1931, %s1949
                $region96: #{discriminator2d_forward.4} parent=85 // loop_header_branch
                  %1937 = sbr.rel (%p1934) target = $region100
                $region97: #{discriminator2d_forward.4} parent=85 // loop_body
                  %v1941 = vld [vmem:[%s1939] sm:%s1880]
                  %1942 = vst [vmem:[%s1940] sm:%s1880] %v1941
                  %s1943 = sadd.s32 1, %s1938
                  %p1944 = scmp.ge.s32.totalorder %s1943, %s1926
                  %s1945 = scalar_select %p1944, 0, %s1943
                  %s1946 = smul.u32 %s1945, 4
                  %s1947 = smul.u32 %s1945, 4
                  %s1948 = scalar_lea.vmem %s1929, %s1946 [#allocation7]
                  %s1949 = scalar_lea.vmem %s1931, %s1947
                $region98: #{discriminator2d_forward.4} parent=85 // loop_footer
                  %s1935 = sadd.s32 %s1933, 1
                $region99: #{discriminator2d_forward.4} parent=85 // loop_footer_branch
                  %1932 = sbr.rel target = $region95
                $region100: #{discriminator2d_forward.4} parent=85 // loop_exit
                  _
              $region86: #{discriminator2d_forward.4} parent=63 // pred_fallthru
                _
            $region64: #{discriminator2d_forward.4} parent=59 // pred_fallthru
              _
            // Predicated region
            $region65: #{discriminator2d_forward.4} parent=59 // pred_check
              _
            $region66: #{discriminator2d_forward.4} parent=59 // pred_check_branch
              %1805 = sbr.rel (0) target = $region68
            $region67: #{discriminator2d_forward.4} parent=59 // pred_region
              %s1807 = ssub.s32 16, 1
              %s1808 = sdiv.u32.pop %s1794, 13
              %s1809 = srem.u32.pop %s1794, 13
              // While loop
              $region69: #{discriminator2d_forward.4} parent=67 // loop_pre_header
                _
              $region70: #{discriminator2d_forward.4} parent=67 // loop_header
                %s1811 = sphi 0, %s1813
                %p1812 = scmp.ge.s32.totalorder %s1811, %s1808
                %s1816 = sphi 0, %s1847
                %s1817 = sphi %s1788, %s1850
                %s1818 = sphi %s1798, %s1851
              $region71: #{discriminator2d_forward.4} parent=67 // loop_header_branch
                %1815 = sbr.rel (%p1812) target = $region75
              $region72: #{discriminator2d_forward.4} parent=67 // loop_body
                %v1819 = vld [vmem:[%s1817] sm:%s1807]
                %1820 = vst [vmem:[%s1818] sm:%s1807] %v1819
                %v1821 = vld [vmem:[%s1817 + $0x4] sm:%s1807]
                %1822 = vst [vmem:[%s1818 + $0x4] sm:%s1807] %v1821
                %v1823 = vld [vmem:[%s1817 + $0x8] sm:%s1807]
                %1824 = vst [vmem:[%s1818 + $0x8] sm:%s1807] %v1823
                %v1825 = vld [vmem:[%s1817 + $0xc] sm:%s1807]
                %1826 = vst [vmem:[%s1818 + $0xc] sm:%s1807] %v1825
                %v1827 = vld [vmem:[%s1817 + $0x10] sm:%s1807]
                %1828 = vst [vmem:[%s1818 + $0x10] sm:%s1807] %v1827
                %v1829 = vld [vmem:[%s1817 + $0x14] sm:%s1807]
                %1830 = vst [vmem:[%s1818 + $0x14] sm:%s1807] %v1829
                %v1831 = vld [vmem:[%s1817 + $0x18] sm:%s1807]
                %1832 = vst [vmem:[%s1818 + $0x18] sm:%s1807] %v1831
                %v1833 = vld [vmem:[%s1817 + $0x1c] sm:%s1807]
                %1834 = vst [vmem:[%s1818 + $0x1c] sm:%s1807] %v1833
                %v1835 = vld [vmem:[%s1817 + $0x20] sm:%s1807]
                %1836 = vst [vmem:[%s1818 + $0x20] sm:%s1807] %v1835
                %v1837 = vld [vmem:[%s1817 + $0x24] sm:%s1807]
                %1838 = vst [vmem:[%s1818 + $0x24] sm:%s1807] %v1837
                %v1839 = vld [vmem:[%s1817 + $0x28] sm:%s1807]
                %1840 = vst [vmem:[%s1818 + $0x28] sm:%s1807] %v1839
                %v1841 = vld [vmem:[%s1817 + $0x2c] sm:%s1807]
                %1842 = vst [vmem:[%s1818 + $0x2c] sm:%s1807] %v1841
                %v1843 = vld [vmem:[%s1817 + $0x30] sm:%s1807]
                %1844 = vst [vmem:[%s1818 + $0x30] sm:%s1807] %v1843
                %s1845 = sadd.s32 1, %s1816
                %p1846 = scmp.ge.s32.totalorder %s1845, %s1808
                %s1847 = scalar_select %p1846, 0, %s1845
                %s1848 = smul.u32 %s1847, 52
                %s1849 = smul.u32 %s1847, 52
                %s1850 = scalar_lea.vmem %s1788, %s1848 [#allocation7]
                %s1851 = scalar_lea.vmem %s1798, %s1849
              $region73: #{discriminator2d_forward.4} parent=67 // loop_footer
                %s1813 = sadd.s32 %s1811, 1
              $region74: #{discriminator2d_forward.4} parent=67 // loop_footer_branch
                %1810 = sbr.rel target = $region70
              $region75: #{discriminator2d_forward.4} parent=67 // loop_exit
                _
              %s1852 = sdiv.u32.pop %s1794, 13
              %s1853 = srem.u32.pop %s1794, 13
              %s1854 = smul.u32 %s1852, 13
              %s1855 = smul.u32 4, %s1854
              %s1856 = scalar_lea.vmem %s1788, %s1855 [#allocation7]
              %s1857 = smul.u32 4, %s1854
              %s1858 = scalar_lea.vmem %s1798, %s1857
              // While loop
              $region76: #{discriminator2d_forward.4} parent=67 // loop_pre_header
                _
              $region77: #{discriminator2d_forward.4} parent=67 // loop_header
                %s1860 = sphi 0, %s1862
                %p1861 = scmp.ge.s32.totalorder %s1860, %s1853
                %s1865 = sphi 0, %s1872
                %s1866 = sphi %s1856, %s1875
                %s1867 = sphi %s1858, %s1876
              $region78: #{discriminator2d_forward.4} parent=67 // loop_header_branch
                %1864 = sbr.rel (%p1861) target = $region82
              $region79: #{discriminator2d_forward.4} parent=67 // loop_body
                %v1868 = vld [vmem:[%s1866] sm:%s1807]
                %1869 = vst [vmem:[%s1867] sm:%s1807] %v1868
                %s1870 = sadd.s32 1, %s1865
                %p1871 = scmp.ge.s32.totalorder %s1870, %s1853
                %s1872 = scalar_select %p1871, 0, %s1870
                %s1873 = smul.u32 %s1872, 4
                %s1874 = smul.u32 %s1872, 4
                %s1875 = scalar_lea.vmem %s1856, %s1873 [#allocation7]
                %s1876 = scalar_lea.vmem %s1858, %s1874
              $region80: #{discriminator2d_forward.4} parent=67 // loop_footer
                %s1862 = sadd.s32 %s1860, 1
              $region81: #{discriminator2d_forward.4} parent=67 // loop_footer_branch
                %1859 = sbr.rel target = $region77
              $region82: #{discriminator2d_forward.4} parent=67 // loop_exit
                _
            $region68: #{discriminator2d_forward.4} parent=59 // pred_fallthru
              _
          $region60: #{discriminator2d_forward.4} parent=55 // pred_fallthru
            _
          %1950 = vnop
        $region56: #{discriminator2d_forward.4} parent=35 // pred_fallthru
          _
      $region36: #{discriminator2d_forward.4} parent=5 // pred_fallthru
        _
      %p1951 = scmp.le.s32.totalorder 2, %s10
      // Predicated region
      $region101: #{discriminator2d_forward.4} parent=5 // pred_check
        %p1952 = pneg %p1951
      $region102: #{discriminator2d_forward.4} parent=5 // pred_check_branch
        %1954 = sbr.rel (%p1952) target = $region104
      $region103: #{discriminator2d_forward.4} parent=5 // pred_region
        %s1955 = ssub.s32 %s10, 2
        // Predicated region
        $region105: #{discriminator2d_forward.4} parent=103 // pred_check
          %p1956 = pneg %p146
        $region106: #{discriminator2d_forward.4} parent=103 // pred_check_branch
          %1958 = sbr.rel (%p1956) target = $region108
        $region107: #{discriminator2d_forward.4} parent=103 // pred_region
          %s1959 = sand.u32 %s131, 1
          %s1960 = sand.u32 %s131, 1
          %s1961 = smul.addr %s1960, 56
          %s1962 = scalar_lea.vmem [#allocation7], %s1961
        $region108: #{discriminator2d_forward.4} parent=103 // pred_fallthru
          _
      $region104: #{discriminator2d_forward.4} parent=5 // pred_fallthru
        _
    $region6: #{discriminator2d_forward.4} parent=1 // loop_footer
      %s14 = sadd.s32 1, %s10
    $region7: #{discriminator2d_forward.4} parent=1 // loop_footer_branch
      %9 = sbr.rel target = $region3
    $region8: #{discriminator2d_forward.4} parent=1 // loop_exit
      _

// kernel: discriminator2d_forward.5
$region0: #{discriminator2d_forward.5}
  #allocation0 [shape = 'u32[]', space=smem, size = 0x4, offset = 0x4, fixed_abs, tag = 'smem constant byte address 0x4 - core index']
  #allocation1 [shape = 'u32[144,128]{1,0:T(1,128)}', space=vmem, size = 0x12000, scoped, tag = 'internal scratch']
  %s0 = inlined_call_operand.vmem [shape: bf16[144,2048], index: 0, kind: input, shape index: {}]
  %s1 = inlined_call_operand.vmem [shape: bf16[2048,128], index: 1, kind: input, shape index: {}]
  %s2 = inlined_call_operand.vmem [shape: f32[1,128], index: 2, kind: input, shape index: {}]
  %s3 = inlined_call_operand.vmem [shape: bf16[144,128], index: 3, kind: output, shape index: {}]
  %s4 = sld [smem:[#allocation0]]
  $region22: #{discriminator2d_forward.5} parent=0
    _
  %s6 = ssub.s32 1, %s4
  %s7 = scalar_select 0, %s6, %s4
  // Predicated region
  $region2: #{discriminator2d_forward.5} parent=0 // pred_check
    _
  $region3: #{discriminator2d_forward.5} parent=0 // pred_check_branch
    %9 = sbr.rel (0) target = $region5
  $region4: #{discriminator2d_forward.5} parent=0 // pred_region
    _
  $region5: #{discriminator2d_forward.5} parent=0 // pred_fallthru
    _
  // Predicated region
  $region6: #{discriminator2d_forward.5} parent=0 // pred_check
    _
  $region7: #{discriminator2d_forward.5} parent=0 // pred_check_branch
    %11 = sbr.rel (0) target = $region9
  $region8: #{discriminator2d_forward.5} parent=0 // pred_region
    _
  $region9: #{discriminator2d_forward.5} parent=0 // pred_fallthru
    _
  // Predicated region
  $region10: #{discriminator2d_forward.5} parent=0 // pred_check
    _
  $region11: #{discriminator2d_forward.5} parent=0 // pred_check_branch
    %13 = sbr.rel (0) target = $region13
  $region12: #{discriminator2d_forward.5} parent=0 // pred_region
    _
  $region13: #{discriminator2d_forward.5} parent=0 // pred_fallthru
    _
  %v15 = vld [vmem:[%s0] sm:$0xff]
  %v16 = vld [vmem:[%s0 + $0x8] sm:$0xff]
  %v17 = vld [vmem:[%s0 + $0x10] sm:$0xff]
  %v18 = vld [vmem:[%s0 + $0x18] sm:$0xff]
  %v19 = vld [vmem:[%s0 + $0x20] sm:$0xff]
  %v20 = vld [vmem:[%s0 + $0x28] sm:$0xff]
  %v21 = vld [vmem:[%s0 + $0x30] sm:$0xff]
  %v22 = vld [vmem:[%s0 + $0x38] sm:$0xff]
  %v23 = vld [vmem:[%s0 + $0x40] sm:$0xff]
  %v24 = vld [vmem:[%s0 + $0x48] sm:$0xff]
  %v25 = vld [vmem:[%s0 + $0x50] sm:$0xff]
  %v26 = vld [vmem:[%s0 + $0x58] sm:$0xff]
  %v27 = vld [vmem:[%s0 + $0x60] sm:$0xff]
  %v28 = vld [vmem:[%s0 + $0x68] sm:$0xff]
  %v29 = vld [vmem:[%s0 + $0x70] sm:$0xff]
  %v30 = vld [vmem:[%s0 + $0x78] sm:$0xff]
  %v31 = vld [vmem:[%s0 + $0x80] sm:$0xff]
  %v32 = vld [vmem:[%s0 + $0x88] sm:$0xff]
  %v33 = vld [vmem:[%s0 + $0x90] sm:$0xff]
  %v34 = vld [vmem:[%s0 + $0x98] sm:$0xff]
  %v35 = vld [vmem:[%s0 + $0xa0] sm:$0xff]
  %v36 = vld [vmem:[%s0 + $0xa8] sm:$0xff]
  %v37 = vld [vmem:[%s0 + $0xb0] sm:$0xff]
  %v38 = vld [vmem:[%s0 + $0xb8] sm:$0xff]
  %v39 = vld [vmem:[%s0 + $0xc0] sm:$0xff]
  %v40 = vld [vmem:[%s0 + $0xc8] sm:$0xff]
  %v41 = vld [vmem:[%s0 + $0xd0] sm:$0xff]
  %v42 = vld [vmem:[%s0 + $0xd8] sm:$0xff]
  %v43 = vld [vmem:[%s0 + $0xe0] sm:$0xff]
  %v44 = vld [vmem:[%s0 + $0xe8] sm:$0xff]
  %v45 = vld [vmem:[%s0 + $0xf0] sm:$0xff]
  %v46 = vld [vmem:[%s0 + $0xf8] sm:$0xff]
  %v47 = vld [vmem:[%s0 + $0x100] sm:$0xff]
  %v48 = vld [vmem:[%s0 + $0x108] sm:$0xff]
  %v49 = vld [vmem:[%s0 + $0x110] sm:$0xff]
  %v50 = vld [vmem:[%s0 + $0x118] sm:$0xff]
  %v51 = vld [vmem:[%s0 + $0x120] sm:$0xff]
  %v52 = vld [vmem:[%s0 + $0x128] sm:$0xff]
  %v53 = vld [vmem:[%s0 + $0x130] sm:$0xff]
  %v54 = vld [vmem:[%s0 + $0x138] sm:$0xff]
  %v55 = vld [vmem:[%s0 + $0x140] sm:$0xff]
  %v56 = vld [vmem:[%s0 + $0x148] sm:$0xff]
  %v57 = vld [vmem:[%s0 + $0x150] sm:$0xff]
  %v58 = vld [vmem:[%s0 + $0x158] sm:$0xff]
  %v59 = vld [vmem:[%s0 + $0x160] sm:$0xff]
  %v60 = vld [vmem:[%s0 + $0x168] sm:$0xff]
  %v61 = vld [vmem:[%s0 + $0x170] sm:$0xff]
  %v62 = vld [vmem:[%s0 + $0x178] sm:$0xff]
  %v63 = vld [vmem:[%s0 + $0x180] sm:$0xff]
  %v64 = vld [vmem:[%s0 + $0x188] sm:$0xff]
  %v65 = vld [vmem:[%s0 + $0x190] sm:$0xff]
  %v66 = vld [vmem:[%s0 + $0x198] sm:$0xff]
  %v67 = vld [vmem:[%s0 + $0x1a0] sm:$0xff]
  %v68 = vld [vmem:[%s0 + $0x1a8] sm:$0xff]
  %v69 = vld [vmem:[%s0 + $0x1b0] sm:$0xff]
  %v70 = vld [vmem:[%s0 + $0x1b8] sm:$0xff]
  %v71 = vld [vmem:[%s0 + $0x1c0] sm:$0xff]
  %v72 = vld [vmem:[%s0 + $0x1c8] sm:$0xff]
  %v73 = vld [vmem:[%s0 + $0x1d0] sm:$0xff]
  %v74 = vld [vmem:[%s0 + $0x1d8] sm:$0xff]
  %v75 = vld [vmem:[%s0 + $0x1e0] sm:$0xff]
  %v76 = vld [vmem:[%s0 + $0x1e8] sm:$0xff]
  %v77 = vld [vmem:[%s0 + $0x1f0] sm:$0xff]
  %v78 = vld [vmem:[%s0 + $0x1f8] sm:$0xff]
  %v79 = vld [vmem:[%s0 + $0x200] sm:$0xff]
  %v80 = vld [vmem:[%s0 + $0x208] sm:$0xff]
  %v81 = vld [vmem:[%s0 + $0x210] sm:$0xff]
  %v82 = vld [vmem:[%s0 + $0x218] sm:$0xff]
  %v83 = vld [vmem:[%s0 + $0x220] sm:$0xff]
  %v84 = vld [vmem:[%s0 + $0x228] sm:$0xff]
  %v85 = vld [vmem:[%s0 + $0x230] sm:$0xff]
  %v86 = vld [vmem:[%s0 + $0x238] sm:$0xff]
  %v87 = vld [vmem:[%s0 + $0x240] sm:$0xff]
  %v88 = vld [vmem:[%s0 + $0x248] sm:$0xff]
  %v89 = vld [vmem:[%s0 + $0x250] sm:$0xff]
  %v90 = vld [vmem:[%s0 + $0x258] sm:$0xff]
  %v91 = vld [vmem:[%s0 + $0x260] sm:$0xff]
  %v92 = vld [vmem:[%s0 + $0x268] sm:$0xff]
  %v93 = vld [vmem:[%s0 + $0x270] sm:$0xff]
  %v94 = vld [vmem:[%s0 + $0x278] sm:$0xff]
  %v95 = vld [vmem:[%s0 + $0x280] sm:$0xff]
  %v96 = vld [vmem:[%s0 + $0x288] sm:$0xff]
  %v97 = vld [vmem:[%s0 + $0x290] sm:$0xff]
  %v98 = vld [vmem:[%s0 + $0x298] sm:$0xff]
  %v99 = vld [vmem:[%s0 + $0x2a0] sm:$0xff]
  %v100 = vld [vmem:[%s0 + $0x2a8] sm:$0xff]
  %v101 = vld [vmem:[%s0 + $0x2b0] sm:$0xff]
  %v102 = vld [vmem:[%s0 + $0x2b8] sm:$0xff]
  %v103 = vld [vmem:[%s0 + $0x2c0] sm:$0xff]
  %v104 = vld [vmem:[%s0 + $0x2c8] sm:$0xff]
  %v105 = vld [vmem:[%s0 + $0x2d0] sm:$0xff]
  %v106 = vld [vmem:[%s0 + $0x2d8] sm:$0xff]
  %v107 = vld [vmem:[%s0 + $0x2e0] sm:$0xff]
  %v108 = vld [vmem:[%s0 + $0x2e8] sm:$0xff]
  %v109 = vld [vmem:[%s0 + $0x2f0] sm:$0xff]
  %v110 = vld [vmem:[%s0 + $0x2f8] sm:$0xff]
  %v111 = vld [vmem:[%s0 + $0x300] sm:$0xff]
  %v112 = vld [vmem:[%s0 + $0x308] sm:$0xff]
  %v113 = vld [vmem:[%s0 + $0x310] sm:$0xff]
  %v114 = vld [vmem:[%s0 + $0x318] sm:$0xff]
  %v115 = vld [vmem:[%s0 + $0x320] sm:$0xff]
  %v116 = vld [vmem:[%s0 + $0x328] sm:$0xff]
  %v117 = vld [vmem:[%s0 + $0x330] sm:$0xff]
  %v118 = vld [vmem:[%s0 + $0x338] sm:$0xff]
  %v119 = vld [vmem:[%s0 + $0x340] sm:$0xff]
  %v120 = vld [vmem:[%s0 + $0x348] sm:$0xff]
  %v121 = vld [vmem:[%s0 + $0x350] sm:$0xff]
  %v122 = vld [vmem:[%s0 + $0x358] sm:$0xff]
  %v123 = vld [vmem:[%s0 + $0x360] sm:$0xff]
  %v124 = vld [vmem:[%s0 + $0x368] sm:$0xff]
  %v125 = vld [vmem:[%s0 + $0x370] sm:$0xff]
  %v126 = vld [vmem:[%s0 + $0x378] sm:$0xff]
  %v127 = vld [vmem:[%s0 + $0x380] sm:$0xff]
  %v128 = vld [vmem:[%s0 + $0x388] sm:$0xff]
  %v129 = vld [vmem:[%s0 + $0x390] sm:$0xff]
  %v130 = vld [vmem:[%s0 + $0x398] sm:$0xff]
  %v131 = vld [vmem:[%s0 + $0x3a0] sm:$0xff]
  %v132 = vld [vmem:[%s0 + $0x3a8] sm:$0xff]
  %v133 = vld [vmem:[%s0 + $0x3b0] sm:$0xff]
  %v134 = vld [vmem:[%s0 + $0x3b8] sm:$0xff]
  %v135 = vld [vmem:[%s0 + $0x3c0] sm:$0xff]
  %v136 = vld [vmem:[%s0 + $0x3c8] sm:$0xff]
  %v137 = vld [vmem:[%s0 + $0x3d0] sm:$0xff]
  %v138 = vld [vmem:[%s0 + $0x3d8] sm:$0xff]
  %v139 = vld [vmem:[%s0 + $0x3e0] sm:$0xff]
  %v140 = vld [vmem:[%s0 + $0x3e8] sm:$0xff]
  %v141 = vld [vmem:[%s0 + $0x3f0] sm:$0xff]
  %v142 = vld [vmem:[%s0 + $0x3f8] sm:$0xff]
  %v143 = vld [vmem:[%s0 + $0x400] sm:$0xff]
  %v144 = vld [vmem:[%s0 + $0x408] sm:$0xff]
  %v145 = vld [vmem:[%s0 + $0x410] sm:$0xff]
  %v146 = vld [vmem:[%s0 + $0x418] sm:$0xff]
  %v147 = vld [vmem:[%s0 + $0x420] sm:$0xff]
  %v148 = vld [vmem:[%s0 + $0x428] sm:$0xff]
  %v149 = vld [vmem:[%s0 + $0x430] sm:$0xff]
  %v150 = vld [vmem:[%s0 + $0x438] sm:$0xff]
  %v151 = vld [vmem:[%s0 + $0x440] sm:$0xff]
  %v152 = vld [vmem:[%s0 + $0x448] sm:$0xff]
  %v153 = vld [vmem:[%s0 + $0x450] sm:$0xff]
  %v154 = vld [vmem:[%s0 + $0x458] sm:$0xff]
  %v155 = vld [vmem:[%s0 + $0x460] sm:$0xff]
  %v156 = vld [vmem:[%s0 + $0x468] sm:$0xff]
  %v157 = vld [vmem:[%s0 + $0x470] sm:$0xff]
  %v158 = vld [vmem:[%s0 + $0x478] sm:$0xff]
  %v159 = vld [vmem:[%s1] sm:$0xf]
  %v160 = vld [vmem:[%s1 + $0x4] sm:$0xf]
  %v161 = vld [vmem:[%s1 + $0x8] sm:$0xf]
  %v162 = vld [vmem:[%s1 + $0xc] sm:$0xf]
  %v163 = vld [vmem:[%s1 + $0x10] sm:$0xf]
  %v164 = vld [vmem:[%s1 + $0x14] sm:$0xf]
  %v165 = vld [vmem:[%s1 + $0x18] sm:$0xf]
  %v166 = vld [vmem:[%s1 + $0x1c] sm:$0xf]
  %v167 = vld [vmem:[%s1 + $0x20] sm:$0xf]
  %v168 = vld [vmem:[%s1 + $0x24] sm:$0xf]
  %v169 = vld [vmem:[%s1 + $0x28] sm:$0xf]
  %v170 = vld [vmem:[%s1 + $0x2c] sm:$0xf]
  %v171 = vld [vmem:[%s1 + $0x30] sm:$0xf]
  %v172 = vld [vmem:[%s1 + $0x34] sm:$0xf]
  %v173 = vld [vmem:[%s1 + $0x38] sm:$0xf]
  %v174 = vld [vmem:[%s1 + $0x3c] sm:$0xf]
  %v175 = vld [vmem:[%s1 + $0x40] sm:$0xf]
  %v176 = vld [vmem:[%s1 + $0x44] sm:$0xf]
  %v177 = vld [vmem:[%s1 + $0x48] sm:$0xf]
  %v178 = vld [vmem:[%s1 + $0x4c] sm:$0xf]
  %v179 = vld [vmem:[%s1 + $0x50] sm:$0xf]
  %v180 = vld [vmem:[%s1 + $0x54] sm:$0xf]
  %v181 = vld [vmem:[%s1 + $0x58] sm:$0xf]
  %v182 = vld [vmem:[%s1 + $0x5c] sm:$0xf]
  %v183 = vld [vmem:[%s1 + $0x60] sm:$0xf]
  %v184 = vld [vmem:[%s1 + $0x64] sm:$0xf]
  %v185 = vld [vmem:[%s1 + $0x68] sm:$0xf]
  %v186 = vld [vmem:[%s1 + $0x6c] sm:$0xf]
  %v187 = vld [vmem:[%s1 + $0x70] sm:$0xf]
  %v188 = vld [vmem:[%s1 + $0x74] sm:$0xf]
  %v189 = vld [vmem:[%s1 + $0x78] sm:$0xf]
  %v190 = vld [vmem:[%s1 + $0x7c] sm:$0xf]
  %v191 = vld [vmem:[%s1 + $0x80] sm:$0xf]
  %v192 = vld [vmem:[%s1 + $0x84] sm:$0xf]
  %v193 = vld [vmem:[%s1 + $0x88] sm:$0xf]
  %v194 = vld [vmem:[%s1 + $0x8c] sm:$0xf]
  %v195 = vld [vmem:[%s1 + $0x90] sm:$0xf]
  %v196 = vld [vmem:[%s1 + $0x94] sm:$0xf]
  %v197 = vld [vmem:[%s1 + $0x98] sm:$0xf]
  %v198 = vld [vmem:[%s1 + $0x9c] sm:$0xf]
  %v199 = vld [vmem:[%s1 + $0xa0] sm:$0xf]
  %v200 = vld [vmem:[%s1 + $0xa4] sm:$0xf]
  %v201 = vld [vmem:[%s1 + $0xa8] sm:$0xf]
  %v202 = vld [vmem:[%s1 + $0xac] sm:$0xf]
  %v203 = vld [vmem:[%s1 + $0xb0] sm:$0xf]
  %v204 = vld [vmem:[%s1 + $0xb4] sm:$0xf]
  %v205 = vld [vmem:[%s1 + $0xb8] sm:$0xf]
  %v206 = vld [vmem:[%s1 + $0xbc] sm:$0xf]
  %v207 = vld [vmem:[%s1 + $0xc0] sm:$0xf]
  %v208 = vld [vmem:[%s1 + $0xc4] sm:$0xf]
  %v209 = vld [vmem:[%s1 + $0xc8] sm:$0xf]
  %v210 = vld [vmem:[%s1 + $0xcc] sm:$0xf]
  %v211 = vld [vmem:[%s1 + $0xd0] sm:$0xf]
  %v212 = vld [vmem:[%s1 + $0xd4] sm:$0xf]
  %v213 = vld [vmem:[%s1 + $0xd8] sm:$0xf]
  %v214 = vld [vmem:[%s1 + $0xdc] sm:$0xf]
  %v215 = vld [vmem:[%s1 + $0xe0] sm:$0xf]
  %v216 = vld [vmem:[%s1 + $0xe4] sm:$0xf]
  %v217 = vld [vmem:[%s1 + $0xe8] sm:$0xf]
  %v218 = vld [vmem:[%s1 + $0xec] sm:$0xf]
  %v219 = vld [vmem:[%s1 + $0xf0] sm:$0xf]
  %v220 = vld [vmem:[%s1 + $0xf4] sm:$0xf]
  %v221 = vld [vmem:[%s1 + $0xf8] sm:$0xf]
  %v222 = vld [vmem:[%s1 + $0xfc] sm:$0xf]
  %v223 = vld [vmem:[%s1 + $0x100] sm:$0xf]
  %v224 = vld [vmem:[%s1 + $0x104] sm:$0xf]
  %v225 = vld [vmem:[%s1 + $0x108] sm:$0xf]
  %v226 = vld [vmem:[%s1 + $0x10c] sm:$0xf]
  %v227 = vld [vmem:[%s1 + $0x110] sm:$0xf]
  %v228 = vld [vmem:[%s1 + $0x114] sm:$0xf]
  %v229 = vld [vmem:[%s1 + $0x118] sm:$0xf]
  %v230 = vld [vmem:[%s1 + $0x11c] sm:$0xf]
  %v231 = vld [vmem:[%s1 + $0x120] sm:$0xf]
  %v232 = vld [vmem:[%s1 + $0x124] sm:$0xf]
  %v233 = vld [vmem:[%s1 + $0x128] sm:$0xf]
  %v234 = vld [vmem:[%s1 + $0x12c] sm:$0xf]
  %v235 = vld [vmem:[%s1 + $0x130] sm:$0xf]
  %v236 = vld [vmem:[%s1 + $0x134] sm:$0xf]
  %v237 = vld [vmem:[%s1 + $0x138] sm:$0xf]
  %v238 = vld [vmem:[%s1 + $0x13c] sm:$0xf]
  %v239 = vld [vmem:[%s1 + $0x140] sm:$0xf]
  %v240 = vld [vmem:[%s1 + $0x144] sm:$0xf]
  %v241 = vld [vmem:[%s1 + $0x148] sm:$0xf]
  %v242 = vld [vmem:[%s1 + $0x14c] sm:$0xf]
  %v243 = vld [vmem:[%s1 + $0x150] sm:$0xf]
  %v244 = vld [vmem:[%s1 + $0x154] sm:$0xf]
  %v245 = vld [vmem:[%s1 + $0x158] sm:$0xf]
  %v246 = vld [vmem:[%s1 + $0x15c] sm:$0xf]
  %v247 = vld [vmem:[%s1 + $0x160] sm:$0xf]
  %v248 = vld [vmem:[%s1 + $0x164] sm:$0xf]
  %v249 = vld [vmem:[%s1 + $0x168] sm:$0xf]
  %v250 = vld [vmem:[%s1 + $0x16c] sm:$0xf]
  %v251 = vld [vmem:[%s1 + $0x170] sm:$0xf]
  %v252 = vld [vmem:[%s1 + $0x174] sm:$0xf]
  %v253 = vld [vmem:[%s1 + $0x178] sm:$0xf]
  %v254 = vld [vmem:[%s1 + $0x17c] sm:$0xf]
  %v255 = vld [vmem:[%s1 + $0x180] sm:$0xf]
  %v256 = vld [vmem:[%s1 + $0x184] sm:$0xf]
  %v257 = vld [vmem:[%s1 + $0x188] sm:$0xf]
  %v258 = vld [vmem:[%s1 + $0x18c] sm:$0xf]
  %v259 = vld [vmem:[%s1 + $0x190] sm:$0xf]
  %v260 = vld [vmem:[%s1 + $0x194] sm:$0xf]
  %v261 = vld [vmem:[%s1 + $0x198] sm:$0xf]
  %v262 = vld [vmem:[%s1 + $0x19c] sm:$0xf]
  %v263 = vld [vmem:[%s1 + $0x1a0] sm:$0xf]
  %v264 = vld [vmem:[%s1 + $0x1a4] sm:$0xf]
  %v265 = vld [vmem:[%s1 + $0x1a8] sm:$0xf]
  %v266 = vld [vmem:[%s1 + $0x1ac] sm:$0xf]
  %v267 = vld [vmem:[%s1 + $0x1b0] sm:$0xf]
  %v268 = vld [vmem:[%s1 + $0x1b4] sm:$0xf]
  %v269 = vld [vmem:[%s1 + $0x1b8] sm:$0xf]
  %v270 = vld [vmem:[%s1 + $0x1bc] sm:$0xf]
  %v271 = vld [vmem:[%s1 + $0x1c0] sm:$0xf]
  %v272 = vld [vmem:[%s1 + $0x1c4] sm:$0xf]
  %v273 = vld [vmem:[%s1 + $0x1c8] sm:$0xf]
  %v274 = vld [vmem:[%s1 + $0x1cc] sm:$0xf]
  %v275 = vld [vmem:[%s1 + $0x1d0] sm:$0xf]
  %v276 = vld [vmem:[%s1 + $0x1d4] sm:$0xf]
  %v277 = vld [vmem:[%s1 + $0x1d8] sm:$0xf]
  %v278 = vld [vmem:[%s1 + $0x1dc] sm:$0xf]
  %v279 = vld [vmem:[%s1 + $0x1e0] sm:$0xf]
  %v280 = vld [vmem:[%s1 + $0x1e4] sm:$0xf]
  %v281 = vld [vmem:[%s1 + $0x1e8] sm:$0xf]
  %v282 = vld [vmem:[%s1 + $0x1ec] sm:$0xf]
  %v283 = vld [vmem:[%s1 + $0x1f0] sm:$0xf]
  %v284 = vld [vmem:[%s1 + $0x1f4] sm:$0xf]
  %v285 = vld [vmem:[%s1 + $0x1f8] sm:$0xf]
  %v286 = vld [vmem:[%s1 + $0x1fc] sm:$0xf]
  %v287 = vld [vmem:[%s1 + $0x200] sm:$0xf]
  %v288 = vld [vmem:[%s1 + $0x204] sm:$0xf]
  %v289 = vld [vmem:[%s1 + $0x208] sm:$0xf]
  %v290 = vld [vmem:[%s1 + $0x20c] sm:$0xf]
  %v291 = vld [vmem:[%s1 + $0x210] sm:$0xf]
  %v292 = vld [vmem:[%s1 + $0x214] sm:$0xf]
  %v293 = vld [vmem:[%s1 + $0x218] sm:$0xf]
  %v294 = vld [vmem:[%s1 + $0x21c] sm:$0xf]
  %v295 = vld [vmem:[%s1 + $0x220] sm:$0xf]
  %v296 = vld [vmem:[%s1 + $0x224] sm:$0xf]
  %v297 = vld [vmem:[%s1 + $0x228] sm:$0xf]
  %v298 = vld [vmem:[%s1 + $0x22c] sm:$0xf]
  %v299 = vld [vmem:[%s1 + $0x230] sm:$0xf]
  %v300 = vld [vmem:[%s1 + $0x234] sm:$0xf]
  %v301 = vld [vmem:[%s1 + $0x238] sm:$0xf]
  %v302 = vld [vmem:[%s1 + $0x23c] sm:$0xf]
  %v303 = vld [vmem:[%s1 + $0x240] sm:$0xf]
  %v304 = vld [vmem:[%s1 + $0x244] sm:$0xf]
  %v305 = vld [vmem:[%s1 + $0x248] sm:$0xf]
  %v306 = vld [vmem:[%s1 + $0x24c] sm:$0xf]
  %v307 = vld [vmem:[%s1 + $0x250] sm:$0xf]
  %v308 = vld [vmem:[%s1 + $0x254] sm:$0xf]
  %v309 = vld [vmem:[%s1 + $0x258] sm:$0xf]
  %v310 = vld [vmem:[%s1 + $0x25c] sm:$0xf]
  %v311 = vld [vmem:[%s1 + $0x260] sm:$0xf]
  %v312 = vld [vmem:[%s1 + $0x264] sm:$0xf]
  %v313 = vld [vmem:[%s1 + $0x268] sm:$0xf]
  %v314 = vld [vmem:[%s1 + $0x26c] sm:$0xf]
  %v315 = vld [vmem:[%s1 + $0x270] sm:$0xf]
  %v316 = vld [vmem:[%s1 + $0x274] sm:$0xf]
  %v317 = vld [vmem:[%s1 + $0x278] sm:$0xf]
  %v318 = vld [vmem:[%s1 + $0x27c] sm:$0xf]
  %v319 = vld [vmem:[%s1 + $0x280] sm:$0xf]
  %v320 = vld [vmem:[%s1 + $0x284] sm:$0xf]
  %v321 = vld [vmem:[%s1 + $0x288] sm:$0xf]
  %v322 = vld [vmem:[%s1 + $0x28c] sm:$0xf]
  %v323 = vld [vmem:[%s1 + $0x290] sm:$0xf]
  %v324 = vld [vmem:[%s1 + $0x294] sm:$0xf]
  %v325 = vld [vmem:[%s1 + $0x298] sm:$0xf]
  %v326 = vld [vmem:[%s1 + $0x29c] sm:$0xf]
  %v327 = vld [vmem:[%s1 + $0x2a0] sm:$0xf]
  %v328 = vld [vmem:[%s1 + $0x2a4] sm:$0xf]
  %v329 = vld [vmem:[%s1 + $0x2a8] sm:$0xf]
  %v330 = vld [vmem:[%s1 + $0x2ac] sm:$0xf]
  %v331 = vld [vmem:[%s1 + $0x2b0] sm:$0xf]
  %v332 = vld [vmem:[%s1 + $0x2b4] sm:$0xf]
  %v333 = vld [vmem:[%s1 + $0x2b8] sm:$0xf]
  %v334 = vld [vmem:[%s1 + $0x2bc] sm:$0xf]
  %v335 = vld [vmem:[%s1 + $0x2c0] sm:$0xf]
  %v336 = vld [vmem:[%s1 + $0x2c4] sm:$0xf]
  %v337 = vld [vmem:[%s1 + $0x2c8] sm:$0xf]
  %v338 = vld [vmem:[%s1 + $0x2cc] sm:$0xf]
  %v339 = vld [vmem:[%s1 + $0x2d0] sm:$0xf]
  %v340 = vld [vmem:[%s1 + $0x2d4] sm:$0xf]
  %v341 = vld [vmem:[%s1 + $0x2d8] sm:$0xf]
  %v342 = vld [vmem:[%s1 + $0x2dc] sm:$0xf]
  %v343 = vld [vmem:[%s1 + $0x2e0] sm:$0xf]
  %v344 = vld [vmem:[%s1 + $0x2e4] sm:$0xf]
  %v345 = vld [vmem:[%s1 + $0x2e8] sm:$0xf]
  %v346 = vld [vmem:[%s1 + $0x2ec] sm:$0xf]
  %v347 = vld [vmem:[%s1 + $0x2f0] sm:$0xf]
  %v348 = vld [vmem:[%s1 + $0x2f4] sm:$0xf]
  %v349 = vld [vmem:[%s1 + $0x2f8] sm:$0xf]
  %v350 = vld [vmem:[%s1 + $0x2fc] sm:$0xf]
  %v351 = vld [vmem:[%s1 + $0x300] sm:$0xf]
  %v352 = vld [vmem:[%s1 + $0x304] sm:$0xf]
  %v353 = vld [vmem:[%s1 + $0x308] sm:$0xf]
  %v354 = vld [vmem:[%s1 + $0x30c] sm:$0xf]
  %v355 = vld [vmem:[%s1 + $0x310] sm:$0xf]
  %v356 = vld [vmem:[%s1 + $0x314] sm:$0xf]
  %v357 = vld [vmem:[%s1 + $0x318] sm:$0xf]
  %v358 = vld [vmem:[%s1 + $0x31c] sm:$0xf]
  %v359 = vld [vmem:[%s1 + $0x320] sm:$0xf]
  %v360 = vld [vmem:[%s1 + $0x324] sm:$0xf]
  %v361 = vld [vmem:[%s1 + $0x328] sm:$0xf]
  %v362 = vld [vmem:[%s1 + $0x32c] sm:$0xf]
  %v363 = vld [vmem:[%s1 + $0x330] sm:$0xf]
  %v364 = vld [vmem:[%s1 + $0x334] sm:$0xf]
  %v365 = vld [vmem:[%s1 + $0x338] sm:$0xf]
  %v366 = vld [vmem:[%s1 + $0x33c] sm:$0xf]
  %v367 = vld [vmem:[%s1 + $0x340] sm:$0xf]
  %v368 = vld [vmem:[%s1 + $0x344] sm:$0xf]
  %v369 = vld [vmem:[%s1 + $0x348] sm:$0xf]
  %v370 = vld [vmem:[%s1 + $0x34c] sm:$0xf]
  %v371 = vld [vmem:[%s1 + $0x350] sm:$0xf]
  %v372 = vld [vmem:[%s1 + $0x354] sm:$0xf]
  %v373 = vld [vmem:[%s1 + $0x358] sm:$0xf]
  %v374 = vld [vmem:[%s1 + $0x35c] sm:$0xf]
  %v375 = vld [vmem:[%s1 + $0x360] sm:$0xf]
  %v376 = vld [vmem:[%s1 + $0x364] sm:$0xf]
  %v377 = vld [vmem:[%s1 + $0x368] sm:$0xf]
  %v378 = vld [vmem:[%s1 + $0x36c] sm:$0xf]
  %v379 = vld [vmem:[%s1 + $0x370] sm:$0xf]
  %v380 = vld [vmem:[%s1 + $0x374] sm:$0xf]
  %v381 = vld [vmem:[%s1 + $0x378] sm:$0xf]
  %v382 = vld [vmem:[%s1 + $0x37c] sm:$0xf]
  %v383 = vld [vmem:[%s1 + $0x380] sm:$0xf]
  %v384 = vld [vmem:[%s1 + $0x384] sm:$0xf]
  %v385 = vld [vmem:[%s1 + $0x388] sm:$0xf]
  %v386 = vld [vmem:[%s1 + $0x38c] sm:$0xf]
  %v387 = vld [vmem:[%s1 + $0x390] sm:$0xf]
  %v388 = vld [vmem:[%s1 + $0x394] sm:$0xf]
  %v389 = vld [vmem:[%s1 + $0x398] sm:$0xf]
  %v390 = vld [vmem:[%s1 + $0x39c] sm:$0xf]
  %v391 = vld [vmem:[%s1 + $0x3a0] sm:$0xf]
  %v392 = vld [vmem:[%s1 + $0x3a4] sm:$0xf]
  %v393 = vld [vmem:[%s1 + $0x3a8] sm:$0xf]
  %v394 = vld [vmem:[%s1 + $0x3ac] sm:$0xf]
  %v395 = vld [vmem:[%s1 + $0x3b0] sm:$0xf]
  %v396 = vld [vmem:[%s1 + $0x3b4] sm:$0xf]
  %v397 = vld [vmem:[%s1 + $0x3b8] sm:$0xf]
  %v398 = vld [vmem:[%s1 + $0x3bc] sm:$0xf]
  %v399 = vld [vmem:[%s1 + $0x3c0] sm:$0xf]
  %v400 = vld [vmem:[%s1 + $0x3c4] sm:$0xf]
  %v401 = vld [vmem:[%s1 + $0x3c8] sm:$0xf]
  %v402 = vld [vmem:[%s1 + $0x3cc] sm:$0xf]
  %v403 = vld [vmem:[%s1 + $0x3d0] sm:$0xf]
  %v404 = vld [vmem:[%s1 + $0x3d4] sm:$0xf]
  %v405 = vld [vmem:[%s1 + $0x3d8] sm:$0xf]
  %v406 = vld [vmem:[%s1 + $0x3dc] sm:$0xf]
  %v407 = vld [vmem:[%s1 + $0x3e0] sm:$0xf]
  %v408 = vld [vmem:[%s1 + $0x3e4] sm:$0xf]
  %v409 = vld [vmem:[%s1 + $0x3e8] sm:$0xf]
  %v410 = vld [vmem:[%s1 + $0x3ec] sm:$0xf]
  %v411 = vld [vmem:[%s1 + $0x3f0] sm:$0xf]
  %v412 = vld [vmem:[%s1 + $0x3f4] sm:$0xf]
  %v413 = vld [vmem:[%s1 + $0x3f8] sm:$0xf]
  %v414 = vld [vmem:[%s1 + $0x3fc] sm:$0xf]
  %v415 = vld [vmem:[%s2] sm:$0x1]
  %v417 = vlaneseq
  %v418 = vshrl.u32 %v417, 7
  %v419 = vsub.s32 0, %v418
  %v420 = vrot.slane %v415, %v419
  %v566 = vunpack.c.l.b16 %v15
  %v567 = vunpack.c.h.b16 %v15
  %v568 = vunpack.c.l.b16 %v16
  %v569 = vunpack.c.h.b16 %v16
  %v570 = vunpack.c.l.b16 %v17
  %v571 = vunpack.c.h.b16 %v17
  %v572 = vunpack.c.l.b16 %v18
  %v573 = vunpack.c.h.b16 %v18
  %v574 = vunpack.c.l.b16 %v19
  %v575 = vunpack.c.h.b16 %v19
  %v576 = vunpack.c.l.b16 %v20
  %v577 = vunpack.c.h.b16 %v20
  %v578 = vunpack.c.l.b16 %v21
  %v579 = vunpack.c.h.b16 %v21
  %v580 = vunpack.c.l.b16 %v22
  %v581 = vunpack.c.h.b16 %v22
  %v582 = vunpack.c.l.b16 %v23
  %v583 = vunpack.c.h.b16 %v23
  %v584 = vunpack.c.l.b16 %v24
  %v585 = vunpack.c.h.b16 %v24
  %v586 = vunpack.c.l.b16 %v25
  %v587 = vunpack.c.h.b16 %v25
  %v588 = vunpack.c.l.b16 %v26
  %v589 = vunpack.c.h.b16 %v26
  %v590 = vunpack.c.l.b16 %v27
  %v591 = vunpack.c.h.b16 %v27
  %v592 = vunpack.c.l.b16 %v28
  %v593 = vunpack.c.h.b16 %v28
  %v594 = vunpack.c.l.b16 %v29
  %v595 = vunpack.c.h.b16 %v29
  %v596 = vunpack.c.l.b16 %v30
  %v597 = vunpack.c.h.b16 %v30
  %v598 = vunpack.c.l.b16 %v31
  %v599 = vunpack.c.h.b16 %v31
  %v600 = vunpack.c.l.b16 %v32
  %v601 = vunpack.c.h.b16 %v32
  %v602 = vunpack.c.l.b16 %v33
  %v603 = vunpack.c.h.b16 %v33
  %v604 = vunpack.c.l.b16 %v34
  %v605 = vunpack.c.h.b16 %v34
  %v606 = vunpack.c.l.b16 %v35
  %v607 = vunpack.c.h.b16 %v35
  %v608 = vunpack.c.l.b16 %v36
  %v609 = vunpack.c.h.b16 %v36
  %v610 = vunpack.c.l.b16 %v37
  %v611 = vunpack.c.h.b16 %v37
  %v612 = vunpack.c.l.b16 %v38
  %v613 = vunpack.c.h.b16 %v38
  %v614 = vunpack.c.l.b16 %v39
  %v615 = vunpack.c.h.b16 %v39
  %v616 = vunpack.c.l.b16 %v40
  %v617 = vunpack.c.h.b16 %v40
  %v618 = vunpack.c.l.b16 %v41
  %v619 = vunpack.c.h.b16 %v41
  %v620 = vunpack.c.l.b16 %v42
  %v621 = vunpack.c.h.b16 %v42
  %v622 = vunpack.c.l.b16 %v43
  %v623 = vunpack.c.h.b16 %v43
  %v624 = vunpack.c.l.b16 %v44
  %v625 = vunpack.c.h.b16 %v44
  %v626 = vunpack.c.l.b16 %v45
  %v627 = vunpack.c.h.b16 %v45
  %v628 = vunpack.c.l.b16 %v46
  %v629 = vunpack.c.h.b16 %v46
  %v630 = vunpack.c.l.b16 %v47
  %v631 = vunpack.c.h.b16 %v47
  %v632 = vunpack.c.l.b16 %v48
  %v633 = vunpack.c.h.b16 %v48
  %v634 = vunpack.c.l.b16 %v49
  %v635 = vunpack.c.h.b16 %v49
  %v636 = vunpack.c.l.b16 %v50
  %v637 = vunpack.c.h.b16 %v50
  %v638 = vunpack.c.l.b16 %v51
  %v639 = vunpack.c.h.b16 %v51
  %v640 = vunpack.c.l.b16 %v52
  %v641 = vunpack.c.h.b16 %v52
  %v642 = vunpack.c.l.b16 %v53
  %v643 = vunpack.c.h.b16 %v53
  %v644 = vunpack.c.l.b16 %v54
  %v645 = vunpack.c.h.b16 %v54
  %v646 = vunpack.c.l.b16 %v55
  %v647 = vunpack.c.h.b16 %v55
  %v648 = vunpack.c.l.b16 %v56
  %v649 = vunpack.c.h.b16 %v56
  %v650 = vunpack.c.l.b16 %v57
  %v651 = vunpack.c.h.b16 %v57
  %v652 = vunpack.c.l.b16 %v58
  %v653 = vunpack.c.h.b16 %v58
  %v654 = vunpack.c.l.b16 %v59
  %v655 = vunpack.c.h.b16 %v59
  %v656 = vunpack.c.l.b16 %v60
  %v657 = vunpack.c.h.b16 %v60
  %v658 = vunpack.c.l.b16 %v61
  %v659 = vunpack.c.h.b16 %v61
  %v660 = vunpack.c.l.b16 %v62
  %v661 = vunpack.c.h.b16 %v62
  %v662 = vunpack.c.l.b16 %v63
  %v663 = vunpack.c.h.b16 %v63
  %v664 = vunpack.c.l.b16 %v64
  %v665 = vunpack.c.h.b16 %v64
  %v666 = vunpack.c.l.b16 %v65
  %v667 = vunpack.c.h.b16 %v65
  %v668 = vunpack.c.l.b16 %v66
  %v669 = vunpack.c.h.b16 %v66
  %v670 = vunpack.c.l.b16 %v67
  %v671 = vunpack.c.h.b16 %v67
  %v672 = vunpack.c.l.b16 %v68
  %v673 = vunpack.c.h.b16 %v68
  %v674 = vunpack.c.l.b16 %v69
  %v675 = vunpack.c.h.b16 %v69
  %v676 = vunpack.c.l.b16 %v70
  %v677 = vunpack.c.h.b16 %v70
  %v678 = vunpack.c.l.b16 %v71
  %v679 = vunpack.c.h.b16 %v71
  %v680 = vunpack.c.l.b16 %v72
  %v681 = vunpack.c.h.b16 %v72
  %v682 = vunpack.c.l.b16 %v73
  %v683 = vunpack.c.h.b16 %v73
  %v684 = vunpack.c.l.b16 %v74
  %v685 = vunpack.c.h.b16 %v74
  %v686 = vunpack.c.l.b16 %v75
  %v687 = vunpack.c.h.b16 %v75
  %v688 = vunpack.c.l.b16 %v76
  %v689 = vunpack.c.h.b16 %v76
  %v690 = vunpack.c.l.b16 %v77
  %v691 = vunpack.c.h.b16 %v77
  %v692 = vunpack.c.l.b16 %v78
  %v693 = vunpack.c.h.b16 %v78
  %v694 = vunpack.c.l.b16 %v79
  %v695 = vunpack.c.h.b16 %v79
  %v696 = vunpack.c.l.b16 %v80
  %v697 = vunpack.c.h.b16 %v80
  %v698 = vunpack.c.l.b16 %v81
  %v699 = vunpack.c.h.b16 %v81
  %v700 = vunpack.c.l.b16 %v82
  %v701 = vunpack.c.h.b16 %v82
  %v702 = vunpack.c.l.b16 %v83
  %v703 = vunpack.c.h.b16 %v83
  %v704 = vunpack.c.l.b16 %v84
  %v705 = vunpack.c.h.b16 %v84
  %v706 = vunpack.c.l.b16 %v85
  %v707 = vunpack.c.h.b16 %v85
  %v708 = vunpack.c.l.b16 %v86
  %v709 = vunpack.c.h.b16 %v86
  %v710 = vunpack.c.l.b16 %v87
  %v711 = vunpack.c.h.b16 %v87
  %v712 = vunpack.c.l.b16 %v88
  %v713 = vunpack.c.h.b16 %v88
  %v714 = vunpack.c.l.b16 %v89
  %v715 = vunpack.c.h.b16 %v89
  %v716 = vunpack.c.l.b16 %v90
  %v717 = vunpack.c.h.b16 %v90
  %v718 = vunpack.c.l.b16 %v91
  %v719 = vunpack.c.h.b16 %v91
  %v720 = vunpack.c.l.b16 %v92
  %v721 = vunpack.c.h.b16 %v92
  %v722 = vunpack.c.l.b16 %v93
  %v723 = vunpack.c.h.b16 %v93
  %v724 = vunpack.c.l.b16 %v94
  %v725 = vunpack.c.h.b16 %v94
  %v726 = vunpack.c.l.b16 %v95
  %v727 = vunpack.c.h.b16 %v95
  %v728 = vunpack.c.l.b16 %v96
  %v729 = vunpack.c.h.b16 %v96
  %v730 = vunpack.c.l.b16 %v97
  %v731 = vunpack.c.h.b16 %v97
  %v732 = vunpack.c.l.b16 %v98
  %v733 = vunpack.c.h.b16 %v98
  %v734 = vunpack.c.l.b16 %v99
  %v735 = vunpack.c.h.b16 %v99
  %v736 = vunpack.c.l.b16 %v100
  %v737 = vunpack.c.h.b16 %v100
  %v738 = vunpack.c.l.b16 %v101
  %v739 = vunpack.c.h.b16 %v101
  %v740 = vunpack.c.l.b16 %v102
  %v741 = vunpack.c.h.b16 %v102
  %v742 = vunpack.c.l.b16 %v103
  %v743 = vunpack.c.h.b16 %v103
  %v744 = vunpack.c.l.b16 %v104
  %v745 = vunpack.c.h.b16 %v104
  %v746 = vunpack.c.l.b16 %v105
  %v747 = vunpack.c.h.b16 %v105
  %v748 = vunpack.c.l.b16 %v106
  %v749 = vunpack.c.h.b16 %v106
  %v750 = vunpack.c.l.b16 %v107
  %v751 = vunpack.c.h.b16 %v107
  %v752 = vunpack.c.l.b16 %v108
  %v753 = vunpack.c.h.b16 %v108
  %v754 = vunpack.c.l.b16 %v109
  %v755 = vunpack.c.h.b16 %v109
  %v756 = vunpack.c.l.b16 %v110
  %v757 = vunpack.c.h.b16 %v110
  %v758 = vunpack.c.l.b16 %v111
  %v759 = vunpack.c.h.b16 %v111
  %v760 = vunpack.c.l.b16 %v112
  %v761 = vunpack.c.h.b16 %v112
  %v762 = vunpack.c.l.b16 %v113
  %v763 = vunpack.c.h.b16 %v113
  %v764 = vunpack.c.l.b16 %v114
  %v765 = vunpack.c.h.b16 %v114
  %v766 = vunpack.c.l.b16 %v115
  %v767 = vunpack.c.h.b16 %v115
  %v768 = vunpack.c.l.b16 %v116
  %v769 = vunpack.c.h.b16 %v116
  %v770 = vunpack.c.l.b16 %v117
  %v771 = vunpack.c.h.b16 %v117
  %v772 = vunpack.c.l.b16 %v118
  %v773 = vunpack.c.h.b16 %v118
  %v774 = vunpack.c.l.b16 %v119
  %v775 = vunpack.c.h.b16 %v119
  %v776 = vunpack.c.l.b16 %v120
  %v777 = vunpack.c.h.b16 %v120
  %v778 = vunpack.c.l.b16 %v121
  %v779 = vunpack.c.h.b16 %v121
  %v780 = vunpack.c.l.b16 %v122
  %v781 = vunpack.c.h.b16 %v122
  %v782 = vunpack.c.l.b16 %v123
  %v783 = vunpack.c.h.b16 %v123
  %v784 = vunpack.c.l.b16 %v124
  %v785 = vunpack.c.h.b16 %v124
  %v786 = vunpack.c.l.b16 %v125
  %v787 = vunpack.c.h.b16 %v125
  %v788 = vunpack.c.l.b16 %v126
  %v789 = vunpack.c.h.b16 %v126
  %v790 = vunpack.c.l.b16 %v127
  %v791 = vunpack.c.h.b16 %v127
  %v792 = vunpack.c.l.b16 %v128
  %v793 = vunpack.c.h.b16 %v128
  %v794 = vunpack.c.l.b16 %v129
  %v795 = vunpack.c.h.b16 %v129
  %v796 = vunpack.c.l.b16 %v130
  %v797 = vunpack.c.h.b16 %v130
  %v798 = vunpack.c.l.b16 %v131
  %v799 = vunpack.c.h.b16 %v131
  %v800 = vunpack.c.l.b16 %v132
  %v801 = vunpack.c.h.b16 %v132
  %v802 = vunpack.c.l.b16 %v133
  %v803 = vunpack.c.h.b16 %v133
  %v804 = vunpack.c.l.b16 %v134
  %v805 = vunpack.c.h.b16 %v134
  %v806 = vunpack.c.l.b16 %v135
  %v807 = vunpack.c.h.b16 %v135
  %v808 = vunpack.c.l.b16 %v136
  %v809 = vunpack.c.h.b16 %v136
  %v810 = vunpack.c.l.b16 %v137
  %v811 = vunpack.c.h.b16 %v137
  %v812 = vunpack.c.l.b16 %v138
  %v813 = vunpack.c.h.b16 %v138
  %v814 = vunpack.c.l.b16 %v139
  %v815 = vunpack.c.h.b16 %v139
  %v816 = vunpack.c.l.b16 %v140
  %v817 = vunpack.c.h.b16 %v140
  %v818 = vunpack.c.l.b16 %v141
  %v819 = vunpack.c.h.b16 %v141
  %v820 = vunpack.c.l.b16 %v142
  %v821 = vunpack.c.h.b16 %v142
  %v822 = vunpack.c.l.b16 %v143
  %v823 = vunpack.c.h.b16 %v143
  %v824 = vunpack.c.l.b16 %v144
  %v825 = vunpack.c.h.b16 %v144
  %v826 = vunpack.c.l.b16 %v145
  %v827 = vunpack.c.h.b16 %v145
  %v828 = vunpack.c.l.b16 %v146
  %v829 = vunpack.c.h.b16 %v146
  %v830 = vunpack.c.l.b16 %v147
  %v831 = vunpack.c.h.b16 %v147
  %v832 = vunpack.c.l.b16 %v148
  %v833 = vunpack.c.h.b16 %v148
  %v834 = vunpack.c.l.b16 %v149
  %v835 = vunpack.c.h.b16 %v149
  %v836 = vunpack.c.l.b16 %v150
  %v837 = vunpack.c.h.b16 %v150
  %v838 = vunpack.c.l.b16 %v151
  %v839 = vunpack.c.h.b16 %v151
  %v840 = vunpack.c.l.b16 %v152
  %v841 = vunpack.c.h.b16 %v152
  %v842 = vunpack.c.l.b16 %v153
  %v843 = vunpack.c.h.b16 %v153
  %v844 = vunpack.c.l.b16 %v154
  %v845 = vunpack.c.h.b16 %v154
  %v846 = vunpack.c.l.b16 %v155
  %v847 = vunpack.c.h.b16 %v155
  %v848 = vunpack.c.l.b16 %v156
  %v849 = vunpack.c.h.b16 %v156
  %v850 = vunpack.c.l.b16 %v157
  %v851 = vunpack.c.h.b16 %v157
  %v852 = vunpack.c.l.b16 %v158
  %v853 = vunpack.c.h.b16 %v158
  %v854 = vpack.c.b16 %v582, %v566
  %v855 = vpack.c.b16 %v583, %v567
  %v856 = vpack.c.b16 %v584, %v568
  %v857 = vpack.c.b16 %v585, %v569
  %v858 = vpack.c.b16 %v586, %v570
  %v859 = vpack.c.b16 %v587, %v571
  %v860 = vpack.c.b16 %v588, %v572
  %v861 = vpack.c.b16 %v589, %v573
  %v862 = vpack.c.b16 %v590, %v574
  %v863 = vpack.c.b16 %v591, %v575
  %v864 = vpack.c.b16 %v592, %v576
  %v865 = vpack.c.b16 %v593, %v577
  %v866 = vpack.c.b16 %v594, %v578
  %v867 = vpack.c.b16 %v595, %v579
  %v868 = vpack.c.b16 %v596, %v580
  %v869 = vpack.c.b16 %v597, %v581
  %v870 = vpack.c.b16 %v614, %v598
  %v871 = vpack.c.b16 %v615, %v599
  %v872 = vpack.c.b16 %v616, %v600
  %v873 = vpack.c.b16 %v617, %v601
  %v874 = vpack.c.b16 %v618, %v602
  %v875 = vpack.c.b16 %v619, %v603
  %v876 = vpack.c.b16 %v620, %v604
  %v877 = vpack.c.b16 %v621, %v605
  %v878 = vpack.c.b16 %v622, %v606
  %v879 = vpack.c.b16 %v623, %v607
  %v880 = vpack.c.b16 %v624, %v608
  %v881 = vpack.c.b16 %v625, %v609
  %v882 = vpack.c.b16 %v626, %v610
  %v883 = vpack.c.b16 %v627, %v611
  %v884 = vpack.c.b16 %v628, %v612
  %v885 = vpack.c.b16 %v629, %v613
  %v886 = vpack.c.b16 %v646, %v630
  %v887 = vpack.c.b16 %v647, %v631
  %v888 = vpack.c.b16 %v648, %v632
  %v889 = vpack.c.b16 %v649, %v633
  %v890 = vpack.c.b16 %v650, %v634
  %v891 = vpack.c.b16 %v651, %v635
  %v892 = vpack.c.b16 %v652, %v636
  %v893 = vpack.c.b16 %v653, %v637
  %v894 = vpack.c.b16 %v654, %v638
  %v895 = vpack.c.b16 %v655, %v639
  %v896 = vpack.c.b16 %v656, %v640
  %v897 = vpack.c.b16 %v657, %v641
  %v898 = vpack.c.b16 %v658, %v642
  %v899 = vpack.c.b16 %v659, %v643
  %v900 = vpack.c.b16 %v660, %v644
  %v901 = vpack.c.b16 %v661, %v645
  %v902 = vpack.c.b16 %v678, %v662
  %v903 = vpack.c.b16 %v679, %v663
  %v904 = vpack.c.b16 %v680, %v664
  %v905 = vpack.c.b16 %v681, %v665
  %v906 = vpack.c.b16 %v682, %v666
  %v907 = vpack.c.b16 %v683, %v667
  %v908 = vpack.c.b16 %v684, %v668
  %v909 = vpack.c.b16 %v685, %v669
  %v910 = vpack.c.b16 %v686, %v670
  %v911 = vpack.c.b16 %v687, %v671
  %v912 = vpack.c.b16 %v688, %v672
  %v913 = vpack.c.b16 %v689, %v673
  %v914 = vpack.c.b16 %v690, %v674
  %v915 = vpack.c.b16 %v691, %v675
  %v916 = vpack.c.b16 %v692, %v676
  %v917 = vpack.c.b16 %v693, %v677
  %v918 = vpack.c.b16 %v710, %v694
  %v919 = vpack.c.b16 %v711, %v695
  %v920 = vpack.c.b16 %v712, %v696
  %v921 = vpack.c.b16 %v713, %v697
  %v922 = vpack.c.b16 %v714, %v698
  %v923 = vpack.c.b16 %v715, %v699
  %v924 = vpack.c.b16 %v716, %v700
  %v925 = vpack.c.b16 %v717, %v701
  %v926 = vpack.c.b16 %v718, %v702
  %v927 = vpack.c.b16 %v719, %v703
  %v928 = vpack.c.b16 %v720, %v704
  %v929 = vpack.c.b16 %v721, %v705
  %v930 = vpack.c.b16 %v722, %v706
  %v931 = vpack.c.b16 %v723, %v707
  %v932 = vpack.c.b16 %v724, %v708
  %v933 = vpack.c.b16 %v725, %v709
  %v934 = vpack.c.b16 %v742, %v726
  %v935 = vpack.c.b16 %v743, %v727
  %v936 = vpack.c.b16 %v744, %v728
  %v937 = vpack.c.b16 %v745, %v729
  %v938 = vpack.c.b16 %v746, %v730
  %v939 = vpack.c.b16 %v747, %v731
  %v940 = vpack.c.b16 %v748, %v732
  %v941 = vpack.c.b16 %v749, %v733
  %v942 = vpack.c.b16 %v750, %v734
  %v943 = vpack.c.b16 %v751, %v735
  %v944 = vpack.c.b16 %v752, %v736
  %v945 = vpack.c.b16 %v753, %v737
  %v946 = vpack.c.b16 %v754, %v738
  %v947 = vpack.c.b16 %v755, %v739
  %v948 = vpack.c.b16 %v756, %v740
  %v949 = vpack.c.b16 %v757, %v741
  %v950 = vpack.c.b16 %v774, %v758
  %v951 = vpack.c.b16 %v775, %v759
  %v952 = vpack.c.b16 %v776, %v760
  %v953 = vpack.c.b16 %v777, %v761
  %v954 = vpack.c.b16 %v778, %v762
  %v955 = vpack.c.b16 %v779, %v763
  %v956 = vpack.c.b16 %v780, %v764
  %v957 = vpack.c.b16 %v781, %v765
  %v958 = vpack.c.b16 %v782, %v766
  %v959 = vpack.c.b16 %v783, %v767
  %v960 = vpack.c.b16 %v784, %v768
  %v961 = vpack.c.b16 %v785, %v769
  %v962 = vpack.c.b16 %v786, %v770
  %v963 = vpack.c.b16 %v787, %v771
  %v964 = vpack.c.b16 %v788, %v772
  %v965 = vpack.c.b16 %v789, %v773
  %v966 = vpack.c.b16 %v806, %v790
  %v967 = vpack.c.b16 %v807, %v791
  %v968 = vpack.c.b16 %v808, %v792
  %v969 = vpack.c.b16 %v809, %v793
  %v970 = vpack.c.b16 %v810, %v794
  %v971 = vpack.c.b16 %v811, %v795
  %v972 = vpack.c.b16 %v812, %v796
  %v973 = vpack.c.b16 %v813, %v797
  %v974 = vpack.c.b16 %v814, %v798
  %v975 = vpack.c.b16 %v815, %v799
  %v976 = vpack.c.b16 %v816, %v800
  %v977 = vpack.c.b16 %v817, %v801
  %v978 = vpack.c.b16 %v818, %v802
  %v979 = vpack.c.b16 %v819, %v803
  %v980 = vpack.c.b16 %v820, %v804
  %v981 = vpack.c.b16 %v821, %v805
  %v982 = vpack.c.b16 %v838, %v822
  %v983 = vpack.c.b16 %v839, %v823
  %v984 = vpack.c.b16 %v840, %v824
  %v985 = vpack.c.b16 %v841, %v825
  %v986 = vpack.c.b16 %v842, %v826
  %v987 = vpack.c.b16 %v843, %v827
  %v988 = vpack.c.b16 %v844, %v828
  %v989 = vpack.c.b16 %v845, %v829
  %v990 = vpack.c.b16 %v846, %v830
  %v991 = vpack.c.b16 %v847, %v831
  %v992 = vpack.c.b16 %v848, %v832
  %v993 = vpack.c.b16 %v849, %v833
  %v994 = vpack.c.b16 %v850, %v834
  %v995 = vpack.c.b16 %v851, %v835
  %v996 = vpack.c.b16 %v852, %v836
  %v997 = vpack.c.b16 %v853, %v837
  %v1398 = vunpack.c.l.b16 %v159
  %v1399 = vunpack.c.l.b16 %v160
  %v1400 = vunpack.c.l.b16 %v161
  %v1401 = vunpack.c.l.b16 %v162
  %v1402 = vunpack.c.l.b16 %v163
  %v1403 = vunpack.c.l.b16 %v164
  %v1404 = vunpack.c.l.b16 %v165
  %v1405 = vunpack.c.l.b16 %v166
  %v1406 = vunpack.c.l.b16 %v167
  %v1407 = vunpack.c.l.b16 %v168
  %v1408 = vunpack.c.l.b16 %v169
  %v1409 = vunpack.c.l.b16 %v170
  %v1410 = vunpack.c.l.b16 %v171
  %v1411 = vunpack.c.l.b16 %v172
  %v1412 = vunpack.c.l.b16 %v173
  %v1413 = vunpack.c.l.b16 %v174
  %v1414 = vunpack.c.l.b16 %v175
  %v1415 = vunpack.c.l.b16 %v176
  %v1416 = vunpack.c.l.b16 %v177
  %v1417 = vunpack.c.l.b16 %v178
  %v1418 = vunpack.c.l.b16 %v179
  %v1419 = vunpack.c.l.b16 %v180
  %v1420 = vunpack.c.l.b16 %v181
  %v1421 = vunpack.c.l.b16 %v182
  %v1422 = vunpack.c.l.b16 %v183
  %v1423 = vunpack.c.l.b16 %v184
  %v1424 = vunpack.c.l.b16 %v185
  %v1425 = vunpack.c.l.b16 %v186
  %v1426 = vunpack.c.l.b16 %v187
  %v1427 = vunpack.c.l.b16 %v188
  %v1428 = vunpack.c.l.b16 %v189
  %v1429 = vunpack.c.l.b16 %v190
  %v1430 = vunpack.c.l.b16 %v191
  %v1431 = vunpack.c.l.b16 %v192
  %v1432 = vunpack.c.l.b16 %v193
  %v1433 = vunpack.c.l.b16 %v194
  %v1434 = vunpack.c.l.b16 %v195
  %v1435 = vunpack.c.l.b16 %v196
  %v1436 = vunpack.c.l.b16 %v197
  %v1437 = vunpack.c.l.b16 %v198
  %v1438 = vunpack.c.l.b16 %v199
  %v1439 = vunpack.c.l.b16 %v200
  %v1440 = vunpack.c.l.b16 %v201
  %v1441 = vunpack.c.l.b16 %v202
  %v1442 = vunpack.c.l.b16 %v203
  %v1443 = vunpack.c.l.b16 %v204
  %v1444 = vunpack.c.l.b16 %v205
  %v1445 = vunpack.c.l.b16 %v206
  %v1446 = vunpack.c.l.b16 %v207
  %v1447 = vunpack.c.l.b16 %v208
  %v1448 = vunpack.c.l.b16 %v209
  %v1449 = vunpack.c.l.b16 %v210
  %v1450 = vunpack.c.l.b16 %v211
  %v1451 = vunpack.c.l.b16 %v212
  %v1452 = vunpack.c.l.b16 %v213
  %v1453 = vunpack.c.l.b16 %v214
  %v1454 = vunpack.c.l.b16 %v215
  %v1455 = vunpack.c.l.b16 %v216
  %v1456 = vunpack.c.l.b16 %v217
  %v1457 = vunpack.c.l.b16 %v218
  %v1458 = vunpack.c.l.b16 %v219
  %v1459 = vunpack.c.l.b16 %v220
  %v1460 = vunpack.c.l.b16 %v221
  %v1461 = vunpack.c.l.b16 %v222
  %v1462 = vunpack.c.l.b16 %v223
  %v1463 = vunpack.c.l.b16 %v224
  %v1464 = vunpack.c.l.b16 %v225
  %v1465 = vunpack.c.l.b16 %v226
  %v1466 = vunpack.c.l.b16 %v227
  %v1467 = vunpack.c.l.b16 %v228
  %v1468 = vunpack.c.l.b16 %v229
  %v1469 = vunpack.c.l.b16 %v230
  %v1470 = vunpack.c.l.b16 %v231
  %v1471 = vunpack.c.l.b16 %v232
  %v1472 = vunpack.c.l.b16 %v233
  %v1473 = vunpack.c.l.b16 %v234
  %v1474 = vunpack.c.l.b16 %v235
  %v1475 = vunpack.c.l.b16 %v236
  %v1476 = vunpack.c.l.b16 %v237
  %v1477 = vunpack.c.l.b16 %v238
  %v1478 = vunpack.c.l.b16 %v239
  %v1479 = vunpack.c.l.b16 %v240
  %v1480 = vunpack.c.l.b16 %v241
  %v1481 = vunpack.c.l.b16 %v242
  %v1482 = vunpack.c.l.b16 %v243
  %v1483 = vunpack.c.l.b16 %v244
  %v1484 = vunpack.c.l.b16 %v245
  %v1485 = vunpack.c.l.b16 %v246
  %v1486 = vunpack.c.l.b16 %v247
  %v1487 = vunpack.c.l.b16 %v248
  %v1488 = vunpack.c.l.b16 %v249
  %v1489 = vunpack.c.l.b16 %v250
  %v1490 = vunpack.c.l.b16 %v251
  %v1491 = vunpack.c.l.b16 %v252
  %v1492 = vunpack.c.l.b16 %v253
  %v1493 = vunpack.c.l.b16 %v254
  %v1494 = vunpack.c.l.b16 %v255
  %v1495 = vunpack.c.l.b16 %v256
  %v1496 = vunpack.c.l.b16 %v257
  %v1497 = vunpack.c.l.b16 %v258
  %v1498 = vunpack.c.l.b16 %v259
  %v1499 = vunpack.c.l.b16 %v260
  %v1500 = vunpack.c.l.b16 %v261
  %v1501 = vunpack.c.l.b16 %v262
  %v1502 = vunpack.c.l.b16 %v263
  %v1503 = vunpack.c.l.b16 %v264
  %v1504 = vunpack.c.l.b16 %v265
  %v1505 = vunpack.c.l.b16 %v266
  %v1506 = vunpack.c.l.b16 %v267
  %v1507 = vunpack.c.l.b16 %v268
  %v1508 = vunpack.c.l.b16 %v269
  %v1509 = vunpack.c.l.b16 %v270
  %v1510 = vunpack.c.l.b16 %v271
  %v1511 = vunpack.c.l.b16 %v272
  %v1512 = vunpack.c.l.b16 %v273
  %v1513 = vunpack.c.l.b16 %v274
  %v1514 = vunpack.c.l.b16 %v275
  %v1515 = vunpack.c.l.b16 %v276
  %v1516 = vunpack.c.l.b16 %v277
  %v1517 = vunpack.c.l.b16 %v278
  %v1518 = vunpack.c.l.b16 %v279
  %v1519 = vunpack.c.l.b16 %v280
  %v1520 = vunpack.c.l.b16 %v281
  %v1521 = vunpack.c.l.b16 %v282
  %v1522 = vunpack.c.l.b16 %v283
  %v1523 = vunpack.c.l.b16 %v284
  %v1524 = vunpack.c.l.b16 %v285
  %v1525 = vunpack.c.l.b16 %v286
  %v1526 = vunpack.c.l.b16 %v287
  %v1527 = vunpack.c.l.b16 %v288
  %v1528 = vunpack.c.l.b16 %v289
  %v1529 = vunpack.c.l.b16 %v290
  %v1530 = vunpack.c.l.b16 %v291
  %v1531 = vunpack.c.l.b16 %v292
  %v1532 = vunpack.c.l.b16 %v293
  %v1533 = vunpack.c.l.b16 %v294
  %v1534 = vunpack.c.l.b16 %v295
  %v1535 = vunpack.c.l.b16 %v296
  %v1536 = vunpack.c.l.b16 %v297
  %v1537 = vunpack.c.l.b16 %v298
  %v1538 = vunpack.c.l.b16 %v299
  %v1539 = vunpack.c.l.b16 %v300
  %v1540 = vunpack.c.l.b16 %v301
  %v1541 = vunpack.c.l.b16 %v302
  %v1542 = vunpack.c.l.b16 %v303
  %v1543 = vunpack.c.l.b16 %v304
  %v1544 = vunpack.c.l.b16 %v305
  %v1545 = vunpack.c.l.b16 %v306
  %v1546 = vunpack.c.l.b16 %v307
  %v1547 = vunpack.c.l.b16 %v308
  %v1548 = vunpack.c.l.b16 %v309
  %v1549 = vunpack.c.l.b16 %v310
  %v1550 = vunpack.c.l.b16 %v311
  %v1551 = vunpack.c.l.b16 %v312
  %v1552 = vunpack.c.l.b16 %v313
  %v1553 = vunpack.c.l.b16 %v314
  %v1554 = vunpack.c.l.b16 %v315
  %v1555 = vunpack.c.l.b16 %v316
  %v1556 = vunpack.c.l.b16 %v317
  %v1557 = vunpack.c.l.b16 %v318
  %v1558 = vunpack.c.l.b16 %v319
  %v1559 = vunpack.c.l.b16 %v320
  %v1560 = vunpack.c.l.b16 %v321
  %v1561 = vunpack.c.l.b16 %v322
  %v1562 = vunpack.c.l.b16 %v323
  %v1563 = vunpack.c.l.b16 %v324
  %v1564 = vunpack.c.l.b16 %v325
  %v1565 = vunpack.c.l.b16 %v326
  %v1566 = vunpack.c.l.b16 %v327
  %v1567 = vunpack.c.l.b16 %v328
  %v1568 = vunpack.c.l.b16 %v329
  %v1569 = vunpack.c.l.b16 %v330
  %v1570 = vunpack.c.l.b16 %v331
  %v1571 = vunpack.c.l.b16 %v332
  %v1572 = vunpack.c.l.b16 %v333
  %v1573 = vunpack.c.l.b16 %v334
  %v1574 = vunpack.c.l.b16 %v335
  %v1575 = vunpack.c.l.b16 %v336
  %v1576 = vunpack.c.l.b16 %v337
  %v1577 = vunpack.c.l.b16 %v338
  %v1578 = vunpack.c.l.b16 %v339
  %v1579 = vunpack.c.l.b16 %v340
  %v1580 = vunpack.c.l.b16 %v341
  %v1581 = vunpack.c.l.b16 %v342
  %v1582 = vunpack.c.l.b16 %v343
  %v1583 = vunpack.c.l.b16 %v344
  %v1584 = vunpack.c.l.b16 %v345
  %v1585 = vunpack.c.l.b16 %v346
  %v1586 = vunpack.c.l.b16 %v347
  %v1587 = vunpack.c.l.b16 %v348
  %v1588 = vunpack.c.l.b16 %v349
  %v1589 = vunpack.c.l.b16 %v350
  %v1590 = vunpack.c.l.b16 %v351
  %v1591 = vunpack.c.l.b16 %v352
  %v1592 = vunpack.c.l.b16 %v353
  %v1593 = vunpack.c.l.b16 %v354
  %v1594 = vunpack.c.l.b16 %v355
  %v1595 = vunpack.c.l.b16 %v356
  %v1596 = vunpack.c.l.b16 %v357
  %v1597 = vunpack.c.l.b16 %v358
  %v1598 = vunpack.c.l.b16 %v359
  %v1599 = vunpack.c.l.b16 %v360
  %v1600 = vunpack.c.l.b16 %v361
  %v1601 = vunpack.c.l.b16 %v362
  %v1602 = vunpack.c.l.b16 %v363
  %v1603 = vunpack.c.l.b16 %v364
  %v1604 = vunpack.c.l.b16 %v365
  %v1605 = vunpack.c.l.b16 %v366
  %v1606 = vunpack.c.l.b16 %v367
  %v1607 = vunpack.c.l.b16 %v368
  %v1608 = vunpack.c.l.b16 %v369
  %v1609 = vunpack.c.l.b16 %v370
  %v1610 = vunpack.c.l.b16 %v371
  %v1611 = vunpack.c.l.b16 %v372
  %v1612 = vunpack.c.l.b16 %v373
  %v1613 = vunpack.c.l.b16 %v374
  %v1614 = vunpack.c.l.b16 %v375
  %v1615 = vunpack.c.l.b16 %v376
  %v1616 = vunpack.c.l.b16 %v377
  %v1617 = vunpack.c.l.b16 %v378
  %v1618 = vunpack.c.l.b16 %v379
  %v1619 = vunpack.c.l.b16 %v380
  %v1620 = vunpack.c.l.b16 %v381
  %v1621 = vunpack.c.l.b16 %v382
  %v1622 = vunpack.c.l.b16 %v383
  %v1623 = vunpack.c.l.b16 %v384
  %v1624 = vunpack.c.l.b16 %v385
  %v1625 = vunpack.c.l.b16 %v386
  %v1626 = vunpack.c.l.b16 %v387
  %v1627 = vunpack.c.l.b16 %v388
  %v1628 = vunpack.c.l.b16 %v389
  %v1629 = vunpack.c.l.b16 %v390
  %v1630 = vunpack.c.l.b16 %v391
  %v1631 = vunpack.c.l.b16 %v392
  %v1632 = vunpack.c.l.b16 %v393
  %v1633 = vunpack.c.l.b16 %v394
  %v1634 = vunpack.c.l.b16 %v395
  %v1635 = vunpack.c.l.b16 %v396
  %v1636 = vunpack.c.l.b16 %v397
  %v1637 = vunpack.c.l.b16 %v398
  %v1638 = vunpack.c.l.b16 %v399
  %v1639 = vunpack.c.l.b16 %v400
  %v1640 = vunpack.c.l.b16 %v401
  %v1641 = vunpack.c.l.b16 %v402
  %v1642 = vunpack.c.l.b16 %v403
  %v1643 = vunpack.c.l.b16 %v404
  %v1644 = vunpack.c.l.b16 %v405
  %v1645 = vunpack.c.l.b16 %v406
  %v1646 = vunpack.c.l.b16 %v407
  %v1647 = vunpack.c.l.b16 %v408
  %v1648 = vunpack.c.l.b16 %v409
  %v1649 = vunpack.c.l.b16 %v410
  %v1650 = vunpack.c.l.b16 %v411
  %v1651 = vunpack.c.l.b16 %v412
  %v1652 = vunpack.c.l.b16 %v413
  %v1653 = vunpack.c.l.b16 %v414
  %v1654 = vpack.c.b16 %v1399, %v1398
  %v1655 = vpack.c.b16 %v1401, %v1400
  %v1656 = vpack.c.b16 %v1403, %v1402
  %v1657 = vpack.c.b16 %v1405, %v1404
  %v1658 = vpack.c.b16 %v1407, %v1406
  %v1659 = vpack.c.b16 %v1409, %v1408
  %v1660 = vpack.c.b16 %v1411, %v1410
  %v1661 = vpack.c.b16 %v1413, %v1412
  %v1662 = vpack.c.b16 %v1415, %v1414
  %v1663 = vpack.c.b16 %v1417, %v1416
  %v1664 = vpack.c.b16 %v1419, %v1418
  %v1665 = vpack.c.b16 %v1421, %v1420
  %v1666 = vpack.c.b16 %v1423, %v1422
  %v1667 = vpack.c.b16 %v1425, %v1424
  %v1668 = vpack.c.b16 %v1427, %v1426
  %v1669 = vpack.c.b16 %v1429, %v1428
  %v1670 = vpack.c.b16 %v1431, %v1430
  %v1671 = vpack.c.b16 %v1433, %v1432
  %v1672 = vpack.c.b16 %v1435, %v1434
  %v1673 = vpack.c.b16 %v1437, %v1436
  %v1674 = vpack.c.b16 %v1439, %v1438
  %v1675 = vpack.c.b16 %v1441, %v1440
  %v1676 = vpack.c.b16 %v1443, %v1442
  %v1677 = vpack.c.b16 %v1445, %v1444
  %v1678 = vpack.c.b16 %v1447, %v1446
  %v1679 = vpack.c.b16 %v1449, %v1448
  %v1680 = vpack.c.b16 %v1451, %v1450
  %v1681 = vpack.c.b16 %v1453, %v1452
  %v1682 = vpack.c.b16 %v1455, %v1454
  %v1683 = vpack.c.b16 %v1457, %v1456
  %v1684 = vpack.c.b16 %v1459, %v1458
  %v1685 = vpack.c.b16 %v1461, %v1460
  %v1686 = vpack.c.b16 %v1463, %v1462
  %v1687 = vpack.c.b16 %v1465, %v1464
  %v1688 = vpack.c.b16 %v1467, %v1466
  %v1689 = vpack.c.b16 %v1469, %v1468
  %v1690 = vpack.c.b16 %v1471, %v1470
  %v1691 = vpack.c.b16 %v1473, %v1472
  %v1692 = vpack.c.b16 %v1475, %v1474
  %v1693 = vpack.c.b16 %v1477, %v1476
  %v1694 = vpack.c.b16 %v1479, %v1478
  %v1695 = vpack.c.b16 %v1481, %v1480
  %v1696 = vpack.c.b16 %v1483, %v1482
  %v1697 = vpack.c.b16 %v1485, %v1484
  %v1698 = vpack.c.b16 %v1487, %v1486
  %v1699 = vpack.c.b16 %v1489, %v1488
  %v1700 = vpack.c.b16 %v1491, %v1490
  %v1701 = vpack.c.b16 %v1493, %v1492
  %v1702 = vpack.c.b16 %v1495, %v1494
  %v1703 = vpack.c.b16 %v1497, %v1496
  %v1704 = vpack.c.b16 %v1499, %v1498
  %v1705 = vpack.c.b16 %v1501, %v1500
  %v1706 = vpack.c.b16 %v1503, %v1502
  %v1707 = vpack.c.b16 %v1505, %v1504
  %v1708 = vpack.c.b16 %v1507, %v1506
  %v1709 = vpack.c.b16 %v1509, %v1508
  %v1710 = vpack.c.b16 %v1511, %v1510
  %v1711 = vpack.c.b16 %v1513, %v1512
  %v1712 = vpack.c.b16 %v1515, %v1514
  %v1713 = vpack.c.b16 %v1517, %v1516
  %v1714 = vpack.c.b16 %v1519, %v1518
  %v1715 = vpack.c.b16 %v1521, %v1520
  %v1716 = vpack.c.b16 %v1523, %v1522
  %v1717 = vpack.c.b16 %v1525, %v1524
  %v1718 = vpack.c.b16 %v1527, %v1526
  %v1719 = vpack.c.b16 %v1529, %v1528
  %v1720 = vpack.c.b16 %v1531, %v1530
  %v1721 = vpack.c.b16 %v1533, %v1532
  %v1722 = vpack.c.b16 %v1535, %v1534
  %v1723 = vpack.c.b16 %v1537, %v1536
  %v1724 = vpack.c.b16 %v1539, %v1538
  %v1725 = vpack.c.b16 %v1541, %v1540
  %v1726 = vpack.c.b16 %v1543, %v1542
  %v1727 = vpack.c.b16 %v1545, %v1544
  %v1728 = vpack.c.b16 %v1547, %v1546
  %v1729 = vpack.c.b16 %v1549, %v1548
  %v1730 = vpack.c.b16 %v1551, %v1550
  %v1731 = vpack.c.b16 %v1553, %v1552
  %v1732 = vpack.c.b16 %v1555, %v1554
  %v1733 = vpack.c.b16 %v1557, %v1556
  %v1734 = vpack.c.b16 %v1559, %v1558
  %v1735 = vpack.c.b16 %v1561, %v1560
  %v1736 = vpack.c.b16 %v1563, %v1562
  %v1737 = vpack.c.b16 %v1565, %v1564
  %v1738 = vpack.c.b16 %v1567, %v1566
  %v1739 = vpack.c.b16 %v1569, %v1568
  %v1740 = vpack.c.b16 %v1571, %v1570
  %v1741 = vpack.c.b16 %v1573, %v1572
  %v1742 = vpack.c.b16 %v1575, %v1574
  %v1743 = vpack.c.b16 %v1577, %v1576
  %v1744 = vpack.c.b16 %v1579, %v1578
  %v1745 = vpack.c.b16 %v1581, %v1580
  %v1746 = vpack.c.b16 %v1583, %v1582
  %v1747 = vpack.c.b16 %v1585, %v1584
  %v1748 = vpack.c.b16 %v1587, %v1586
  %v1749 = vpack.c.b16 %v1589, %v1588
  %v1750 = vpack.c.b16 %v1591, %v1590
  %v1751 = vpack.c.b16 %v1593, %v1592
  %v1752 = vpack.c.b16 %v1595, %v1594
  %v1753 = vpack.c.b16 %v1597, %v1596
  %v1754 = vpack.c.b16 %v1599, %v1598
  %v1755 = vpack.c.b16 %v1601, %v1600
  %v1756 = vpack.c.b16 %v1603, %v1602
  %v1757 = vpack.c.b16 %v1605, %v1604
  %v1758 = vpack.c.b16 %v1607, %v1606
  %v1759 = vpack.c.b16 %v1609, %v1608
  %v1760 = vpack.c.b16 %v1611, %v1610
  %v1761 = vpack.c.b16 %v1613, %v1612
  %v1762 = vpack.c.b16 %v1615, %v1614
  %v1763 = vpack.c.b16 %v1617, %v1616
  %v1764 = vpack.c.b16 %v1619, %v1618
  %v1765 = vpack.c.b16 %v1621, %v1620
  %v1766 = vpack.c.b16 %v1623, %v1622
  %v1767 = vpack.c.b16 %v1625, %v1624
  %v1768 = vpack.c.b16 %v1627, %v1626
  %v1769 = vpack.c.b16 %v1629, %v1628
  %v1770 = vpack.c.b16 %v1631, %v1630
  %v1771 = vpack.c.b16 %v1633, %v1632
  %v1772 = vpack.c.b16 %v1635, %v1634
  %v1773 = vpack.c.b16 %v1637, %v1636
  %v1774 = vpack.c.b16 %v1639, %v1638
  %v1775 = vpack.c.b16 %v1641, %v1640
  %v1776 = vpack.c.b16 %v1643, %v1642
  %v1777 = vpack.c.b16 %v1645, %v1644
  %v1778 = vpack.c.b16 %v1647, %v1646
  %v1779 = vpack.c.b16 %v1649, %v1648
  %v1780 = vpack.c.b16 %v1651, %v1650
  %v1781 = vpack.c.b16 %v1653, %v1652
  %1910 = vmatprep.subr.bf16.mxu0 0
  %1911 = vmatpush1.bf16.msra.mxu0 %v1661
  %1912 = vmatprep.subr.bf16.mxu0 0
  %1913 = vmatpush1.bf16.msra.mxu0 %v1660
  %1914 = vmatprep.subr.bf16.mxu0 0
  %1915 = vmatpush1.bf16.msra.mxu0 %v1659
  %1916 = vmatprep.subr.bf16.mxu0 0
  %1917 = vmatpush1.bf16.msra.mxu0 %v1658
  %1918 = vmatprep.subr.bf16.mxu0 0
  %1919 = vmatpush1.bf16.msra.mxu0 %v1657
  %1920 = vmatprep.subr.bf16.mxu0 0
  %1921 = vmatpush1.bf16.msra.mxu0 %v1656
  %1922 = vmatprep.subr.bf16.mxu0 0
  %1923 = vmatpush1.bf16.msra.mxu0 %v1655
  %1924 = vmatprep.subr.bf16.mxu0 0
  %1925 = vmatpush1.bf16.msra.mxu0 %v1654
  %1926 = vmatprep.subr.bf16.mxu0 0
  %1927 = vmatpush2.bf16.msra.mxu0 %v1669
  %1928 = vmatprep.subr.bf16.mxu0 0
  %1929 = vmatpush2.bf16.msra.mxu0 %v1668
  %1930 = vmatprep.subr.bf16.mxu0 0
  %1931 = vmatpush2.bf16.msra.mxu0 %v1667
  %1932 = vmatprep.subr.bf16.mxu0 0
  %1933 = vmatpush2.bf16.msra.mxu0 %v1666
  %1934 = vmatprep.subr.bf16.mxu0 0
  %1935 = vmatpush2.bf16.msra.mxu0 %v1665
  %1936 = vmatprep.subr.bf16.mxu0 0
  %1937 = vmatpush2.bf16.msra.mxu0 %v1664
  %1938 = vmatprep.subr.bf16.mxu0 0
  %1939 = vmatpush2.bf16.msra.mxu0 %v1663
  %1940 = vmatprep.subr.bf16.mxu0 0
  %1941 = vmatpush2.bf16.msra.mxu0 %v1662
  %1942 = vmatprep.mubr.bf16.mxu0 %v855
  %1943 = vmatmul.mubr.bf16.gmra.mxu0 %v854
  %v1944 = vpop.f32.mrf.mxu0
  %v1945 = vadd.f32 %v420, %v1944
  %v1946 = vpop.f32.mrf.mxu0
  %v1947 = vpop.f32.mrf.mxu0
  %v1948 = vadd.f32 %v420, %v1947
  %v1949 = vpop.f32.mrf.mxu0
  %1950 = vmatprep.mubr.bf16.mxu0 %v871
  %1951 = vmatmul.mubr.bf16.gmra.mxu0 %v870
  %v1952 = vpop.f32.mrf.mxu0
  %v1953 = vadd.f32 %v420, %v1952
  %v1954 = vpop.f32.mrf.mxu0
  %v1955 = vpop.f32.mrf.mxu0
  %v1956 = vadd.f32 %v420, %v1955
  %v1957 = vpop.f32.mrf.mxu0
  %1958 = vmatprep.mubr.bf16.mxu0 %v887
  %1959 = vmatmul.mubr.bf16.gmra.mxu0 %v886
  %v1960 = vpop.f32.mrf.mxu0
  %v1961 = vadd.f32 %v420, %v1960
  %v1962 = vpop.f32.mrf.mxu0
  %v1963 = vpop.f32.mrf.mxu0
  %v1964 = vadd.f32 %v420, %v1963
  %v1965 = vpop.f32.mrf.mxu0
  %1966 = vmatprep.mubr.bf16.mxu0 %v903
  %1967 = vmatmul.mubr.bf16.gmra.mxu0 %v902
  %v1968 = vpop.f32.mrf.mxu0
  %v1969 = vadd.f32 %v420, %v1968
  %v1970 = vpop.f32.mrf.mxu0
  %v1971 = vpop.f32.mrf.mxu0
  %v1972 = vadd.f32 %v420, %v1971
  %v1973 = vpop.f32.mrf.mxu0
  %1974 = vmatprep.mubr.bf16.mxu0 %v919
  %1975 = vmatmul.mubr.bf16.gmra.mxu0 %v918
  %v1976 = vpop.f32.mrf.mxu0
  %v1977 = vadd.f32 %v420, %v1976
  %v1978 = vpop.f32.mrf.mxu0
  %v1979 = vpop.f32.mrf.mxu0
  %v1980 = vadd.f32 %v420, %v1979
  %v1981 = vpop.f32.mrf.mxu0
  %1982 = vmatprep.mubr.bf16.mxu0 %v935
  %1983 = vmatmul.mubr.bf16.gmra.mxu0 %v934
  %v1984 = vpop.f32.mrf.mxu0
  %v1985 = vadd.f32 %v420, %v1984
  %v1986 = vpop.f32.mrf.mxu0
  %v1987 = vpop.f32.mrf.mxu0
  %v1988 = vadd.f32 %v420, %v1987
  %v1989 = vpop.f32.mrf.mxu0
  %1990 = vmatprep.mubr.bf16.mxu0 %v951
  %1991 = vmatmul.mubr.bf16.gmra.mxu0 %v950
  %v1992 = vpop.f32.mrf.mxu0
  %v1993 = vadd.f32 %v420, %v1992
  %v1994 = vpop.f32.mrf.mxu0
  %v1995 = vpop.f32.mrf.mxu0
  %v1996 = vadd.f32 %v420, %v1995
  %v1997 = vpop.f32.mrf.mxu0
  %1998 = vmatprep.mubr.bf16.mxu0 %v967
  %1999 = vmatmul.mubr.bf16.gmra.mxu0 %v966
  %v2000 = vpop.f32.mrf.mxu0
  %v2001 = vadd.f32 %v420, %v2000
  %v2002 = vpop.f32.mrf.mxu0
  %v2003 = vpop.f32.mrf.mxu0
  %v2004 = vadd.f32 %v420, %v2003
  %v2005 = vpop.f32.mrf.mxu0
  %2006 = vmatprep.mubr.bf16.mxu0 %v983
  %2007 = vmatmul.mubr.bf16.gmra.mxu0 %v982
  %v2008 = vpop.f32.mrf.mxu0
  %v2009 = vadd.f32 %v420, %v2008
  %v2010 = vpop.f32.mrf.mxu0
  %v2011 = vpop.f32.mrf.mxu0
  %v2012 = vadd.f32 %v420, %v2011
  %v2013 = vpop.f32.mrf.mxu0
  %2014 = vdwg.mxu0
  %2015 = vmatprep.subr.bf16.mxu0 0
  %2016 = vmatpush1.bf16.msra.mxu0 %v1677
  %2017 = vmatprep.subr.bf16.mxu0 0
  %2018 = vmatpush1.bf16.msra.mxu0 %v1676
  %2019 = vmatprep.subr.bf16.mxu0 0
  %2020 = vmatpush1.bf16.msra.mxu0 %v1675
  %2021 = vmatprep.subr.bf16.mxu0 0
  %2022 = vmatpush1.bf16.msra.mxu0 %v1674
  %2023 = vmatprep.subr.bf16.mxu0 0
  %2024 = vmatpush1.bf16.msra.mxu0 %v1673
  %2025 = vmatprep.subr.bf16.mxu0 0
  %2026 = vmatpush1.bf16.msra.mxu0 %v1672
  %2027 = vmatprep.subr.bf16.mxu0 0
  %2028 = vmatpush1.bf16.msra.mxu0 %v1671
  %2029 = vmatprep.subr.bf16.mxu0 0
  %2030 = vmatpush1.bf16.msra.mxu0 %v1670
  %2031 = vmatprep.subr.bf16.mxu0 0
  %2032 = vmatpush2.bf16.msra.mxu0 %v1685
  %2033 = vmatprep.subr.bf16.mxu0 0
  %2034 = vmatpush2.bf16.msra.mxu0 %v1684
  %2035 = vmatprep.subr.bf16.mxu0 0
  %2036 = vmatpush2.bf16.msra.mxu0 %v1683
  %2037 = vmatprep.subr.bf16.mxu0 0
  %2038 = vmatpush2.bf16.msra.mxu0 %v1682
  %2039 = vmatprep.subr.bf16.mxu0 0
  %2040 = vmatpush2.bf16.msra.mxu0 %v1681
  %2041 = vmatprep.subr.bf16.mxu0 0
  %2042 = vmatpush2.bf16.msra.mxu0 %v1680
  %2043 = vmatprep.subr.bf16.mxu0 0
  %2044 = vmatpush2.bf16.msra.mxu0 %v1679
  %2045 = vmatprep.subr.bf16.mxu0 0
  %2046 = vmatpush2.bf16.msra.mxu0 %v1678
  %2047 = vmatprep.mubr.bf16.mxu0 %v857
  %2048 = vmatmul.mubr.bf16.gmra.mxu0 %v856
  %v2049 = vpop.f32.mrf.mxu0
  %v2050 = vadd.f32 %v1945, %v2049
  %v2051 = vpop.f32.mrf.mxu0
  %v2052 = vpop.f32.mrf.mxu0
  %v2053 = vadd.f32 %v1948, %v2052
  %v2054 = vpop.f32.mrf.mxu0
  %2055 = vmatprep.mubr.bf16.mxu0 %v873
  %2056 = vmatmul.mubr.bf16.gmra.mxu0 %v872
  %v2057 = vpop.f32.mrf.mxu0
  %v2058 = vadd.f32 %v1953, %v2057
  %v2059 = vpop.f32.mrf.mxu0
  %v2060 = vpop.f32.mrf.mxu0
  %v2061 = vadd.f32 %v1956, %v2060
  %v2062 = vpop.f32.mrf.mxu0
  %2063 = vmatprep.mubr.bf16.mxu0 %v889
  %2064 = vmatmul.mubr.bf16.gmra.mxu0 %v888
  %v2065 = vpop.f32.mrf.mxu0
  %v2066 = vadd.f32 %v1961, %v2065
  %v2067 = vpop.f32.mrf.mxu0
  %v2068 = vpop.f32.mrf.mxu0
  %v2069 = vadd.f32 %v1964, %v2068
  %v2070 = vpop.f32.mrf.mxu0
  %2071 = vmatprep.mubr.bf16.mxu0 %v905
  %2072 = vmatmul.mubr.bf16.gmra.mxu0 %v904
  %v2073 = vpop.f32.mrf.mxu0
  %v2074 = vadd.f32 %v1969, %v2073
  %v2075 = vpop.f32.mrf.mxu0
  %v2076 = vpop.f32.mrf.mxu0
  %v2077 = vadd.f32 %v1972, %v2076
  %v2078 = vpop.f32.mrf.mxu0
  %2079 = vmatprep.mubr.bf16.mxu0 %v921
  %2080 = vmatmul.mubr.bf16.gmra.mxu0 %v920
  %v2081 = vpop.f32.mrf.mxu0
  %v2082 = vadd.f32 %v1977, %v2081
  %v2083 = vpop.f32.mrf.mxu0
  %v2084 = vpop.f32.mrf.mxu0
  %v2085 = vadd.f32 %v1980, %v2084
  %v2086 = vpop.f32.mrf.mxu0
  %2087 = vmatprep.mubr.bf16.mxu0 %v937
  %2088 = vmatmul.mubr.bf16.gmra.mxu0 %v936
  %v2089 = vpop.f32.mrf.mxu0
  %v2090 = vadd.f32 %v1985, %v2089
  %v2091 = vpop.f32.mrf.mxu0
  %v2092 = vpop.f32.mrf.mxu0
  %v2093 = vadd.f32 %v1988, %v2092
  %v2094 = vpop.f32.mrf.mxu0
  %2095 = vmatprep.mubr.bf16.mxu0 %v953
  %2096 = vmatmul.mubr.bf16.gmra.mxu0 %v952
  %v2097 = vpop.f32.mrf.mxu0
  %v2098 = vadd.f32 %v1993, %v2097
  %v2099 = vpop.f32.mrf.mxu0
  %v2100 = vpop.f32.mrf.mxu0
  %v2101 = vadd.f32 %v1996, %v2100
  %v2102 = vpop.f32.mrf.mxu0
  %2103 = vmatprep.mubr.bf16.mxu0 %v969
  %2104 = vmatmul.mubr.bf16.gmra.mxu0 %v968
  %v2105 = vpop.f32.mrf.mxu0
  %v2106 = vadd.f32 %v2001, %v2105
  %v2107 = vpop.f32.mrf.mxu0
  %v2108 = vpop.f32.mrf.mxu0
  %v2109 = vadd.f32 %v2004, %v2108
  %v2110 = vpop.f32.mrf.mxu0
  %2111 = vmatprep.mubr.bf16.mxu0 %v985
  %2112 = vmatmul.mubr.bf16.gmra.mxu0 %v984
  %v2113 = vpop.f32.mrf.mxu0
  %v2114 = vadd.f32 %v2009, %v2113
  %v2115 = vpop.f32.mrf.mxu0
  %v2116 = vpop.f32.mrf.mxu0
  %v2117 = vadd.f32 %v2012, %v2116
  %v2118 = vpop.f32.mrf.mxu0
  %2119 = vdwg.mxu0
  %2120 = vmatprep.subr.bf16.mxu0 0
  %2121 = vmatpush1.bf16.msra.mxu0 %v1693
  %2122 = vmatprep.subr.bf16.mxu0 0
  %2123 = vmatpush1.bf16.msra.mxu0 %v1692
  %2124 = vmatprep.subr.bf16.mxu0 0
  %2125 = vmatpush1.bf16.msra.mxu0 %v1691
  %2126 = vmatprep.subr.bf16.mxu0 0
  %2127 = vmatpush1.bf16.msra.mxu0 %v1690
  %2128 = vmatprep.subr.bf16.mxu0 0
  %2129 = vmatpush1.bf16.msra.mxu0 %v1689
  %2130 = vmatprep.subr.bf16.mxu0 0
  %2131 = vmatpush1.bf16.msra.mxu0 %v1688
  %2132 = vmatprep.subr.bf16.mxu0 0
  %2133 = vmatpush1.bf16.msra.mxu0 %v1687
  %2134 = vmatprep.subr.bf16.mxu0 0
  %2135 = vmatpush1.bf16.msra.mxu0 %v1686
  %2136 = vmatprep.subr.bf16.mxu0 0
  %2137 = vmatpush2.bf16.msra.mxu0 %v1701
  %2138 = vmatprep.subr.bf16.mxu0 0
  %2139 = vmatpush2.bf16.msra.mxu0 %v1700
  %2140 = vmatprep.subr.bf16.mxu0 0
  %2141 = vmatpush2.bf16.msra.mxu0 %v1699
  %2142 = vmatprep.subr.bf16.mxu0 0
  %2143 = vmatpush2.bf16.msra.mxu0 %v1698
  %2144 = vmatprep.subr.bf16.mxu0 0
  %2145 = vmatpush2.bf16.msra.mxu0 %v1697
  %2146 = vmatprep.subr.bf16.mxu0 0
  %2147 = vmatpush2.bf16.msra.mxu0 %v1696
  %2148 = vmatprep.subr.bf16.mxu0 0
  %2149 = vmatpush2.bf16.msra.mxu0 %v1695
  %2150 = vmatprep.subr.bf16.mxu0 0
  %2151 = vmatpush2.bf16.msra.mxu0 %v1694
  %2152 = vmatprep.mubr.bf16.mxu0 %v859
  %2153 = vmatmul.mubr.bf16.gmra.mxu0 %v858
  %v2154 = vpop.f32.mrf.mxu0
  %v2155 = vadd.f32 %v2050, %v2154
  %v2156 = vpop.f32.mrf.mxu0
  %v2157 = vpop.f32.mrf.mxu0
  %v2158 = vadd.f32 %v2053, %v2157
  %v2159 = vpop.f32.mrf.mxu0
  %2160 = vmatprep.mubr.bf16.mxu0 %v875
  %2161 = vmatmul.mubr.bf16.gmra.mxu0 %v874
  %v2162 = vpop.f32.mrf.mxu0
  %v2163 = vadd.f32 %v2058, %v2162
  %v2164 = vpop.f32.mrf.mxu0
  %v2165 = vpop.f32.mrf.mxu0
  %v2166 = vadd.f32 %v2061, %v2165
  %v2167 = vpop.f32.mrf.mxu0
  %2168 = vmatprep.mubr.bf16.mxu0 %v891
  %2169 = vmatmul.mubr.bf16.gmra.mxu0 %v890
  %v2170 = vpop.f32.mrf.mxu0
  %v2171 = vadd.f32 %v2066, %v2170
  %v2172 = vpop.f32.mrf.mxu0
  %v2173 = vpop.f32.mrf.mxu0
  %v2174 = vadd.f32 %v2069, %v2173
  %v2175 = vpop.f32.mrf.mxu0
  %2176 = vmatprep.mubr.bf16.mxu0 %v907
  %2177 = vmatmul.mubr.bf16.gmra.mxu0 %v906
  %v2178 = vpop.f32.mrf.mxu0
  %v2179 = vadd.f32 %v2074, %v2178
  %v2180 = vpop.f32.mrf.mxu0
  %v2181 = vpop.f32.mrf.mxu0
  %v2182 = vadd.f32 %v2077, %v2181
  %v2183 = vpop.f32.mrf.mxu0
  %2184 = vmatprep.mubr.bf16.mxu0 %v923
  %2185 = vmatmul.mubr.bf16.gmra.mxu0 %v922
  %v2186 = vpop.f32.mrf.mxu0
  %v2187 = vadd.f32 %v2082, %v2186
  %v2188 = vpop.f32.mrf.mxu0
  %v2189 = vpop.f32.mrf.mxu0
  %v2190 = vadd.f32 %v2085, %v2189
  %v2191 = vpop.f32.mrf.mxu0
  %2192 = vmatprep.mubr.bf16.mxu0 %v939
  %2193 = vmatmul.mubr.bf16.gmra.mxu0 %v938
  %v2194 = vpop.f32.mrf.mxu0
  %v2195 = vadd.f32 %v2090, %v2194
  %v2196 = vpop.f32.mrf.mxu0
  %v2197 = vpop.f32.mrf.mxu0
  %v2198 = vadd.f32 %v2093, %v2197
  %v2199 = vpop.f32.mrf.mxu0
  %2200 = vmatprep.mubr.bf16.mxu0 %v955
  %2201 = vmatmul.mubr.bf16.gmra.mxu0 %v954
  %v2202 = vpop.f32.mrf.mxu0
  %v2203 = vadd.f32 %v2098, %v2202
  %v2204 = vpop.f32.mrf.mxu0
  %v2205 = vpop.f32.mrf.mxu0
  %v2206 = vadd.f32 %v2101, %v2205
  %v2207 = vpop.f32.mrf.mxu0
  %2208 = vmatprep.mubr.bf16.mxu0 %v971
  %2209 = vmatmul.mubr.bf16.gmra.mxu0 %v970
  %v2210 = vpop.f32.mrf.mxu0
  %v2211 = vadd.f32 %v2106, %v2210
  %v2212 = vpop.f32.mrf.mxu0
  %v2213 = vpop.f32.mrf.mxu0
  %v2214 = vadd.f32 %v2109, %v2213
  %v2215 = vpop.f32.mrf.mxu0
  %2216 = vmatprep.mubr.bf16.mxu0 %v987
  %2217 = vmatmul.mubr.bf16.gmra.mxu0 %v986
  %v2218 = vpop.f32.mrf.mxu0
  %v2219 = vadd.f32 %v2114, %v2218
  %v2220 = vpop.f32.mrf.mxu0
  %v2221 = vpop.f32.mrf.mxu0
  %v2222 = vadd.f32 %v2117, %v2221
  %v2223 = vpop.f32.mrf.mxu0
  %2224 = vdwg.mxu0
  %2225 = vmatprep.subr.bf16.mxu0 0
  %2226 = vmatpush1.bf16.msra.mxu0 %v1709
  %2227 = vmatprep.subr.bf16.mxu0 0
  %2228 = vmatpush1.bf16.msra.mxu0 %v1708
  %2229 = vmatprep.subr.bf16.mxu0 0
  %2230 = vmatpush1.bf16.msra.mxu0 %v1707
  %2231 = vmatprep.subr.bf16.mxu0 0
  %2232 = vmatpush1.bf16.msra.mxu0 %v1706
  %2233 = vmatprep.subr.bf16.mxu0 0
  %2234 = vmatpush1.bf16.msra.mxu0 %v1705
  %2235 = vmatprep.subr.bf16.mxu0 0
  %2236 = vmatpush1.bf16.msra.mxu0 %v1704
  %2237 = vmatprep.subr.bf16.mxu0 0
  %2238 = vmatpush1.bf16.msra.mxu0 %v1703
  %2239 = vmatprep.subr.bf16.mxu0 0
  %2240 = vmatpush1.bf16.msra.mxu0 %v1702
  %2241 = vmatprep.subr.bf16.mxu0 0
  %2242 = vmatpush2.bf16.msra.mxu0 %v1717
  %2243 = vmatprep.subr.bf16.mxu0 0
  %2244 = vmatpush2.bf16.msra.mxu0 %v1716
  %2245 = vmatprep.subr.bf16.mxu0 0
  %2246 = vmatpush2.bf16.msra.mxu0 %v1715
  %2247 = vmatprep.subr.bf16.mxu0 0
  %2248 = vmatpush2.bf16.msra.mxu0 %v1714
  %2249 = vmatprep.subr.bf16.mxu0 0
  %2250 = vmatpush2.bf16.msra.mxu0 %v1713
  %2251 = vmatprep.subr.bf16.mxu0 0
  %2252 = vmatpush2.bf16.msra.mxu0 %v1712
  %2253 = vmatprep.subr.bf16.mxu0 0
  %2254 = vmatpush2.bf16.msra.mxu0 %v1711
  %2255 = vmatprep.subr.bf16.mxu0 0
  %2256 = vmatpush2.bf16.msra.mxu0 %v1710
  %2257 = vmatprep.mubr.bf16.mxu0 %v861
  %2258 = vmatmul.mubr.bf16.gmra.mxu0 %v860
  %v2259 = vpop.f32.mrf.mxu0
  %v2260 = vadd.f32 %v2155, %v2259
  %v2261 = vpop.f32.mrf.mxu0
  %v2262 = vpop.f32.mrf.mxu0
  %v2263 = vadd.f32 %v2158, %v2262
  %v2264 = vpop.f32.mrf.mxu0
  %2265 = vmatprep.mubr.bf16.mxu0 %v877
  %2266 = vmatmul.mubr.bf16.gmra.mxu0 %v876
  %v2267 = vpop.f32.mrf.mxu0
  %v2268 = vadd.f32 %v2163, %v2267
  %v2269 = vpop.f32.mrf.mxu0
  %v2270 = vpop.f32.mrf.mxu0
  %v2271 = vadd.f32 %v2166, %v2270
  %v2272 = vpop.f32.mrf.mxu0
  %2273 = vmatprep.mubr.bf16.mxu0 %v893
  %2274 = vmatmul.mubr.bf16.gmra.mxu0 %v892
  %v2275 = vpop.f32.mrf.mxu0
  %v2276 = vadd.f32 %v2171, %v2275
  %v2277 = vpop.f32.mrf.mxu0
  %v2278 = vpop.f32.mrf.mxu0
  %v2279 = vadd.f32 %v2174, %v2278
  %v2280 = vpop.f32.mrf.mxu0
  %2281 = vmatprep.mubr.bf16.mxu0 %v909
  %2282 = vmatmul.mubr.bf16.gmra.mxu0 %v908
  %v2283 = vpop.f32.mrf.mxu0
  %v2284 = vadd.f32 %v2179, %v2283
  %v2285 = vpop.f32.mrf.mxu0
  %v2286 = vpop.f32.mrf.mxu0
  %v2287 = vadd.f32 %v2182, %v2286
  %v2288 = vpop.f32.mrf.mxu0
  %2289 = vmatprep.mubr.bf16.mxu0 %v925
  %2290 = vmatmul.mubr.bf16.gmra.mxu0 %v924
  %v2291 = vpop.f32.mrf.mxu0
  %v2292 = vadd.f32 %v2187, %v2291
  %v2293 = vpop.f32.mrf.mxu0
  %v2294 = vpop.f32.mrf.mxu0
  %v2295 = vadd.f32 %v2190, %v2294
  %v2296 = vpop.f32.mrf.mxu0
  %2297 = vmatprep.mubr.bf16.mxu0 %v941
  %2298 = vmatmul.mubr.bf16.gmra.mxu0 %v940
  %v2299 = vpop.f32.mrf.mxu0
  %v2300 = vadd.f32 %v2195, %v2299
  %v2301 = vpop.f32.mrf.mxu0
  %v2302 = vpop.f32.mrf.mxu0
  %v2303 = vadd.f32 %v2198, %v2302
  %v2304 = vpop.f32.mrf.mxu0
  %2305 = vmatprep.mubr.bf16.mxu0 %v957
  %2306 = vmatmul.mubr.bf16.gmra.mxu0 %v956
  %v2307 = vpop.f32.mrf.mxu0
  %v2308 = vadd.f32 %v2203, %v2307
  %v2309 = vpop.f32.mrf.mxu0
  %v2310 = vpop.f32.mrf.mxu0
  %v2311 = vadd.f32 %v2206, %v2310
  %v2312 = vpop.f32.mrf.mxu0
  %2313 = vmatprep.mubr.bf16.mxu0 %v973
  %2314 = vmatmul.mubr.bf16.gmra.mxu0 %v972
  %v2315 = vpop.f32.mrf.mxu0
  %v2316 = vadd.f32 %v2211, %v2315
  %v2317 = vpop.f32.mrf.mxu0
  %v2318 = vpop.f32.mrf.mxu0
  %v2319 = vadd.f32 %v2214, %v2318
  %v2320 = vpop.f32.mrf.mxu0
  %2321 = vmatprep.mubr.bf16.mxu0 %v989
  %2322 = vmatmul.mubr.bf16.gmra.mxu0 %v988
  %v2323 = vpop.f32.mrf.mxu0
  %v2324 = vadd.f32 %v2219, %v2323
  %v2325 = vpop.f32.mrf.mxu0
  %v2326 = vpop.f32.mrf.mxu0
  %v2327 = vadd.f32 %v2222, %v2326
  %v2328 = vpop.f32.mrf.mxu0
  %2329 = vdwg.mxu0
  %2330 = vmatprep.subr.bf16.mxu0 0
  %2331 = vmatpush1.bf16.msra.mxu0 %v1725
  %2332 = vmatprep.subr.bf16.mxu0 0
  %2333 = vmatpush1.bf16.msra.mxu0 %v1724
  %2334 = vmatprep.subr.bf16.mxu0 0
  %2335 = vmatpush1.bf16.msra.mxu0 %v1723
  %2336 = vmatprep.subr.bf16.mxu0 0
  %2337 = vmatpush1.bf16.msra.mxu0 %v1722
  %2338 = vmatprep.subr.bf16.mxu0 0
  %2339 = vmatpush1.bf16.msra.mxu0 %v1721
  %2340 = vmatprep.subr.bf16.mxu0 0
  %2341 = vmatpush1.bf16.msra.mxu0 %v1720
  %2342 = vmatprep.subr.bf16.mxu0 0
  %2343 = vmatpush1.bf16.msra.mxu0 %v1719
  %2344 = vmatprep.subr.bf16.mxu0 0
  %2345 = vmatpush1.bf16.msra.mxu0 %v1718
  %2346 = vmatprep.subr.bf16.mxu0 0
  %2347 = vmatpush2.bf16.msra.mxu0 %v1733
  %2348 = vmatprep.subr.bf16.mxu0 0
  %2349 = vmatpush2.bf16.msra.mxu0 %v1732
  %2350 = vmatprep.subr.bf16.mxu0 0
  %2351 = vmatpush2.bf16.msra.mxu0 %v1731
  %2352 = vmatprep.subr.bf16.mxu0 0
  %2353 = vmatpush2.bf16.msra.mxu0 %v1730
  %2354 = vmatprep.subr.bf16.mxu0 0
  %2355 = vmatpush2.bf16.msra.mxu0 %v1729
  %2356 = vmatprep.subr.bf16.mxu0 0
  %2357 = vmatpush2.bf16.msra.mxu0 %v1728
  %2358 = vmatprep.subr.bf16.mxu0 0
  %2359 = vmatpush2.bf16.msra.mxu0 %v1727
  %2360 = vmatprep.subr.bf16.mxu0 0
  %2361 = vmatpush2.bf16.msra.mxu0 %v1726
  %2362 = vmatprep.mubr.bf16.mxu0 %v863
  %2363 = vmatmul.mubr.bf16.gmra.mxu0 %v862
  %v2364 = vpop.f32.mrf.mxu0
  %v2365 = vadd.f32 %v2260, %v2364
  %v2366 = vpop.f32.mrf.mxu0
  %v2367 = vpop.f32.mrf.mxu0
  %v2368 = vadd.f32 %v2263, %v2367
  %v2369 = vpop.f32.mrf.mxu0
  %2370 = vmatprep.mubr.bf16.mxu0 %v879
  %2371 = vmatmul.mubr.bf16.gmra.mxu0 %v878
  %v2372 = vpop.f32.mrf.mxu0
  %v2373 = vadd.f32 %v2268, %v2372
  %v2374 = vpop.f32.mrf.mxu0
  %v2375 = vpop.f32.mrf.mxu0
  %v2376 = vadd.f32 %v2271, %v2375
  %v2377 = vpop.f32.mrf.mxu0
  %2378 = vmatprep.mubr.bf16.mxu0 %v895
  %2379 = vmatmul.mubr.bf16.gmra.mxu0 %v894
  %v2380 = vpop.f32.mrf.mxu0
  %v2381 = vadd.f32 %v2276, %v2380
  %v2382 = vpop.f32.mrf.mxu0
  %v2383 = vpop.f32.mrf.mxu0
  %v2384 = vadd.f32 %v2279, %v2383
  %v2385 = vpop.f32.mrf.mxu0
  %2386 = vmatprep.mubr.bf16.mxu0 %v911
  %2387 = vmatmul.mubr.bf16.gmra.mxu0 %v910
  %v2388 = vpop.f32.mrf.mxu0
  %v2389 = vadd.f32 %v2284, %v2388
  %v2390 = vpop.f32.mrf.mxu0
  %v2391 = vpop.f32.mrf.mxu0
  %v2392 = vadd.f32 %v2287, %v2391
  %v2393 = vpop.f32.mrf.mxu0
  %2394 = vmatprep.mubr.bf16.mxu0 %v927
  %2395 = vmatmul.mubr.bf16.gmra.mxu0 %v926
  %v2396 = vpop.f32.mrf.mxu0
  %v2397 = vadd.f32 %v2292, %v2396
  %v2398 = vpop.f32.mrf.mxu0
  %v2399 = vpop.f32.mrf.mxu0
  %v2400 = vadd.f32 %v2295, %v2399
  %v2401 = vpop.f32.mrf.mxu0
  %2402 = vmatprep.mubr.bf16.mxu0 %v943
  %2403 = vmatmul.mubr.bf16.gmra.mxu0 %v942
  %v2404 = vpop.f32.mrf.mxu0
  %v2405 = vadd.f32 %v2300, %v2404
  %v2406 = vpop.f32.mrf.mxu0
  %v2407 = vpop.f32.mrf.mxu0
  %v2408 = vadd.f32 %v2303, %v2407
  %v2409 = vpop.f32.mrf.mxu0
  %2410 = vmatprep.mubr.bf16.mxu0 %v959
  %2411 = vmatmul.mubr.bf16.gmra.mxu0 %v958
  %v2412 = vpop.f32.mrf.mxu0
  %v2413 = vadd.f32 %v2308, %v2412
  %v2414 = vpop.f32.mrf.mxu0
  %v2415 = vpop.f32.mrf.mxu0
  %v2416 = vadd.f32 %v2311, %v2415
  %v2417 = vpop.f32.mrf.mxu0
  %2418 = vmatprep.mubr.bf16.mxu0 %v975
  %2419 = vmatmul.mubr.bf16.gmra.mxu0 %v974
  %v2420 = vpop.f32.mrf.mxu0
  %v2421 = vadd.f32 %v2316, %v2420
  %v2422 = vpop.f32.mrf.mxu0
  %v2423 = vpop.f32.mrf.mxu0
  %v2424 = vadd.f32 %v2319, %v2423
  %v2425 = vpop.f32.mrf.mxu0
  %2426 = vmatprep.mubr.bf16.mxu0 %v991
  %2427 = vmatmul.mubr.bf16.gmra.mxu0 %v990
  %v2428 = vpop.f32.mrf.mxu0
  %v2429 = vadd.f32 %v2324, %v2428
  %v2430 = vpop.f32.mrf.mxu0
  %v2431 = vpop.f32.mrf.mxu0
  %v2432 = vadd.f32 %v2327, %v2431
  %v2433 = vpop.f32.mrf.mxu0
  %2434 = vdwg.mxu0
  %2435 = vmatprep.subr.bf16.mxu0 0
  %2436 = vmatpush1.bf16.msra.mxu0 %v1741
  %2437 = vmatprep.subr.bf16.mxu0 0
  %2438 = vmatpush1.bf16.msra.mxu0 %v1740
  %2439 = vmatprep.subr.bf16.mxu0 0
  %2440 = vmatpush1.bf16.msra.mxu0 %v1739
  %2441 = vmatprep.subr.bf16.mxu0 0
  %2442 = vmatpush1.bf16.msra.mxu0 %v1738
  %2443 = vmatprep.subr.bf16.mxu0 0
  %2444 = vmatpush1.bf16.msra.mxu0 %v1737
  %2445 = vmatprep.subr.bf16.mxu0 0
  %2446 = vmatpush1.bf16.msra.mxu0 %v1736
  %2447 = vmatprep.subr.bf16.mxu0 0
  %2448 = vmatpush1.bf16.msra.mxu0 %v1735
  %2449 = vmatprep.subr.bf16.mxu0 0
  %2450 = vmatpush1.bf16.msra.mxu0 %v1734
  %2451 = vmatprep.subr.bf16.mxu0 0
  %2452 = vmatpush2.bf16.msra.mxu0 %v1749
  %2453 = vmatprep.subr.bf16.mxu0 0
  %2454 = vmatpush2.bf16.msra.mxu0 %v1748
  %2455 = vmatprep.subr.bf16.mxu0 0
  %2456 = vmatpush2.bf16.msra.mxu0 %v1747
  %2457 = vmatprep.subr.bf16.mxu0 0
  %2458 = vmatpush2.bf16.msra.mxu0 %v1746
  %2459 = vmatprep.subr.bf16.mxu0 0
  %2460 = vmatpush2.bf16.msra.mxu0 %v1745
  %2461 = vmatprep.subr.bf16.mxu0 0
  %2462 = vmatpush2.bf16.msra.mxu0 %v1744
  %2463 = vmatprep.subr.bf16.mxu0 0
  %2464 = vmatpush2.bf16.msra.mxu0 %v1743
  %2465 = vmatprep.subr.bf16.mxu0 0
  %2466 = vmatpush2.bf16.msra.mxu0 %v1742
  %2467 = vmatprep.mubr.bf16.mxu0 %v865
  %2468 = vmatmul.mubr.bf16.gmra.mxu0 %v864
  %v2469 = vpop.f32.mrf.mxu0
  %v2470 = vadd.f32 %v2365, %v2469
  %v2471 = vpop.f32.mrf.mxu0
  %v2472 = vpop.f32.mrf.mxu0
  %v2473 = vadd.f32 %v2368, %v2472
  %v2474 = vpop.f32.mrf.mxu0
  %2475 = vmatprep.mubr.bf16.mxu0 %v881
  %2476 = vmatmul.mubr.bf16.gmra.mxu0 %v880
  %v2477 = vpop.f32.mrf.mxu0
  %v2478 = vadd.f32 %v2373, %v2477
  %v2479 = vpop.f32.mrf.mxu0
  %v2480 = vpop.f32.mrf.mxu0
  %v2481 = vadd.f32 %v2376, %v2480
  %v2482 = vpop.f32.mrf.mxu0
  %2483 = vmatprep.mubr.bf16.mxu0 %v897
  %2484 = vmatmul.mubr.bf16.gmra.mxu0 %v896
  %v2485 = vpop.f32.mrf.mxu0
  %v2486 = vadd.f32 %v2381, %v2485
  %v2487 = vpop.f32.mrf.mxu0
  %v2488 = vpop.f32.mrf.mxu0
  %v2489 = vadd.f32 %v2384, %v2488
  %v2490 = vpop.f32.mrf.mxu0
  %2491 = vmatprep.mubr.bf16.mxu0 %v913
  %2492 = vmatmul.mubr.bf16.gmra.mxu0 %v912
  %v2493 = vpop.f32.mrf.mxu0
  %v2494 = vadd.f32 %v2389, %v2493
  %v2495 = vpop.f32.mrf.mxu0
  %v2496 = vpop.f32.mrf.mxu0
  %v2497 = vadd.f32 %v2392, %v2496
  %v2498 = vpop.f32.mrf.mxu0
  %2499 = vmatprep.mubr.bf16.mxu0 %v929
  %2500 = vmatmul.mubr.bf16.gmra.mxu0 %v928
  %v2501 = vpop.f32.mrf.mxu0
  %v2502 = vadd.f32 %v2397, %v2501
  %v2503 = vpop.f32.mrf.mxu0
  %v2504 = vpop.f32.mrf.mxu0
  %v2505 = vadd.f32 %v2400, %v2504
  %v2506 = vpop.f32.mrf.mxu0
  %2507 = vmatprep.mubr.bf16.mxu0 %v945
  %2508 = vmatmul.mubr.bf16.gmra.mxu0 %v944
  %v2509 = vpop.f32.mrf.mxu0
  %v2510 = vadd.f32 %v2405, %v2509
  %v2511 = vpop.f32.mrf.mxu0
  %v2512 = vpop.f32.mrf.mxu0
  %v2513 = vadd.f32 %v2408, %v2512
  %v2514 = vpop.f32.mrf.mxu0
  %2515 = vmatprep.mubr.bf16.mxu0 %v961
  %2516 = vmatmul.mubr.bf16.gmra.mxu0 %v960
  %v2517 = vpop.f32.mrf.mxu0
  %v2518 = vadd.f32 %v2413, %v2517
  %v2519 = vpop.f32.mrf.mxu0
  %v2520 = vpop.f32.mrf.mxu0
  %v2521 = vadd.f32 %v2416, %v2520
  %v2522 = vpop.f32.mrf.mxu0
  %2523 = vmatprep.mubr.bf16.mxu0 %v977
  %2524 = vmatmul.mubr.bf16.gmra.mxu0 %v976
  %v2525 = vpop.f32.mrf.mxu0
  %v2526 = vadd.f32 %v2421, %v2525
  %v2527 = vpop.f32.mrf.mxu0
  %v2528 = vpop.f32.mrf.mxu0
  %v2529 = vadd.f32 %v2424, %v2528
  %v2530 = vpop.f32.mrf.mxu0
  %2531 = vmatprep.mubr.bf16.mxu0 %v993
  %2532 = vmatmul.mubr.bf16.gmra.mxu0 %v992
  %v2533 = vpop.f32.mrf.mxu0
  %v2534 = vadd.f32 %v2429, %v2533
  %v2535 = vpop.f32.mrf.mxu0
  %v2536 = vpop.f32.mrf.mxu0
  %v2537 = vadd.f32 %v2432, %v2536
  %v2538 = vpop.f32.mrf.mxu0
  %2539 = vdwg.mxu0
  %2540 = vmatprep.subr.bf16.mxu0 0
  %2541 = vmatpush1.bf16.msra.mxu0 %v1757
  %2542 = vmatprep.subr.bf16.mxu0 0
  %2543 = vmatpush1.bf16.msra.mxu0 %v1756
  %2544 = vmatprep.subr.bf16.mxu0 0
  %2545 = vmatpush1.bf16.msra.mxu0 %v1755
  %2546 = vmatprep.subr.bf16.mxu0 0
  %2547 = vmatpush1.bf16.msra.mxu0 %v1754
  %2548 = vmatprep.subr.bf16.mxu0 0
  %2549 = vmatpush1.bf16.msra.mxu0 %v1753
  %2550 = vmatprep.subr.bf16.mxu0 0
  %2551 = vmatpush1.bf16.msra.mxu0 %v1752
  %2552 = vmatprep.subr.bf16.mxu0 0
  %2553 = vmatpush1.bf16.msra.mxu0 %v1751
  %2554 = vmatprep.subr.bf16.mxu0 0
  %2555 = vmatpush1.bf16.msra.mxu0 %v1750
  %2556 = vmatprep.subr.bf16.mxu0 0
  %2557 = vmatpush2.bf16.msra.mxu0 %v1765
  %2558 = vmatprep.subr.bf16.mxu0 0
  %2559 = vmatpush2.bf16.msra.mxu0 %v1764
  %2560 = vmatprep.subr.bf16.mxu0 0
  %2561 = vmatpush2.bf16.msra.mxu0 %v1763
  %2562 = vmatprep.subr.bf16.mxu0 0
  %2563 = vmatpush2.bf16.msra.mxu0 %v1762
  %2564 = vmatprep.subr.bf16.mxu0 0
  %2565 = vmatpush2.bf16.msra.mxu0 %v1761
  %2566 = vmatprep.subr.bf16.mxu0 0
  %2567 = vmatpush2.bf16.msra.mxu0 %v1760
  %2568 = vmatprep.subr.bf16.mxu0 0
  %2569 = vmatpush2.bf16.msra.mxu0 %v1759
  %2570 = vmatprep.subr.bf16.mxu0 0
  %2571 = vmatpush2.bf16.msra.mxu0 %v1758
  %2572 = vmatprep.mubr.bf16.mxu0 %v867
  %2573 = vmatmul.mubr.bf16.gmra.mxu0 %v866
  %v2574 = vpop.f32.mrf.mxu0
  %v2575 = vadd.f32 %v2470, %v2574
  %v2576 = vpop.f32.mrf.mxu0
  %v2577 = vpop.f32.mrf.mxu0
  %v2578 = vadd.f32 %v2473, %v2577
  %v2579 = vpop.f32.mrf.mxu0
  %2580 = vmatprep.mubr.bf16.mxu0 %v883
  %2581 = vmatmul.mubr.bf16.gmra.mxu0 %v882
  %v2582 = vpop.f32.mrf.mxu0
  %v2583 = vadd.f32 %v2478, %v2582
  %v2584 = vpop.f32.mrf.mxu0
  %v2585 = vpop.f32.mrf.mxu0
  %v2586 = vadd.f32 %v2481, %v2585
  %v2587 = vpop.f32.mrf.mxu0
  %2588 = vmatprep.mubr.bf16.mxu0 %v899
  %2589 = vmatmul.mubr.bf16.gmra.mxu0 %v898
  %v2590 = vpop.f32.mrf.mxu0
  %v2591 = vadd.f32 %v2486, %v2590
  %v2592 = vpop.f32.mrf.mxu0
  %v2593 = vpop.f32.mrf.mxu0
  %v2594 = vadd.f32 %v2489, %v2593
  %v2595 = vpop.f32.mrf.mxu0
  %2596 = vmatprep.mubr.bf16.mxu0 %v915
  %2597 = vmatmul.mubr.bf16.gmra.mxu0 %v914
  %v2598 = vpop.f32.mrf.mxu0
  %v2599 = vadd.f32 %v2494, %v2598
  %v2600 = vpop.f32.mrf.mxu0
  %v2601 = vpop.f32.mrf.mxu0
  %v2602 = vadd.f32 %v2497, %v2601
  %v2603 = vpop.f32.mrf.mxu0
  %2604 = vmatprep.mubr.bf16.mxu0 %v931
  %2605 = vmatmul.mubr.bf16.gmra.mxu0 %v930
  %v2606 = vpop.f32.mrf.mxu0
  %v2607 = vadd.f32 %v2502, %v2606
  %v2608 = vpop.f32.mrf.mxu0
  %v2609 = vpop.f32.mrf.mxu0
  %v2610 = vadd.f32 %v2505, %v2609
  %v2611 = vpop.f32.mrf.mxu0
  %2612 = vmatprep.mubr.bf16.mxu0 %v947
  %2613 = vmatmul.mubr.bf16.gmra.mxu0 %v946
  %v2614 = vpop.f32.mrf.mxu0
  %v2615 = vadd.f32 %v2510, %v2614
  %v2616 = vpop.f32.mrf.mxu0
  %v2617 = vpop.f32.mrf.mxu0
  %v2618 = vadd.f32 %v2513, %v2617
  %v2619 = vpop.f32.mrf.mxu0
  %2620 = vmatprep.mubr.bf16.mxu0 %v963
  %2621 = vmatmul.mubr.bf16.gmra.mxu0 %v962
  %v2622 = vpop.f32.mrf.mxu0
  %v2623 = vadd.f32 %v2518, %v2622
  %v2624 = vpop.f32.mrf.mxu0
  %v2625 = vpop.f32.mrf.mxu0
  %v2626 = vadd.f32 %v2521, %v2625
  %v2627 = vpop.f32.mrf.mxu0
  %2628 = vmatprep.mubr.bf16.mxu0 %v979
  %2629 = vmatmul.mubr.bf16.gmra.mxu0 %v978
  %v2630 = vpop.f32.mrf.mxu0
  %v2631 = vadd.f32 %v2526, %v2630
  %v2632 = vpop.f32.mrf.mxu0
  %v2633 = vpop.f32.mrf.mxu0
  %v2634 = vadd.f32 %v2529, %v2633
  %v2635 = vpop.f32.mrf.mxu0
  %2636 = vmatprep.mubr.bf16.mxu0 %v995
  %2637 = vmatmul.mubr.bf16.gmra.mxu0 %v994
  %v2638 = vpop.f32.mrf.mxu0
  %v2639 = vadd.f32 %v2534, %v2638
  %v2640 = vpop.f32.mrf.mxu0
  %v2641 = vpop.f32.mrf.mxu0
  %v2642 = vadd.f32 %v2537, %v2641
  %v2643 = vpop.f32.mrf.mxu0
  %2644 = vdwg.mxu0
  %2645 = vmatprep.subr.bf16.mxu0 0
  %2646 = vmatpush1.bf16.msra.mxu0 %v1773
  %2647 = vmatprep.subr.bf16.mxu0 0
  %2648 = vmatpush1.bf16.msra.mxu0 %v1772
  %2649 = vmatprep.subr.bf16.mxu0 0
  %2650 = vmatpush1.bf16.msra.mxu0 %v1771
  %2651 = vmatprep.subr.bf16.mxu0 0
  %2652 = vmatpush1.bf16.msra.mxu0 %v1770
  %2653 = vmatprep.subr.bf16.mxu0 0
  %2654 = vmatpush1.bf16.msra.mxu0 %v1769
  %2655 = vmatprep.subr.bf16.mxu0 0
  %2656 = vmatpush1.bf16.msra.mxu0 %v1768
  %2657 = vmatprep.subr.bf16.mxu0 0
  %2658 = vmatpush1.bf16.msra.mxu0 %v1767
  %2659 = vmatprep.subr.bf16.mxu0 0
  %2660 = vmatpush1.bf16.msra.mxu0 %v1766
  %2661 = vmatprep.subr.bf16.mxu0 0
  %2662 = vmatpush2.bf16.msra.mxu0 %v1781
  %2663 = vmatprep.subr.bf16.mxu0 0
  %2664 = vmatpush2.bf16.msra.mxu0 %v1780
  %2665 = vmatprep.subr.bf16.mxu0 0
  %2666 = vmatpush2.bf16.msra.mxu0 %v1779
  %2667 = vmatprep.subr.bf16.mxu0 0
  %2668 = vmatpush2.bf16.msra.mxu0 %v1778
  %2669 = vmatprep.subr.bf16.mxu0 0
  %2670 = vmatpush2.bf16.msra.mxu0 %v1777
  %2671 = vmatprep.subr.bf16.mxu0 0
  %2672 = vmatpush2.bf16.msra.mxu0 %v1776
  %2673 = vmatprep.subr.bf16.mxu0 0
  %2674 = vmatpush2.bf16.msra.mxu0 %v1775
  %2675 = vmatprep.subr.bf16.mxu0 0
  %2676 = vmatpush2.bf16.msra.mxu0 %v1774
  %2677 = vmatprep.mubr.bf16.mxu0 %v869
  %2678 = vmatmul.mubr.bf16.gmra.mxu0 %v868
  %v2679 = vpop.f32.mrf.mxu0
  %v2680 = vadd.f32 %v2575, %v2679
  %v2681 = vpop.f32.mrf.mxu0
  %v2682 = vpop.f32.mrf.mxu0
  %v2683 = vadd.f32 %v2578, %v2682
  %v2684 = vpop.f32.mrf.mxu0
  %2685 = vmatprep.mubr.bf16.mxu0 %v885
  %2686 = vmatmul.mubr.bf16.gmra.mxu0 %v884
  %v2687 = vpop.f32.mrf.mxu0
  %v2688 = vadd.f32 %v2583, %v2687
  %v2689 = vpop.f32.mrf.mxu0
  %v2690 = vpop.f32.mrf.mxu0
  %v2691 = vadd.f32 %v2586, %v2690
  %v2692 = vpop.f32.mrf.mxu0
  %2693 = vmatprep.mubr.bf16.mxu0 %v901
  %2694 = vmatmul.mubr.bf16.gmra.mxu0 %v900
  %v2695 = vpop.f32.mrf.mxu0
  %v2696 = vadd.f32 %v2591, %v2695
  %v2697 = vpop.f32.mrf.mxu0
  %v2698 = vpop.f32.mrf.mxu0
  %v2699 = vadd.f32 %v2594, %v2698
  %v2700 = vpop.f32.mrf.mxu0
  %2701 = vmatprep.mubr.bf16.mxu0 %v917
  %2702 = vmatmul.mubr.bf16.gmra.mxu0 %v916
  %v2703 = vpop.f32.mrf.mxu0
  %v2704 = vadd.f32 %v2599, %v2703
  %v2705 = vpop.f32.mrf.mxu0
  %v2706 = vpop.f32.mrf.mxu0
  %v2707 = vadd.f32 %v2602, %v2706
  %v2708 = vpop.f32.mrf.mxu0
  %2709 = vmatprep.mubr.bf16.mxu0 %v933
  %2710 = vmatmul.mubr.bf16.gmra.mxu0 %v932
  %v2711 = vpop.f32.mrf.mxu0
  %v2712 = vadd.f32 %v2607, %v2711
  %v2713 = vpop.f32.mrf.mxu0
  %v2714 = vpop.f32.mrf.mxu0
  %v2715 = vadd.f32 %v2610, %v2714
  %v2716 = vpop.f32.mrf.mxu0
  %2717 = vmatprep.mubr.bf16.mxu0 %v949
  %2718 = vmatmul.mubr.bf16.gmra.mxu0 %v948
  %v2719 = vpop.f32.mrf.mxu0
  %v2720 = vadd.f32 %v2615, %v2719
  %v2721 = vpop.f32.mrf.mxu0
  %v2722 = vpop.f32.mrf.mxu0
  %v2723 = vadd.f32 %v2618, %v2722
  %v2724 = vpop.f32.mrf.mxu0
  %2725 = vmatprep.mubr.bf16.mxu0 %v965
  %2726 = vmatmul.mubr.bf16.gmra.mxu0 %v964
  %v2727 = vpop.f32.mrf.mxu0
  %v2728 = vadd.f32 %v2623, %v2727
  %v2729 = vpop.f32.mrf.mxu0
  %v2730 = vpop.f32.mrf.mxu0
  %v2731 = vadd.f32 %v2626, %v2730
  %v2732 = vpop.f32.mrf.mxu0
  %2733 = vmatprep.mubr.bf16.mxu0 %v981
  %2734 = vmatmul.mubr.bf16.gmra.mxu0 %v980
  %v2735 = vpop.f32.mrf.mxu0
  %v2736 = vadd.f32 %v2631, %v2735
  %v2737 = vpop.f32.mrf.mxu0
  %v2738 = vpop.f32.mrf.mxu0
  %v2739 = vadd.f32 %v2634, %v2738
  %v2740 = vpop.f32.mrf.mxu0
  %2741 = vmatprep.mubr.bf16.mxu0 %v997
  %2742 = vmatmul.mubr.bf16.gmra.mxu0 %v996
  %v2743 = vpop.f32.mrf.mxu0
  %v2744 = vadd.f32 %v2639, %v2743
  %v2745 = vpop.f32.mrf.mxu0
  %v2746 = vpop.f32.mrf.mxu0
  %v2747 = vadd.f32 %v2642, %v2746
  %v2748 = vpop.f32.mrf.mxu0
  %2749 = vdwg.mxu0
  %v2750 = vxor.u32 %v2680, 2147483648
  %v2751 = vxor.u32 %v2683, 2147483648
  %v2752 = vxor.u32 %v2688, 2147483648
  %v2753 = vxor.u32 %v2691, 2147483648
  %v2754 = vxor.u32 %v2696, 2147483648
  %v2755 = vxor.u32 %v2699, 2147483648
  %v2756 = vxor.u32 %v2704, 2147483648
  %v2757 = vxor.u32 %v2707, 2147483648
  %v2758 = vxor.u32 %v2712, 2147483648
  %v2759 = vxor.u32 %v2715, 2147483648
  %v2760 = vxor.u32 %v2720, 2147483648
  %v2761 = vxor.u32 %v2723, 2147483648
  %v2762 = vxor.u32 %v2728, 2147483648
  %v2763 = vxor.u32 %v2731, 2147483648
  %v2764 = vxor.u32 %v2736, 2147483648
  %v2765 = vxor.u32 %v2739, 2147483648
  %v2766 = vxor.u32 %v2744, 2147483648
  %v2767 = vxor.u32 %v2747, 2147483648
  %v2768 = vmul.f32 %v2750, 1.442695
  %v2769 = vpow.pop %v2768
  %v2770 = vmul.f32 %v2751, 1.442695
  %v2771 = vpow.pop %v2770
  %v2772 = vmul.f32 %v2752, 1.442695
  %v2773 = vpow.pop %v2772
  %v2774 = vmul.f32 %v2753, 1.442695
  %v2775 = vpow.pop %v2774
  %v2776 = vmul.f32 %v2754, 1.442695
  %v2777 = vpow.pop %v2776
  %v2778 = vmul.f32 %v2755, 1.442695
  %v2779 = vpow.pop %v2778
  %v2780 = vmul.f32 %v2756, 1.442695
  %v2781 = vpow.pop %v2780
  %v2782 = vmul.f32 %v2757, 1.442695
  %v2783 = vpow.pop %v2782
  %v2784 = vmul.f32 %v2758, 1.442695
  %v2785 = vpow.pop %v2784
  %v2786 = vmul.f32 %v2759, 1.442695
  %v2787 = vpow.pop %v2786
  %v2788 = vmul.f32 %v2760, 1.442695
  %v2789 = vpow.pop %v2788
  %v2790 = vmul.f32 %v2761, 1.442695
  %v2791 = vpow.pop %v2790
  %v2792 = vmul.f32 %v2762, 1.442695
  %v2793 = vpow.pop %v2792
  %v2794 = vmul.f32 %v2763, 1.442695
  %v2795 = vpow.pop %v2794
  %v2796 = vmul.f32 %v2764, 1.442695
  %v2797 = vpow.pop %v2796
  %v2798 = vmul.f32 %v2765, 1.442695
  %v2799 = vpow.pop %v2798
  %v2800 = vmul.f32 %v2766, 1.442695
  %v2801 = vpow.pop %v2800
  %v2802 = vmul.f32 %v2767, 1.442695
  %v2803 = vpow.pop %v2802
  %v2804 = vadd.f32 %v2769, 1.0
  %v2805 = vadd.f32 %v2771, 1.0
  %v2806 = vadd.f32 %v2773, 1.0
  %v2807 = vadd.f32 %v2775, 1.0
  %v2808 = vadd.f32 %v2777, 1.0
  %v2809 = vadd.f32 %v2779, 1.0
  %v2810 = vadd.f32 %v2781, 1.0
  %v2811 = vadd.f32 %v2783, 1.0
  %v2812 = vadd.f32 %v2785, 1.0
  %v2813 = vadd.f32 %v2787, 1.0
  %v2814 = vadd.f32 %v2789, 1.0
  %v2815 = vadd.f32 %v2791, 1.0
  %v2816 = vadd.f32 %v2793, 1.0
  %v2817 = vadd.f32 %v2795, 1.0
  %v2818 = vadd.f32 %v2797, 1.0
  %v2819 = vadd.f32 %v2799, 1.0
  %v2820 = vadd.f32 %v2801, 1.0
  %v2821 = vadd.f32 %v2803, 1.0
  %v2822 = vrcp.pop %v2804
  %v2823 = vmul.f32 1.0, %v2822
  %v2824 = vrcp.pop %v2805
  %v2825 = vmul.f32 1.0, %v2824
  %v2826 = vrcp.pop %v2806
  %v2827 = vmul.f32 1.0, %v2826
  %v2828 = vrcp.pop %v2807
  %v2829 = vmul.f32 1.0, %v2828
  %v2830 = vrcp.pop %v2808
  %v2831 = vmul.f32 1.0, %v2830
  %v2832 = vrcp.pop %v2809
  %v2833 = vmul.f32 1.0, %v2832
  %v2834 = vrcp.pop %v2810
  %v2835 = vmul.f32 1.0, %v2834
  %v2836 = vrcp.pop %v2811
  %v2837 = vmul.f32 1.0, %v2836
  %v2838 = vrcp.pop %v2812
  %v2839 = vmul.f32 1.0, %v2838
  %v2840 = vrcp.pop %v2813
  %v2841 = vmul.f32 1.0, %v2840
  %v2842 = vrcp.pop %v2814
  %v2843 = vmul.f32 1.0, %v2842
  %v2844 = vrcp.pop %v2815
  %v2845 = vmul.f32 1.0, %v2844
  %v2846 = vrcp.pop %v2816
  %v2847 = vmul.f32 1.0, %v2846
  %v2848 = vrcp.pop %v2817
  %v2849 = vmul.f32 1.0, %v2848
  %v2850 = vrcp.pop %v2818
  %v2851 = vmul.f32 1.0, %v2850
  %v2852 = vrcp.pop %v2819
  %v2853 = vmul.f32 1.0, %v2852
  %v2854 = vrcp.pop %v2820
  %v2855 = vmul.f32 1.0, %v2854
  %v2856 = vrcp.pop %v2821
  %v2857 = vmul.f32 1.0, %v2856
  %v2858 = vpack.c.bf16 %v2825, %v2823
  %v2859 = vpack.c.bf16 %v2829, %v2827
  %v2860 = vpack.c.bf16 %v2833, %v2831
  %v2861 = vpack.c.bf16 %v2837, %v2835
  %v2862 = vpack.c.bf16 %v2841, %v2839
  %v2863 = vpack.c.bf16 %v2845, %v2843
  %v2864 = vpack.c.bf16 %v2849, %v2847
  %v2865 = vpack.c.bf16 %v2853, %v2851
  %v2866 = vpack.c.bf16 %v2857, %v2855
  %v2876 = vunpack.c.l.b16 %v2858
  %v2877 = vunpack.c.h.b16 %v2858
  %v2878 = vunpack.c.l.b16 %v2859
  %v2879 = vunpack.c.h.b16 %v2859
  %v2880 = vunpack.c.l.b16 %v2860
  %v2881 = vunpack.c.h.b16 %v2860
  %v2882 = vunpack.c.l.b16 %v2861
  %v2883 = vunpack.c.h.b16 %v2861
  %v2884 = vunpack.c.l.b16 %v2862
  %v2885 = vunpack.c.h.b16 %v2862
  %v2886 = vunpack.c.l.b16 %v2863
  %v2887 = vunpack.c.h.b16 %v2863
  %v2888 = vunpack.c.l.b16 %v2864
  %v2889 = vunpack.c.h.b16 %v2864
  %v2890 = vunpack.c.l.b16 %v2865
  %v2891 = vunpack.c.h.b16 %v2865
  %v2892 = vunpack.c.l.b16 %v2866
  %v2893 = vunpack.c.h.b16 %v2866
  %v2894 = vpack.c.b16 %v2876, %v2876
  %v2895 = vpack.c.b16 %v2877, %v2877
  %v2896 = vpack.c.b16 %v2878, %v2878
  %v2897 = vpack.c.b16 %v2879, %v2879
  %v2898 = vpack.c.b16 %v2880, %v2880
  %v2899 = vpack.c.b16 %v2881, %v2881
  %v2900 = vpack.c.b16 %v2882, %v2882
  %v2901 = vpack.c.b16 %v2883, %v2883
  %v2902 = vpack.c.b16 %v2884, %v2884
  %v2903 = vpack.c.b16 %v2885, %v2885
  %v2904 = vpack.c.b16 %v2886, %v2886
  %v2905 = vpack.c.b16 %v2887, %v2887
  %v2906 = vpack.c.b16 %v2888, %v2888
  %v2907 = vpack.c.b16 %v2889, %v2889
  %v2908 = vpack.c.b16 %v2890, %v2890
  %v2909 = vpack.c.b16 %v2891, %v2891
  %v2910 = vpack.c.b16 %v2892, %v2892
  %v2911 = vpack.c.b16 %v2893, %v2893
  %2930 = vst [vmem:[%s3] sm:$0xf] %v2894
  %2931 = vst [vmem:[%s3 + $0x4] sm:$0xf] %v2895
  %2932 = vst [vmem:[%s3 + $0x8] sm:$0xf] %v2896
  %2933 = vst [vmem:[%s3 + $0xc] sm:$0xf] %v2897
  %2934 = vst [vmem:[%s3 + $0x10] sm:$0xf] %v2898
  %2935 = vst [vmem:[%s3 + $0x14] sm:$0xf] %v2899
  %2936 = vst [vmem:[%s3 + $0x18] sm:$0xf] %v2900
  %2937 = vst [vmem:[%s3 + $0x1c] sm:$0xf] %v2901
  %2938 = vst [vmem:[%s3 + $0x20] sm:$0xf] %v2902
  %2939 = vst [vmem:[%s3 + $0x24] sm:$0xf] %v2903
  %2940 = vst [vmem:[%s3 + $0x28] sm:$0xf] %v2904
  %2941 = vst [vmem:[%s3 + $0x2c] sm:$0xf] %v2905
  %2942 = vst [vmem:[%s3 + $0x30] sm:$0xf] %v2906
  %2943 = vst [vmem:[%s3 + $0x34] sm:$0xf] %v2907
  %2944 = vst [vmem:[%s3 + $0x38] sm:$0xf] %v2908
  %2945 = vst [vmem:[%s3 + $0x3c] sm:$0xf] %v2909
  %2946 = vst [vmem:[%s3 + $0x40] sm:$0xf] %v2910
  %2947 = vst [vmem:[%s3 + $0x44] sm:$0xf] %v2911
  // Predicated region
  $region14: #{discriminator2d_forward.5} parent=0 // pred_check
    _
  $region15: #{discriminator2d_forward.5} parent=0 // pred_check_branch
    %2949 = sbr.rel (0) target = $region17
  $region16: #{discriminator2d_forward.5} parent=0 // pred_region
    _
  $region17: #{discriminator2d_forward.5} parent=0 // pred_fallthru
    _
  // Predicated region
  $region18: #{discriminator2d_forward.5} parent=0 // pred_check
    _
  $region19: #{discriminator2d_forward.5} parent=0 // pred_check_branch
    %2951 = sbr.rel (0) target = $region21
  $region20: #{discriminator2d_forward.5} parent=0 // pred_region
    _
  $region21: #{discriminator2d_forward.5} parent=0 // pred_fallthru
    _

</llo_original>
